<compile_context>
chip_gen: v6e
topology: v6e:2x2x1
jax: 0.10.0
libtpu: 0.0.40
codegen_flags: <defaults>
</compile_context>

<pallas_src>
import jax
import jax.numpy as jnp
from jax.experimental import pallas as pl
from jax.experimental.pallas import tpu as pltpu


# ------------------------------ fused Pallas kernel --------------------------

def _lenet_kernel(xp_ref, w1_ref, b1_ref, w2_ref, b2_ref,
                  fw1_ref, fb1_ref, fw2_ref, fb2_ref,
                  fw3_ref, fb3_ref, fw4_ref, fb4_ref,
                  out_ref, p1_scr, x2_scr, feat_scr):
    n = out_ref.shape[0]

    # ---- conv1 (5x5 valid, 1 -> 16): one MXU matmul over prebuilt input patches.
    # Patch rows are ordered (image, pi, pj, oi, oj) with conv-output pixel
    # (2*oi+pi, 2*oj+pj), so maxpool1 below is a pure leading-axis max.
    a1 = jnp.dot(xp_ref[...], w1_ref[...], preferred_element_type=jnp.float32)
    a1 = jnp.maximum(a1 + b1_ref[...], 0.0)                      # (n*576, 16)

    # ---- maxpool1 2x2: free reshape + 3 elementwise maxes (no narrow store loops).
    r = a1.reshape(n, 2, 2, 144, 16)                             # [b, pi, pj, oi*12+oj, c]
    p1 = jnp.maximum(jnp.maximum(r[:, 0, 0], r[:, 0, 1]),
                     jnp.maximum(r[:, 1, 0], r[:, 1, 1]))        # (n, 144, 16)
    for u in range(12):                                          # 12 bulk slab stores
        p1_scr[:, u, :, :] = p1[:, u * 12:(u + 1) * 12, :]       # p1_scr = (n,12,12,16)

    # ---- conv2 (5x5 valid, 16 -> 32): K-fused im2col -> ONE (n*64,400)@(400,32) dot.
    for kh in range(5):
        for kw in range(5):
            t = kh * 5 + kw
            x2_scr[:, :, :, t * 16:(t + 1) * 16] = p1_scr[:, kh:kh + 8, kw:kw + 8, :]
    x2 = x2_scr[...].reshape(n * 64, 400).astype(jnp.bfloat16)
    a2 = jnp.dot(x2, w2_ref[...], preferred_element_type=jnp.float32)
    a2 = jnp.maximum(a2 + b2_ref[...], 0.0)                      # (n*64, 32), rows (b,i2,j2)

    # ---- maxpool2 2x2 + flatten: H window is a free leading-axis max; the W window
    # is fused into the 16 lane-slice stores that build the lane-dense (n,512) feature.
    h2 = a2.reshape(n, 4, 2, 8, 32)
    h2 = jnp.maximum(h2[:, :, 0], h2[:, :, 1])                   # (n, 4, 8, 32)
    for hh in range(4):
        for ww in range(4):
            c0 = (hh * 4 + ww) * 32
            feat_scr[:, c0:c0 + 32] = jnp.maximum(h2[:, hh, 2 * ww, :],
                                                  h2[:, hh, 2 * ww + 1, :])

    # ---- fc1 (512 -> 256) as ONE K=512 dot; fc2/fc3/fc4 with 128-lane padded outputs.
    feat = feat_scr[...].astype(jnp.bfloat16)                    # (n, 512)
    h = jnp.maximum(jnp.dot(feat, fw1_ref[...],
                            preferred_element_type=jnp.float32) + fb1_ref[...], 0.0)
    h = jnp.maximum(jnp.dot(h.astype(jnp.bfloat16), fw2_ref[...],
                            preferred_element_type=jnp.float32) + fb2_ref[...], 0.0)
    h = jnp.maximum(jnp.dot(h.astype(jnp.bfloat16), fw3_ref[...],
                            preferred_element_type=jnp.float32) + fb3_ref[...], 0.0)
    logits = jnp.dot(h.astype(jnp.bfloat16), fw4_ref[...],
                     preferred_element_type=jnp.float32) + fb4_ref[...]
    out_ref[...] = logits.astype(out_ref.dtype)                  # (n, 128) lane-dense store


# ----------------------------------- wrapper ---------------------------------

def lenet_forward(params, x_nchw, *, batch_tile=32):
    n = x_nchw.shape[0]
    tb = min(batch_tile, n)
    pad = (-n) % tb
    x = x_nchw[:, 0, :, :].astype(jnp.float32)                   # (n, 28, 28), Cin = 1
    if pad:
        x = jnp.pad(x, ((0, pad), (0, 0), (0, 0)))
    nt = x.shape[0]

    # Only wrapper-side glue: im2col of the tiny network input for conv1.  Rows are
    # emitted in (image, pool-parity pi, pj, pool-cell oi, oj) order so maxpool1
    # inside the kernel is a free leading-axis max.
    cols = [x[:, kh:kh + 24, kw:kw + 24] for kh in range(5) for kw in range(5)]
    pt = jnp.stack(cols, axis=-1)                                # (nt, 24, 24, 25) [b,i,j,t]
    pt = pt.reshape(nt, 12, 2, 12, 2, 25)                        # [b, oi, pi, oj, pj, t]
    pt = pt.transpose(0, 2, 4, 1, 3, 5)                          # [b, pi, pj, oi, oj, t]
    patches = pt.reshape(nt * 576, 25)
    patches = jnp.pad(patches, ((0, 0), (0, 7))).astype(jnp.bfloat16)   # K: 25 -> 32

    bf = lambda a: a.astype(jnp.bfloat16)
    row = lambda a: a.reshape(1, -1).astype(jnp.float32)
    args = (patches,
            bf(params["w1"]), row(params["b1"]),
            bf(params["w2"]), row(params["b2"]),
            bf(params["fw1"]), row(params["fb1"]),
            bf(params["fw2"]), row(params["fb2"]),
            bf(params["fw3"]), row(params["fb3"]),
            bf(params["fw4"]), row(params["fb4"]))

    def const_spec(a):
        nd = a.ndim
        return pl.BlockSpec(a.shape, lambda b, _nd=nd: (0,) * _nd)

    in_specs = [pl.BlockSpec((tb * 576, 32), lambda b: (b, 0))]   # batch-tiled patches
    in_specs += [const_spec(a) for a in args[1:]]                 # weights: full blocks

    out = pl.pallas_call(
        _lenet_kernel,
        out_shape=jax.ShapeDtypeStruct((nt, 128), jnp.float32),
        grid=(nt // tb,),
        in_specs=in_specs,
        out_specs=pl.BlockSpec((tb, 128), lambda b: (b, 0)),
        scratch_shapes=[pltpu.VMEM((tb, 12, 12, 16), jnp.float32),   # pool1 output
                        pltpu.VMEM((tb, 8, 8, 400), jnp.float32),    # conv2 im2col
                        pltpu.VMEM((tb, 512), jnp.float32)],         # flattened fc1 input
        compiler_params=pltpu.CompilerParams(
            dimension_semantics=("parallel",),
            vmem_limit_bytes=48 * 1024 * 1024),
    )(*args)
    return out[:n, :10]


# ------------------------------ params & reference ---------------------------

def make_lenet_params(key):
    # Kernel-friendly storage (mapping from the PyTorch module's tensors):
    #   w1  (32, 16):    row kh*5+kw (<25) = conv_1.weight[:, 0, kh, kw]; rows 25..31 zero.
    #   w2  (400, 32):   w2[(kh*5+kw)*16 + ci, co] = conv_2.weight[co, ci, kh, kw].
    #   fw1 (512, 256):  fw1[(h*4+w)*32 + c, o] = fc_1.weight[o, c*16 + h*4 + w].
    #   fw2 (256, 128):  [:, :120] = fc_2.weight.T, rest zero;   fb2 padded 120 -> 128.
    #   fw3 (128, 128):  [:120, :84] = fc_3.weight.T, rest zero; fb3 padded 84  -> 128.
    #   fw4 (128, 128):  [:84, :10] = fc_4.weight.T, rest zero;  fb4 padded 10  -> 128.
    ks = jax.random.split(key, 12)
    p = {}
    p["w1"] = jnp.pad(jax.random.normal(ks[0], (25, 16), jnp.float32) / 5.0,
                      ((0, 7), (0, 0)))
    p["b1"] = jax.random.normal(ks[1], (16,), jnp.float32) * 0.01
    p["w2"] = (jax.random.normal(ks[2], (25, 16, 32), jnp.float32) / 20.0).reshape(400, 32)
    p["b2"] = jax.random.normal(ks[3], (32,), jnp.float32) * 0.01
    p["fw1"] = jax.random.normal(ks[4], (512, 256), jnp.float32) / jnp.sqrt(512.0)
    p["fb1"] = jax.random.normal(ks[5], (256,), jnp.float32) * 0.01
    p["fw2"] = jnp.pad(jax.random.normal(ks[6], (256, 120), jnp.float32) / 16.0,
                       ((0, 0), (0, 8)))
    p["fb2"] = jnp.pad(jax.random.normal(ks[7], (120,), jnp.float32) * 0.01, (0, 8))
    p["fw3"] = jnp.pad(jax.random.normal(ks[8], (120, 84), jnp.float32) / jnp.sqrt(120.0),
                       ((0, 8), (0, 44)))
    p["fb3"] = jnp.pad(jax.random.normal(ks[9], (84,), jnp.float32) * 0.01, (0, 44))
    p["fw4"] = jnp.pad(jax.random.normal(ks[10], (84, 10), jnp.float32) / jnp.sqrt(84.0),
                       ((0, 44), (0, 118)))
    p["fb4"] = jnp.pad(jax.random.normal(ks[11], (10,), jnp.float32) * 0.01, (0, 118))
    return p


def lenet_ref(params, x_nchw):
    # Pure-JAX f32 reference of the same forward pass (validation only).
    n = x_nchw.shape[0]
    x = x_nchw[:, 0].astype(jnp.float32)
    cols = jnp.stack([x[:, kh:kh + 24, kw:kw + 24]
                      for kh in range(5) for kw in range(5)], axis=-1)        # (n,24,24,25)
    h = jnp.maximum(jnp.einsum("nijt,tc->nijc", cols, params["w1"][:25]) + params["b1"], 0.0)
    h = jnp.max(h.reshape(n, 12, 2, 12, 2, 16), axis=(2, 4))                  # (n,12,12,16)
    cols2 = jnp.concatenate([h[:, kh:kh + 8, kw:kw + 8, :]
                             for kh in range(5) for kw in range(5)], axis=-1)  # (n,8,8,400)
    h = jnp.maximum(jnp.einsum("nijk,kc->nijc", cols2, params["w2"]) + params["b2"], 0.0)
    h = jnp.max(h.reshape(n, 4, 2, 4, 2, 32), axis=(2, 4))                    # (n,4,4,32)
    h = jnp.maximum(h.reshape(n, 512) @ params["fw1"] + params["fb1"], 0.0)
    h = jnp.maximum(h @ params["fw2"] + params["fb2"], 0.0)
    h = jnp.maximum(h @ params["fw3"] + params["fb3"], 0.0)
    return (h @ params["fw4"] + params["fb4"])[:, :10]


# ------------------------------------ main ------------------------------------

if __name__ == "__main__":
    key = jax.random.PRNGKey(0)
    k_x, k_p = jax.random.split(key)

    N = 2
    # LeNet_adj needs 28x28x1 input so the flatten is 32*4*4 = 512 (fc_1's in-dim).
    x = jax.random.normal(k_x, (N, 1, 28, 28), jnp.float32)
    params = make_lenet_params(k_p)

    logits = jax.jit(lenet_forward)(params, x)
    jax.block_until_ready(logits)

    assert logits.shape == (N, 10), logits.shape
    assert logits.dtype == jnp.float32

    ref = lenet_ref(params, x)
    err = float(jnp.max(jnp.abs(logits - ref)))
    # bf16 MXU operands in-kernel vs. an f32 reference across 6 stacked matmuls.
    assert err < 0.2, f"max |pallas - ref| = {err}"

    print("KERNEL_OK")
</pallas_src>

<mosaic_0001>
module attributes {stable_mosaic.version = 11 : i64} {
  func.func @_lenet_kernel(%arg0: i32, %arg1: memref<1152x32xbf16, #tpu.memory_space<vmem>>, %arg2: memref<32x16xbf16, #tpu.memory_space<vmem>>, %arg3: memref<1x16xf32, #tpu.memory_space<vmem>>, %arg4: memref<400x32xbf16, #tpu.memory_space<vmem>>, %arg5: memref<1x32xf32, #tpu.memory_space<vmem>>, %arg6: memref<512x256xbf16, #tpu.memory_space<vmem>>, %arg7: memref<1x256xf32, #tpu.memory_space<vmem>>, %arg8: memref<256x128xbf16, #tpu.memory_space<vmem>>, %arg9: memref<1x128xf32, #tpu.memory_space<vmem>>, %arg10: memref<128x128xbf16, #tpu.memory_space<vmem>>, %arg11: memref<1x128xf32, #tpu.memory_space<vmem>>, %arg12: memref<128x128xbf16, #tpu.memory_space<vmem>>, %arg13: memref<1x128xf32, #tpu.memory_space<vmem>>, %arg14: memref<2x128xf32, #tpu.memory_space<vmem>>, %arg15: memref<2x12x12x16xf32, #tpu.memory_space<vmem>>, %arg16: memref<2x8x8x400xf32, #tpu.memory_space<vmem>>, %arg17: memref<2x512xf32, #tpu.memory_space<vmem>>) attributes {dimension_semantics = [#tpu.dimension_semantics<parallel>], iteration_bounds = array<i64: 1>, scalar_prefetch = 0 : i64, scratch_operands = 3 : i64, tpu.core_type = #tpu.core_type<tc>, window_params = [{transform_indices = @transform_0, window_bounds = array<i64: 1152, 32>}, {pipeline_mode = #tpu.pipeline_mode<synchronous>, transform_indices = @transform_1, window_bounds = array<i64: 32, 16>}, {pipeline_mode = #tpu.pipeline_mode<synchronous>, transform_indices = @transform_2, window_bounds = array<i64: 1, 16>}, {pipeline_mode = #tpu.pipeline_mode<synchronous>, transform_indices = @transform_3, window_bounds = array<i64: 400, 32>}, {pipeline_mode = #tpu.pipeline_mode<synchronous>, transform_indices = @transform_4, window_bounds = array<i64: 1, 32>}, {pipeline_mode = #tpu.pipeline_mode<synchronous>, transform_indices = @transform_5, window_bounds = array<i64: 512, 256>}, {pipeline_mode = #tpu.pipeline_mode<synchronous>, transform_indices = @transform_6, window_bounds = array<i64: 1, 256>}, {pipeline_mode = #tpu.pipeline_mode<synchronous>, transform_indices = @transform_7, window_bounds = array<i64: 256, 128>}, {pipeline_mode = #tpu.pipeline_mode<synchronous>, transform_indices = @transform_8, window_bounds = array<i64: 1, 128>}, {pipeline_mode = #tpu.pipeline_mode<synchronous>, transform_indices = @transform_9, window_bounds = array<i64: 128, 128>}, {pipeline_mode = #tpu.pipeline_mode<synchronous>, transform_indices = @transform_10, window_bounds = array<i64: 1, 128>}, {pipeline_mode = #tpu.pipeline_mode<synchronous>, transform_indices = @transform_11, window_bounds = array<i64: 128, 128>}, {pipeline_mode = #tpu.pipeline_mode<synchronous>, transform_indices = @transform_12, window_bounds = array<i64: 1, 128>}, {transform_indices = @transform_13, window_bounds = array<i64: 2, 128>}]} {
    %c0 = arith.constant 0 : index
    %c0_0 = arith.constant 0 : index
    %0 = vector.load %arg1[%c0, %c0_0] : memref<1152x32xbf16, #tpu.memory_space<vmem>>, vector<1152x32xbf16>
    %c0_1 = arith.constant 0 : index
    %c0_2 = arith.constant 0 : index
    %1 = vector.load %arg2[%c0_1, %c0_2] : memref<32x16xbf16, #tpu.memory_space<vmem>>, vector<32x16xbf16>
    %cst = arith.constant dense<0.000000e+00> : vector<1152x16xf32>
    %2 = tpu.matmul %0, %1, %cst {dimension_numbers = #tpu.dot_dimension_numbers<[1], [0], [0], [1], [0, 0, 1, 1], [], []>} : vector<1152x32xbf16>, vector<32x16xbf16>, vector<1152x16xf32> -> vector<1152x16xf32>
    %c0_3 = arith.constant 0 : index
    %c0_4 = arith.constant 0 : index
    %3 = vector.load %arg3[%c0_3, %c0_4] : memref<1x16xf32, #tpu.memory_space<vmem>>, vector<1x16xf32>
    %4 = vector.broadcast %3 : vector<1x16xf32> to vector<1152x16xf32>
    %5 = arith.addf %2, %4 : vector<1152x16xf32>
    %cst_5 = arith.constant 0.000000e+00 : f32
    %6 = vector.broadcast %cst_5 : f32 to vector<1152x16xf32>
    %7 = arith.maximumf %5, %6 : vector<1152x16xf32>
    %8 = vector.shape_cast %7 : vector<1152x16xf32> to vector<2x2x2x144x16xf32>
    %9 = vector.extract_strided_slice %8 {offsets = [0, 0, 0, 0, 0], sizes = [2, 1, 1, 144, 16], strides = [1, 1, 1, 1, 1]} : vector<2x2x2x144x16xf32> to vector<2x1x1x144x16xf32>
    %10 = vector.shape_cast %9 : vector<2x1x1x144x16xf32> to vector<2x144x16xf32>
    %11 = vector.extract_strided_slice %8 {offsets = [0, 0, 1, 0, 0], sizes = [2, 1, 1, 144, 16], strides = [1, 1, 1, 1, 1]} : vector<2x2x2x144x16xf32> to vector<2x1x1x144x16xf32>
    %12 = vector.shape_cast %11 : vector<2x1x1x144x16xf32> to vector<2x144x16xf32>
    %13 = arith.maximumf %10, %12 : vector<2x144x16xf32>
    %14 = vector.extract_strided_slice %8 {offsets = [0, 1, 0, 0, 0], sizes = [2, 1, 1, 144, 16], strides = [1, 1, 1, 1, 1]} : vector<2x2x2x144x16xf32> to vector<2x1x1x144x16xf32>
    %15 = vector.shape_cast %14 : vector<2x1x1x144x16xf32> to vector<2x144x16xf32>
    %16 = vector.extract_strided_slice %8 {offsets = [0, 1, 1, 0, 0], sizes = [2, 1, 1, 144, 16], strides = [1, 1, 1, 1, 1]} : vector<2x2x2x144x16xf32> to vector<2x1x1x144x16xf32>
    %17 = vector.shape_cast %16 : vector<2x1x1x144x16xf32> to vector<2x144x16xf32>
    %18 = arith.maximumf %15, %17 : vector<2x144x16xf32>
    %19 = arith.maximumf %13, %18 : vector<2x144x16xf32>
    %20 = vector.extract_strided_slice %19 {offsets = [0, 0, 0], sizes = [2, 12, 16], strides = [1, 1, 1]} : vector<2x144x16xf32> to vector<2x12x16xf32>
    %c0_6 = arith.constant 0 : index
    %c0_7 = arith.constant 0 : index
    %c0_8 = arith.constant 0 : index
    %c0_9 = arith.constant 0 : index
    %21 = vector.load %arg15[%c0_6, %c0_7, %c0_8, %c0_9] : memref<2x12x12x16xf32, #tpu.memory_space<vmem>>, vector<2x1x12x16xf32>
    %22 = vector.shape_cast %21 : vector<2x1x12x16xf32> to vector<2x12x16xf32>
    %23 = vector.shape_cast %20 : vector<2x12x16xf32> to vector<2x1x12x16xf32>
    tpu.vector_store %arg15[%c0_6, %c0_7, %c0_8, %c0_9], %23 {strides = array<i32>} : memref<2x12x12x16xf32, #tpu.memory_space<vmem>>, vector<2x1x12x16xf32>,
    %24 = vector.extract_strided_slice %19 {offsets = [0, 12, 0], sizes = [2, 12, 16], strides = [1, 1, 1]} : vector<2x144x16xf32> to vector<2x12x16xf32>
    %c0_10 = arith.constant 0 : index
    %c1 = arith.constant 1 : index
    %c0_11 = arith.constant 0 : index
    %c0_12 = arith.constant 0 : index
    %25 = vector.load %arg15[%c0_10, %c1, %c0_11, %c0_12] : memref<2x12x12x16xf32, #tpu.memory_space<vmem>>, vector<2x1x12x16xf32>
    %26 = vector.shape_cast %25 : vector<2x1x12x16xf32> to vector<2x12x16xf32>
    %27 = vector.shape_cast %24 : vector<2x12x16xf32> to vector<2x1x12x16xf32>
    tpu.vector_store %arg15[%c0_10, %c1, %c0_11, %c0_12], %27 {strides = array<i32>} : memref<2x12x12x16xf32, #tpu.memory_space<vmem>>, vector<2x1x12x16xf32>,
    %28 = vector.extract_strided_slice %19 {offsets = [0, 24, 0], sizes = [2, 12, 16], strides = [1, 1, 1]} : vector<2x144x16xf32> to vector<2x12x16xf32>
    %c0_13 = arith.constant 0 : index
    %c2 = arith.constant 2 : index
    %c0_14 = arith.constant 0 : index
    %c0_15 = arith.constant 0 : index
    %29 = vector.load %arg15[%c0_13, %c2, %c0_14, %c0_15] : memref<2x12x12x16xf32, #tpu.memory_space<vmem>>, vector<2x1x12x16xf32>
    %30 = vector.shape_cast %29 : vector<2x1x12x16xf32> to vector<2x12x16xf32>
    %31 = vector.shape_cast %28 : vector<2x12x16xf32> to vector<2x1x12x16xf32>
    tpu.vector_store %arg15[%c0_13, %c2, %c0_14, %c0_15], %31 {strides = array<i32>} : memref<2x12x12x16xf32, #tpu.memory_space<vmem>>, vector<2x1x12x16xf32>,
    %32 = vector.extract_strided_slice %19 {offsets = [0, 36, 0], sizes = [2, 12, 16], strides = [1, 1, 1]} : vector<2x144x16xf32> to vector<2x12x16xf32>
    %c0_16 = arith.constant 0 : index
    %c3 = arith.constant 3 : index
    %c0_17 = arith.constant 0 : index
    %c0_18 = arith.constant 0 : index
    %33 = vector.load %arg15[%c0_16, %c3, %c0_17, %c0_18] : memref<2x12x12x16xf32, #tpu.memory_space<vmem>>, vector<2x1x12x16xf32>
    %34 = vector.shape_cast %33 : vector<2x1x12x16xf32> to vector<2x12x16xf32>
    %35 = vector.shape_cast %32 : vector<2x12x16xf32> to vector<2x1x12x16xf32>
    tpu.vector_store %arg15[%c0_16, %c3, %c0_17, %c0_18], %35 {strides = array<i32>} : memref<2x12x12x16xf32, #tpu.memory_space<vmem>>, vector<2x1x12x16xf32>,
    %36 = vector.extract_strided_slice %19 {offsets = [0, 48, 0], sizes = [2, 12, 16], strides = [1, 1, 1]} : vector<2x144x16xf32> to vector<2x12x16xf32>
    %c0_19 = arith.constant 0 : index
    %c4 = arith.constant 4 : index
    %c0_20 = arith.constant 0 : index
    %c0_21 = arith.constant 0 : index
    %37 = vector.load %arg15[%c0_19, %c4, %c0_20, %c0_21] : memref<2x12x12x16xf32, #tpu.memory_space<vmem>>, vector<2x1x12x16xf32>
    %38 = vector.shape_cast %37 : vector<2x1x12x16xf32> to vector<2x12x16xf32>
    %39 = vector.shape_cast %36 : vector<2x12x16xf32> to vector<2x1x12x16xf32>
    tpu.vector_store %arg15[%c0_19, %c4, %c0_20, %c0_21], %39 {strides = array<i32>} : memref<2x12x12x16xf32, #tpu.memory_space<vmem>>, vector<2x1x12x16xf32>,
    %40 = vector.extract_strided_slice %19 {offsets = [0, 60, 0], sizes = [2, 12, 16], strides = [1, 1, 1]} : vector<2x144x16xf32> to vector<2x12x16xf32>
    %c0_22 = arith.constant 0 : index
    %c5 = arith.constant 5 : index
    %c0_23 = arith.constant 0 : index
    %c0_24 = arith.constant 0 : index
    %41 = vector.load %arg15[%c0_22, %c5, %c0_23, %c0_24] : memref<2x12x12x16xf32, #tpu.memory_space<vmem>>, vector<2x1x12x16xf32>
    %42 = vector.shape_cast %41 : vector<2x1x12x16xf32> to vector<2x12x16xf32>
    %43 = vector.shape_cast %40 : vector<2x12x16xf32> to vector<2x1x12x16xf32>
    tpu.vector_store %arg15[%c0_22, %c5, %c0_23, %c0_24], %43 {strides = array<i32>} : memref<2x12x12x16xf32, #tpu.memory_space<vmem>>, vector<2x1x12x16xf32>,
    %44 = vector.extract_strided_slice %19 {offsets = [0, 72, 0], sizes = [2, 12, 16], strides = [1, 1, 1]} : vector<2x144x16xf32> to vector<2x12x16xf32>
    %c0_25 = arith.constant 0 : index
    %c6 = arith.constant 6 : index
    %c0_26 = arith.constant 0 : index
    %c0_27 = arith.constant 0 : index
    %45 = vector.load %arg15[%c0_25, %c6, %c0_26, %c0_27] : memref<2x12x12x16xf32, #tpu.memory_space<vmem>>, vector<2x1x12x16xf32>
    %46 = vector.shape_cast %45 : vector<2x1x12x16xf32> to vector<2x12x16xf32>
    %47 = vector.shape_cast %44 : vector<2x12x16xf32> to vector<2x1x12x16xf32>
    tpu.vector_store %arg15[%c0_25, %c6, %c0_26, %c0_27], %47 {strides = array<i32>} : memref<2x12x12x16xf32, #tpu.memory_space<vmem>>, vector<2x1x12x16xf32>,
    %48 = vector.extract_strided_slice %19 {offsets = [0, 84, 0], sizes = [2, 12, 16], strides = [1, 1, 1]} : vector<2x144x16xf32> to vector<2x12x16xf32>
    %c0_28 = arith.constant 0 : index
    %c7 = arith.constant 7 : index
    %c0_29 = arith.constant 0 : index
    %c0_30 = arith.constant 0 : index
    %49 = vector.load %arg15[%c0_28, %c7, %c0_29, %c0_30] : memref<2x12x12x16xf32, #tpu.memory_space<vmem>>, vector<2x1x12x16xf32>
    %50 = vector.shape_cast %49 : vector<2x1x12x16xf32> to vector<2x12x16xf32>
    %51 = vector.shape_cast %48 : vector<2x12x16xf32> to vector<2x1x12x16xf32>
    tpu.vector_store %arg15[%c0_28, %c7, %c0_29, %c0_30], %51 {strides = array<i32>} : memref<2x12x12x16xf32, #tpu.memory_space<vmem>>, vector<2x1x12x16xf32>,
    %52 = vector.extract_strided_slice %19 {offsets = [0, 96, 0], sizes = [2, 12, 16], strides = [1, 1, 1]} : vector<2x144x16xf32> to vector<2x12x16xf32>
    %c0_31 = arith.constant 0 : index
    %c8 = arith.constant 8 : index
    %c0_32 = arith.constant 0 : index
    %c0_33 = arith.constant 0 : index
    %53 = vector.load %arg15[%c0_31, %c8, %c0_32, %c0_33] : memref<2x12x12x16xf32, #tpu.memory_space<vmem>>, vector<2x1x12x16xf32>
    %54 = vector.shape_cast %53 : vector<2x1x12x16xf32> to vector<2x12x16xf32>
    %55 = vector.shape_cast %52 : vector<2x12x16xf32> to vector<2x1x12x16xf32>
    tpu.vector_store %arg15[%c0_31, %c8, %c0_32, %c0_33], %55 {strides = array<i32>} : memref<2x12x12x16xf32, #tpu.memory_space<vmem>>, vector<2x1x12x16xf32>,
    %56 = vector.extract_strided_slice %19 {offsets = [0, 108, 0], sizes = [2, 12, 16], strides = [1, 1, 1]} : vector<2x144x16xf32> to vector<2x12x16xf32>
    %c0_34 = arith.constant 0 : index
    %c9 = arith.constant 9 : index
    %c0_35 = arith.constant 0 : index
    %c0_36 = arith.constant 0 : index
    %57 = vector.load %arg15[%c0_34, %c9, %c0_35, %c0_36] : memref<2x12x12x16xf32, #tpu.memory_space<vmem>>, vector<2x1x12x16xf32>
    %58 = vector.shape_cast %57 : vector<2x1x12x16xf32> to vector<2x12x16xf32>
    %59 = vector.shape_cast %56 : vector<2x12x16xf32> to vector<2x1x12x16xf32>
    tpu.vector_store %arg15[%c0_34, %c9, %c0_35, %c0_36], %59 {strides = array<i32>} : memref<2x12x12x16xf32, #tpu.memory_space<vmem>>, vector<2x1x12x16xf32>,
    %60 = vector.extract_strided_slice %19 {offsets = [0, 120, 0], sizes = [2, 12, 16], strides = [1, 1, 1]} : vector<2x144x16xf32> to vector<2x12x16xf32>
    %c0_37 = arith.constant 0 : index
    %c10 = arith.constant 10 : index
    %c0_38 = arith.constant 0 : index
    %c0_39 = arith.constant 0 : index
    %61 = vector.load %arg15[%c0_37, %c10, %c0_38, %c0_39] : memref<2x12x12x16xf32, #tpu.memory_space<vmem>>, vector<2x1x12x16xf32>
    %62 = vector.shape_cast %61 : vector<2x1x12x16xf32> to vector<2x12x16xf32>
    %63 = vector.shape_cast %60 : vector<2x12x16xf32> to vector<2x1x12x16xf32>
    tpu.vector_store %arg15[%c0_37, %c10, %c0_38, %c0_39], %63 {strides = array<i32>} : memref<2x12x12x16xf32, #tpu.memory_space<vmem>>, vector<2x1x12x16xf32>,
    %64 = vector.extract_strided_slice %19 {offsets = [0, 132, 0], sizes = [2, 12, 16], strides = [1, 1, 1]} : vector<2x144x16xf32> to vector<2x12x16xf32>
    %c0_40 = arith.constant 0 : index
    %c11 = arith.constant 11 : index
    %c0_41 = arith.constant 0 : index
    %c0_42 = arith.constant 0 : index
    %65 = vector.load %arg15[%c0_40, %c11, %c0_41, %c0_42] : memref<2x12x12x16xf32, #tpu.memory_space<vmem>>, vector<2x1x12x16xf32>
    %66 = vector.shape_cast %65 : vector<2x1x12x16xf32> to vector<2x12x16xf32>
    %67 = vector.shape_cast %64 : vector<2x12x16xf32> to vector<2x1x12x16xf32>
    tpu.vector_store %arg15[%c0_40, %c11, %c0_41, %c0_42], %67 {strides = array<i32>} : memref<2x12x12x16xf32, #tpu.memory_space<vmem>>, vector<2x1x12x16xf32>,
    %c0_43 = arith.constant 0 : index
    %c0_44 = arith.constant 0 : index
    %c0_45 = arith.constant 0 : index
    %c0_46 = arith.constant 0 : index
    %68 = vector.load %arg15[%c0_43, %c0_44, %c0_45, %c0_46] : memref<2x12x12x16xf32, #tpu.memory_space<vmem>>, vector<2x8x8x16xf32>
    %c0_47 = arith.constant 0 : index
    %c0_48 = arith.constant 0 : index
    %c0_49 = arith.constant 0 : index
    %c0_50 = arith.constant 0 : index
    %69 = vector.load %arg16[%c0_47, %c0_48, %c0_49, %c0_50] : memref<2x8x8x400xf32, #tpu.memory_space<vmem>>, vector<2x8x8x16xf32>
    tpu.vector_store %arg16[%c0_47, %c0_48, %c0_49, %c0_50], %68 {strides = array<i32>} : memref<2x8x8x400xf32, #tpu.memory_space<vmem>>, vector<2x8x8x16xf32>,
    %c0_51 = arith.constant 0 : index
    %c0_52 = arith.constant 0 : index
    %c1_53 = arith.constant 1 : index
    %c0_54 = arith.constant 0 : index
    %70 = vector.load %arg15[%c0_51, %c0_52, %c1_53, %c0_54] : memref<2x12x12x16xf32, #tpu.memory_space<vmem>>, vector<2x8x8x16xf32>
    %c0_55 = arith.constant 0 : index
    %c0_56 = arith.constant 0 : index
    %c0_57 = arith.constant 0 : index
    %c16 = arith.constant 16 : index
    %71 = vector.load %arg16[%c0_55, %c0_56, %c0_57, %c16] : memref<2x8x8x400xf32, #tpu.memory_space<vmem>>, vector<2x8x8x16xf32>
    tpu.vector_store %arg16[%c0_55, %c0_56, %c0_57, %c16], %70 {strides = array<i32>} : memref<2x8x8x400xf32, #tpu.memory_space<vmem>>, vector<2x8x8x16xf32>,
    %c0_58 = arith.constant 0 : index
    %c0_59 = arith.constant 0 : index
    %c2_60 = arith.constant 2 : index
    %c0_61 = arith.constant 0 : index
    %72 = vector.load %arg15[%c0_58, %c0_59, %c2_60, %c0_61] : memref<2x12x12x16xf32, #tpu.memory_space<vmem>>, vector<2x8x8x16xf32>
    %c0_62 = arith.constant 0 : index
    %c0_63 = arith.constant 0 : index
    %c0_64 = arith.constant 0 : index
    %c32 = arith.constant 32 : index
    %73 = vector.load %arg16[%c0_62, %c0_63, %c0_64, %c32] : memref<2x8x8x400xf32, #tpu.memory_space<vmem>>, vector<2x8x8x16xf32>
    tpu.vector_store %arg16[%c0_62, %c0_63, %c0_64, %c32], %72 {strides = array<i32>} : memref<2x8x8x400xf32, #tpu.memory_space<vmem>>, vector<2x8x8x16xf32>,
    %c0_65 = arith.constant 0 : index
    %c0_66 = arith.constant 0 : index
    %c3_67 = arith.constant 3 : index
    %c0_68 = arith.constant 0 : index
    %74 = vector.load %arg15[%c0_65, %c0_66, %c3_67, %c0_68] : memref<2x12x12x16xf32, #tpu.memory_space<vmem>>, vector<2x8x8x16xf32>
    %c0_69 = arith.constant 0 : index
    %c0_70 = arith.constant 0 : index
    %c0_71 = arith.constant 0 : index
    %c48 = arith.constant 48 : index
    %75 = vector.load %arg16[%c0_69, %c0_70, %c0_71, %c48] : memref<2x8x8x400xf32, #tpu.memory_space<vmem>>, vector<2x8x8x16xf32>
    tpu.vector_store %arg16[%c0_69, %c0_70, %c0_71, %c48], %74 {strides = array<i32>} : memref<2x8x8x400xf32, #tpu.memory_space<vmem>>, vector<2x8x8x16xf32>,
    %c0_72 = arith.constant 0 : index
    %c0_73 = arith.constant 0 : index
    %c4_74 = arith.constant 4 : index
    %c0_75 = arith.constant 0 : index
    %76 = vector.load %arg15[%c0_72, %c0_73, %c4_74, %c0_75] : memref<2x12x12x16xf32, #tpu.memory_space<vmem>>, vector<2x8x8x16xf32>
    %c0_76 = arith.constant 0 : index
    %c0_77 = arith.constant 0 : index
    %c0_78 = arith.constant 0 : index
    %c64 = arith.constant 64 : index
    %77 = vector.load %arg16[%c0_76, %c0_77, %c0_78, %c64] : memref<2x8x8x400xf32, #tpu.memory_space<vmem>>, vector<2x8x8x16xf32>
    tpu.vector_store %arg16[%c0_76, %c0_77, %c0_78, %c64], %76 {strides = array<i32>} : memref<2x8x8x400xf32, #tpu.memory_space<vmem>>, vector<2x8x8x16xf32>,
    %c0_79 = arith.constant 0 : index
    %c1_80 = arith.constant 1 : index
    %c0_81 = arith.constant 0 : index
    %c0_82 = arith.constant 0 : index
    %78 = vector.load %arg15[%c0_79, %c1_80, %c0_81, %c0_82] : memref<2x12x12x16xf32, #tpu.memory_space<vmem>>, vector<2x8x8x16xf32>
    %c0_83 = arith.constant 0 : index
    %c0_84 = arith.constant 0 : index
    %c0_85 = arith.constant 0 : index
    %c80 = arith.constant 80 : index
    %79 = vector.load %arg16[%c0_83, %c0_84, %c0_85, %c80] : memref<2x8x8x400xf32, #tpu.memory_space<vmem>>, vector<2x8x8x16xf32>
    tpu.vector_store %arg16[%c0_83, %c0_84, %c0_85, %c80], %78 {strides = array<i32>} : memref<2x8x8x400xf32, #tpu.memory_space<vmem>>, vector<2x8x8x16xf32>,
    %c0_86 = arith.constant 0 : index
    %c1_87 = arith.constant 1 : index
    %c1_88 = arith.constant 1 : index
    %c0_89 = arith.constant 0 : index
    %80 = vector.load %arg15[%c0_86, %c1_87, %c1_88, %c0_89] : memref<2x12x12x16xf32, #tpu.memory_space<vmem>>, vector<2x8x8x16xf32>
    %c0_90 = arith.constant 0 : index
    %c0_91 = arith.constant 0 : index
    %c0_92 = arith.constant 0 : index
    %c96 = arith.constant 96 : index
    %81 = vector.load %arg16[%c0_90, %c0_91, %c0_92, %c96] : memref<2x8x8x400xf32, #tpu.memory_space<vmem>>, vector<2x8x8x16xf32>
    tpu.vector_store %arg16[%c0_90, %c0_91, %c0_92, %c96], %80 {strides = array<i32>} : memref<2x8x8x400xf32, #tpu.memory_space<vmem>>, vector<2x8x8x16xf32>,
    %c0_93 = arith.constant 0 : index
    %c1_94 = arith.constant 1 : index
    %c2_95 = arith.constant 2 : index
    %c0_96 = arith.constant 0 : index
    %82 = vector.load %arg15[%c0_93, %c1_94, %c2_95, %c0_96] : memref<2x12x12x16xf32, #tpu.memory_space<vmem>>, vector<2x8x8x16xf32>
    %c0_97 = arith.constant 0 : index
    %c0_98 = arith.constant 0 : index
    %c0_99 = arith.constant 0 : index
    %c112 = arith.constant 112 : index
    %83 = vector.load %arg16[%c0_97, %c0_98, %c0_99, %c112] : memref<2x8x8x400xf32, #tpu.memory_space<vmem>>, vector<2x8x8x16xf32>
    tpu.vector_store %arg16[%c0_97, %c0_98, %c0_99, %c112], %82 {strides = array<i32>} : memref<2x8x8x400xf32, #tpu.memory_space<vmem>>, vector<2x8x8x16xf32>,
    %c0_100 = arith.constant 0 : index
    %c1_101 = arith.constant 1 : index
    %c3_102 = arith.constant 3 : index
    %c0_103 = arith.constant 0 : index
    %84 = vector.load %arg15[%c0_100, %c1_101, %c3_102, %c0_103] : memref<2x12x12x16xf32, #tpu.memory_space<vmem>>, vector<2x8x8x16xf32>
    %c0_104 = arith.constant 0 : index
    %c0_105 = arith.constant 0 : index
    %c0_106 = arith.constant 0 : index
    %c128 = arith.constant 128 : index
    %85 = vector.load %arg16[%c0_104, %c0_105, %c0_106, %c128] : memref<2x8x8x400xf32, #tpu.memory_space<vmem>>, vector<2x8x8x16xf32>
    tpu.vector_store %arg16[%c0_104, %c0_105, %c0_106, %c128], %84 {strides = array<i32>} : memref<2x8x8x400xf32, #tpu.memory_space<vmem>>, vector<2x8x8x16xf32>,
    %c0_107 = arith.constant 0 : index
    %c1_108 = arith.constant 1 : index
    %c4_109 = arith.constant 4 : index
    %c0_110 = arith.constant 0 : index
    %86 = vector.load %arg15[%c0_107, %c1_108, %c4_109, %c0_110] : memref<2x12x12x16xf32, #tpu.memory_space<vmem>>, vector<2x8x8x16xf32>
    %c0_111 = arith.constant 0 : index
    %c0_112 = arith.constant 0 : index
    %c0_113 = arith.constant 0 : index
    %c144 = arith.constant 144 : index
    %87 = vector.load %arg16[%c0_111, %c0_112, %c0_113, %c144] : memref<2x8x8x400xf32, #tpu.memory_space<vmem>>, vector<2x8x8x16xf32>
    tpu.vector_store %arg16[%c0_111, %c0_112, %c0_113, %c144], %86 {strides = array<i32>} : memref<2x8x8x400xf32, #tpu.memory_space<vmem>>, vector<2x8x8x16xf32>,
    %c0_114 = arith.constant 0 : index
    %c2_115 = arith.constant 2 : index
    %c0_116 = arith.constant 0 : index
    %c0_117 = arith.constant 0 : index
    %88 = vector.load %arg15[%c0_114, %c2_115, %c0_116, %c0_117] : memref<2x12x12x16xf32, #tpu.memory_space<vmem>>, vector<2x8x8x16xf32>
    %c0_118 = arith.constant 0 : index
    %c0_119 = arith.constant 0 : index
    %c0_120 = arith.constant 0 : index
    %c160 = arith.constant 160 : index
    %89 = vector.load %arg16[%c0_118, %c0_119, %c0_120, %c160] : memref<2x8x8x400xf32, #tpu.memory_space<vmem>>, vector<2x8x8x16xf32>
    tpu.vector_store %arg16[%c0_118, %c0_119, %c0_120, %c160], %88 {strides = array<i32>} : memref<2x8x8x400xf32, #tpu.memory_space<vmem>>, vector<2x8x8x16xf32>,
    %c0_121 = arith.constant 0 : index
    %c2_122 = arith.constant 2 : index
    %c1_123 = arith.constant 1 : index
    %c0_124 = arith.constant 0 : index
    %90 = vector.load %arg15[%c0_121, %c2_122, %c1_123, %c0_124] : memref<2x12x12x16xf32, #tpu.memory_space<vmem>>, vector<2x8x8x16xf32>
    %c0_125 = arith.constant 0 : index
    %c0_126 = arith.constant 0 : index
    %c0_127 = arith.constant 0 : index
    %c176 = arith.constant 176 : index
    %91 = vector.load %arg16[%c0_125, %c0_126, %c0_127, %c176] : memref<2x8x8x400xf32, #tpu.memory_space<vmem>>, vector<2x8x8x16xf32>
    tpu.vector_store %arg16[%c0_125, %c0_126, %c0_127, %c176], %90 {strides = array<i32>} : memref<2x8x8x400xf32, #tpu.memory_space<vmem>>, vector<2x8x8x16xf32>,
    %c0_128 = arith.constant 0 : index
    %c2_129 = arith.constant 2 : index
    %c2_130 = arith.constant 2 : index
    %c0_131 = arith.constant 0 : index
    %92 = vector.load %arg15[%c0_128, %c2_129, %c2_130, %c0_131] : memref<2x12x12x16xf32, #tpu.memory_space<vmem>>, vector<2x8x8x16xf32>
    %c0_132 = arith.constant 0 : index
    %c0_133 = arith.constant 0 : index
    %c0_134 = arith.constant 0 : index
    %c192 = arith.constant 192 : index
    %93 = vector.load %arg16[%c0_132, %c0_133, %c0_134, %c192] : memref<2x8x8x400xf32, #tpu.memory_space<vmem>>, vector<2x8x8x16xf32>
    tpu.vector_store %arg16[%c0_132, %c0_133, %c0_134, %c192], %92 {strides = array<i32>} : memref<2x8x8x400xf32, #tpu.memory_space<vmem>>, vector<2x8x8x16xf32>,
    %c0_135 = arith.constant 0 : index
    %c2_136 = arith.constant 2 : index
    %c3_137 = arith.constant 3 : index
    %c0_138 = arith.constant 0 : index
    %94 = vector.load %arg15[%c0_135, %c2_136, %c3_137, %c0_138] : memref<2x12x12x16xf32, #tpu.memory_space<vmem>>, vector<2x8x8x16xf32>
    %c0_139 = arith.constant 0 : index
    %c0_140 = arith.constant 0 : index
    %c0_141 = arith.constant 0 : index
    %c208 = arith.constant 208 : index
    %95 = vector.load %arg16[%c0_139, %c0_140, %c0_141, %c208] : memref<2x8x8x400xf32, #tpu.memory_space<vmem>>, vector<2x8x8x16xf32>
    tpu.vector_store %arg16[%c0_139, %c0_140, %c0_141, %c208], %94 {strides = array<i32>} : memref<2x8x8x400xf32, #tpu.memory_space<vmem>>, vector<2x8x8x16xf32>,
    %c0_142 = arith.constant 0 : index
    %c2_143 = arith.constant 2 : index
    %c4_144 = arith.constant 4 : index
    %c0_145 = arith.constant 0 : index
    %96 = vector.load %arg15[%c0_142, %c2_143, %c4_144, %c0_145] : memref<2x12x12x16xf32, #tpu.memory_space<vmem>>, vector<2x8x8x16xf32>
    %c0_146 = arith.constant 0 : index
    %c0_147 = arith.constant 0 : index
    %c0_148 = arith.constant 0 : index
    %c224 = arith.constant 224 : index
    %97 = vector.load %arg16[%c0_146, %c0_147, %c0_148, %c224] : memref<2x8x8x400xf32, #tpu.memory_space<vmem>>, vector<2x8x8x16xf32>
    tpu.vector_store %arg16[%c0_146, %c0_147, %c0_148, %c224], %96 {strides = array<i32>} : memref<2x8x8x400xf32, #tpu.memory_space<vmem>>, vector<2x8x8x16xf32>,
    %c0_149 = arith.constant 0 : index
    %c3_150 = arith.constant 3 : index
    %c0_151 = arith.constant 0 : index
    %c0_152 = arith.constant 0 : index
    %98 = vector.load %arg15[%c0_149, %c3_150, %c0_151, %c0_152] : memref<2x12x12x16xf32, #tpu.memory_space<vmem>>, vector<2x8x8x16xf32>
    %c0_153 = arith.constant 0 : index
    %c0_154 = arith.constant 0 : index
    %c0_155 = arith.constant 0 : index
    %c240 = arith.constant 240 : index
    %99 = vector.load %arg16[%c0_153, %c0_154, %c0_155, %c240] : memref<2x8x8x400xf32, #tpu.memory_space<vmem>>, vector<2x8x8x16xf32>
    tpu.vector_store %arg16[%c0_153, %c0_154, %c0_155, %c240], %98 {strides = array<i32>} : memref<2x8x8x400xf32, #tpu.memory_space<vmem>>, vector<2x8x8x16xf32>,
    %c0_156 = arith.constant 0 : index
    %c3_157 = arith.constant 3 : index
    %c1_158 = arith.constant 1 : index
    %c0_159 = arith.constant 0 : index
    %100 = vector.load %arg15[%c0_156, %c3_157, %c1_158, %c0_159] : memref<2x12x12x16xf32, #tpu.memory_space<vmem>>, vector<2x8x8x16xf32>
    %c0_160 = arith.constant 0 : index
    %c0_161 = arith.constant 0 : index
    %c0_162 = arith.constant 0 : index
    %c256 = arith.constant 256 : index
    %101 = vector.load %arg16[%c0_160, %c0_161, %c0_162, %c256] : memref<2x8x8x400xf32, #tpu.memory_space<vmem>>, vector<2x8x8x16xf32>
    tpu.vector_store %arg16[%c0_160, %c0_161, %c0_162, %c256], %100 {strides = array<i32>} : memref<2x8x8x400xf32, #tpu.memory_space<vmem>>, vector<2x8x8x16xf32>,
    %c0_163 = arith.constant 0 : index
    %c3_164 = arith.constant 3 : index
    %c2_165 = arith.constant 2 : index
    %c0_166 = arith.constant 0 : index
    %102 = vector.load %arg15[%c0_163, %c3_164, %c2_165, %c0_166] : memref<2x12x12x16xf32, #tpu.memory_space<vmem>>, vector<2x8x8x16xf32>
    %c0_167 = arith.constant 0 : index
    %c0_168 = arith.constant 0 : index
    %c0_169 = arith.constant 0 : index
    %c272 = arith.constant 272 : index
    %103 = vector.load %arg16[%c0_167, %c0_168, %c0_169, %c272] : memref<2x8x8x400xf32, #tpu.memory_space<vmem>>, vector<2x8x8x16xf32>
    tpu.vector_store %arg16[%c0_167, %c0_168, %c0_169, %c272], %102 {strides = array<i32>} : memref<2x8x8x400xf32, #tpu.memory_space<vmem>>, vector<2x8x8x16xf32>,
    %c0_170 = arith.constant 0 : index
    %c3_171 = arith.constant 3 : index
    %c3_172 = arith.constant 3 : index
    %c0_173 = arith.constant 0 : index
    %104 = vector.load %arg15[%c0_170, %c3_171, %c3_172, %c0_173] : memref<2x12x12x16xf32, #tpu.memory_space<vmem>>, vector<2x8x8x16xf32>
    %c0_174 = arith.constant 0 : index
    %c0_175 = arith.constant 0 : index
    %c0_176 = arith.constant 0 : index
    %c288 = arith.constant 288 : index
    %105 = vector.load %arg16[%c0_174, %c0_175, %c0_176, %c288] : memref<2x8x8x400xf32, #tpu.memory_space<vmem>>, vector<2x8x8x16xf32>
    tpu.vector_store %arg16[%c0_174, %c0_175, %c0_176, %c288], %104 {strides = array<i32>} : memref<2x8x8x400xf32, #tpu.memory_space<vmem>>, vector<2x8x8x16xf32>,
    %c0_177 = arith.constant 0 : index
    %c3_178 = arith.constant 3 : index
    %c4_179 = arith.constant 4 : index
    %c0_180 = arith.constant 0 : index
    %106 = vector.load %arg15[%c0_177, %c3_178, %c4_179, %c0_180] : memref<2x12x12x16xf32, #tpu.memory_space<vmem>>, vector<2x8x8x16xf32>
    %c0_181 = arith.constant 0 : index
    %c0_182 = arith.constant 0 : index
    %c0_183 = arith.constant 0 : index
    %c304 = arith.constant 304 : index
    %107 = vector.load %arg16[%c0_181, %c0_182, %c0_183, %c304] : memref<2x8x8x400xf32, #tpu.memory_space<vmem>>, vector<2x8x8x16xf32>
    tpu.vector_store %arg16[%c0_181, %c0_182, %c0_183, %c304], %106 {strides = array<i32>} : memref<2x8x8x400xf32, #tpu.memory_space<vmem>>, vector<2x8x8x16xf32>,
    %c0_184 = arith.constant 0 : index
    %c4_185 = arith.constant 4 : index
    %c0_186 = arith.constant 0 : index
    %c0_187 = arith.constant 0 : index
    %108 = vector.load %arg15[%c0_184, %c4_185, %c0_186, %c0_187] : memref<2x12x12x16xf32, #tpu.memory_space<vmem>>, vector<2x8x8x16xf32>
    %c0_188 = arith.constant 0 : index
    %c0_189 = arith.constant 0 : index
    %c0_190 = arith.constant 0 : index
    %c320 = arith.constant 320 : index
    %109 = vector.load %arg16[%c0_188, %c0_189, %c0_190, %c320] : memref<2x8x8x400xf32, #tpu.memory_space<vmem>>, vector<2x8x8x16xf32>
    tpu.vector_store %arg16[%c0_188, %c0_189, %c0_190, %c320], %108 {strides = array<i32>} : memref<2x8x8x400xf32, #tpu.memory_space<vmem>>, vector<2x8x8x16xf32>,
    %c0_191 = arith.constant 0 : index
    %c4_192 = arith.constant 4 : index
    %c1_193 = arith.constant 1 : index
    %c0_194 = arith.constant 0 : index
    %110 = vector.load %arg15[%c0_191, %c4_192, %c1_193, %c0_194] : memref<2x12x12x16xf32, #tpu.memory_space<vmem>>, vector<2x8x8x16xf32>
    %c0_195 = arith.constant 0 : index
    %c0_196 = arith.constant 0 : index
    %c0_197 = arith.constant 0 : index
    %c336 = arith.constant 336 : index
    %111 = vector.load %arg16[%c0_195, %c0_196, %c0_197, %c336] : memref<2x8x8x400xf32, #tpu.memory_space<vmem>>, vector<2x8x8x16xf32>
    tpu.vector_store %arg16[%c0_195, %c0_196, %c0_197, %c336], %110 {strides = array<i32>} : memref<2x8x8x400xf32, #tpu.memory_space<vmem>>, vector<2x8x8x16xf32>,
    %c0_198 = arith.constant 0 : index
    %c4_199 = arith.constant 4 : index
    %c2_200 = arith.constant 2 : index
    %c0_201 = arith.constant 0 : index
    %112 = vector.load %arg15[%c0_198, %c4_199, %c2_200, %c0_201] : memref<2x12x12x16xf32, #tpu.memory_space<vmem>>, vector<2x8x8x16xf32>
    %c0_202 = arith.constant 0 : index
    %c0_203 = arith.constant 0 : index
    %c0_204 = arith.constant 0 : index
    %c352 = arith.constant 352 : index
    %113 = vector.load %arg16[%c0_202, %c0_203, %c0_204, %c352] : memref<2x8x8x400xf32, #tpu.memory_space<vmem>>, vector<2x8x8x16xf32>
    tpu.vector_store %arg16[%c0_202, %c0_203, %c0_204, %c352], %112 {strides = array<i32>} : memref<2x8x8x400xf32, #tpu.memory_space<vmem>>, vector<2x8x8x16xf32>,
    %c0_205 = arith.constant 0 : index
    %c4_206 = arith.constant 4 : index
    %c3_207 = arith.constant 3 : index
    %c0_208 = arith.constant 0 : index
    %114 = vector.load %arg15[%c0_205, %c4_206, %c3_207, %c0_208] : memref<2x12x12x16xf32, #tpu.memory_space<vmem>>, vector<2x8x8x16xf32>
    %c0_209 = arith.constant 0 : index
    %c0_210 = arith.constant 0 : index
    %c0_211 = arith.constant 0 : index
    %c368 = arith.constant 368 : index
    %115 = vector.load %arg16[%c0_209, %c0_210, %c0_211, %c368] : memref<2x8x8x400xf32, #tpu.memory_space<vmem>>, vector<2x8x8x16xf32>
    tpu.vector_store %arg16[%c0_209, %c0_210, %c0_211, %c368], %114 {strides = array<i32>} : memref<2x8x8x400xf32, #tpu.memory_space<vmem>>, vector<2x8x8x16xf32>,
    %c0_212 = arith.constant 0 : index
    %c4_213 = arith.constant 4 : index
    %c4_214 = arith.constant 4 : index
    %c0_215 = arith.constant 0 : index
    %116 = vector.load %arg15[%c0_212, %c4_213, %c4_214, %c0_215] : memref<2x12x12x16xf32, #tpu.memory_space<vmem>>, vector<2x8x8x16xf32>
    %c0_216 = arith.constant 0 : index
    %c0_217 = arith.constant 0 : index
    %c0_218 = arith.constant 0 : index
    %c384 = arith.constant 384 : index
    %117 = vector.load %arg16[%c0_216, %c0_217, %c0_218, %c384] : memref<2x8x8x400xf32, #tpu.memory_space<vmem>>, vector<2x8x8x16xf32>
    tpu.vector_store %arg16[%c0_216, %c0_217, %c0_218, %c384], %116 {strides = array<i32>} : memref<2x8x8x400xf32, #tpu.memory_space<vmem>>, vector<2x8x8x16xf32>,
    %c0_219 = arith.constant 0 : index
    %c0_220 = arith.constant 0 : index
    %c0_221 = arith.constant 0 : index
    %c0_222 = arith.constant 0 : index
    %118 = vector.load %arg16[%c0_219, %c0_220, %c0_221, %c0_222] : memref<2x8x8x400xf32, #tpu.memory_space<vmem>>, vector<2x8x8x400xf32>
    %119 = vector.shape_cast %118 : vector<2x8x8x400xf32> to vector<128x400xf32>
    %120 = arith.truncf %119 : vector<128x400xf32> to vector<128x400xbf16>
    %c0_223 = arith.constant 0 : index
    %c0_224 = arith.constant 0 : index
    %121 = vector.load %arg4[%c0_223, %c0_224] : memref<400x32xbf16, #tpu.memory_space<vmem>>, vector<400x32xbf16>
    %cst_225 = arith.constant dense<0.000000e+00> : vector<128x32xf32>
    %122 = tpu.matmul %120, %121, %cst_225 {dimension_numbers = #tpu.dot_dimension_numbers<[1], [0], [0], [1], [0, 0, 1, 1], [], []>} : vector<128x400xbf16>, vector<400x32xbf16>, vector<128x32xf32> -> vector<128x32xf32>
    %c0_226 = arith.constant 0 : index
    %c0_227 = arith.constant 0 : index
    %123 = vector.load %arg5[%c0_226, %c0_227] : memref<1x32xf32, #tpu.memory_space<vmem>>, vector<1x32xf32>
    %124 = vector.broadcast %123 : vector<1x32xf32> to vector<128x32xf32>
    %125 = arith.addf %122, %124 : vector<128x32xf32>
    %cst_228 = arith.constant 0.000000e+00 : f32
    %126 = vector.broadcast %cst_228 : f32 to vector<128x32xf32>
    %127 = arith.maximumf %125, %126 : vector<128x32xf32>
    %128 = vector.shape_cast %127 : vector<128x32xf32> to vector<2x4x2x8x32xf32>
    %129 = vector.extract_strided_slice %128 {offsets = [0, 0, 0, 0, 0], sizes = [2, 4, 1, 8, 32], strides = [1, 1, 1, 1, 1]} : vector<2x4x2x8x32xf32> to vector<2x4x1x8x32xf32>
    %130 = vector.shape_cast %129 : vector<2x4x1x8x32xf32> to vector<2x4x8x32xf32>
    %131 = vector.extract_strided_slice %128 {offsets = [0, 0, 1, 0, 0], sizes = [2, 4, 1, 8, 32], strides = [1, 1, 1, 1, 1]} : vector<2x4x2x8x32xf32> to vector<2x4x1x8x32xf32>
    %132 = vector.shape_cast %131 : vector<2x4x1x8x32xf32> to vector<2x4x8x32xf32>
    %133 = arith.maximumf %130, %132 : vector<2x4x8x32xf32>
    %134 = vector.extract_strided_slice %133 {offsets = [0, 0, 0, 0], sizes = [2, 1, 1, 32], strides = [1, 1, 1, 1]} : vector<2x4x8x32xf32> to vector<2x1x1x32xf32>
    %135 = vector.shape_cast %134 : vector<2x1x1x32xf32> to vector<2x32xf32>
    %136 = vector.extract_strided_slice %133 {offsets = [0, 0, 1, 0], sizes = [2, 1, 1, 32], strides = [1, 1, 1, 1]} : vector<2x4x8x32xf32> to vector<2x1x1x32xf32>
    %137 = vector.shape_cast %136 : vector<2x1x1x32xf32> to vector<2x32xf32>
    %138 = arith.maximumf %135, %137 : vector<2x32xf32>
    %c0_229 = arith.constant 0 : index
    %c0_230 = arith.constant 0 : index
    %139 = vector.load %arg17[%c0_229, %c0_230] : memref<2x512xf32, #tpu.memory_space<vmem>>, vector<2x32xf32>
    tpu.vector_store %arg17[%c0_229, %c0_230], %138 {strides = array<i32>} : memref<2x512xf32, #tpu.memory_space<vmem>>, vector<2x32xf32>,
    %140 = vector.extract_strided_slice %133 {offsets = [0, 0, 2, 0], sizes = [2, 1, 1, 32], strides = [1, 1, 1, 1]} : vector<2x4x8x32xf32> to vector<2x1x1x32xf32>
    %141 = vector.shape_cast %140 : vector<2x1x1x32xf32> to vector<2x32xf32>
    %142 = vector.extract_strided_slice %133 {offsets = [0, 0, 3, 0], sizes = [2, 1, 1, 32], strides = [1, 1, 1, 1]} : vector<2x4x8x32xf32> to vector<2x1x1x32xf32>
    %143 = vector.shape_cast %142 : vector<2x1x1x32xf32> to vector<2x32xf32>
    %144 = arith.maximumf %141, %143 : vector<2x32xf32>
    %c0_231 = arith.constant 0 : index
    %c32_232 = arith.constant 32 : index
    %145 = vector.load %arg17[%c0_231, %c32_232] : memref<2x512xf32, #tpu.memory_space<vmem>>, vector<2x32xf32>
    tpu.vector_store %arg17[%c0_231, %c32_232], %144 {strides = array<i32>} : memref<2x512xf32, #tpu.memory_space<vmem>>, vector<2x32xf32>,
    %146 = vector.extract_strided_slice %133 {offsets = [0, 0, 4, 0], sizes = [2, 1, 1, 32], strides = [1, 1, 1, 1]} : vector<2x4x8x32xf32> to vector<2x1x1x32xf32>
    %147 = vector.shape_cast %146 : vector<2x1x1x32xf32> to vector<2x32xf32>
    %148 = vector.extract_strided_slice %133 {offsets = [0, 0, 5, 0], sizes = [2, 1, 1, 32], strides = [1, 1, 1, 1]} : vector<2x4x8x32xf32> to vector<2x1x1x32xf32>
    %149 = vector.shape_cast %148 : vector<2x1x1x32xf32> to vector<2x32xf32>
    %150 = arith.maximumf %147, %149 : vector<2x32xf32>
    %c0_233 = arith.constant 0 : index
    %c64_234 = arith.constant 64 : index
    %151 = vector.load %arg17[%c0_233, %c64_234] : memref<2x512xf32, #tpu.memory_space<vmem>>, vector<2x32xf32>
    tpu.vector_store %arg17[%c0_233, %c64_234], %150 {strides = array<i32>} : memref<2x512xf32, #tpu.memory_space<vmem>>, vector<2x32xf32>,
    %152 = vector.extract_strided_slice %133 {offsets = [0, 0, 6, 0], sizes = [2, 1, 1, 32], strides = [1, 1, 1, 1]} : vector<2x4x8x32xf32> to vector<2x1x1x32xf32>
    %153 = vector.shape_cast %152 : vector<2x1x1x32xf32> to vector<2x32xf32>
    %154 = vector.extract_strided_slice %133 {offsets = [0, 0, 7, 0], sizes = [2, 1, 1, 32], strides = [1, 1, 1, 1]} : vector<2x4x8x32xf32> to vector<2x1x1x32xf32>
    %155 = vector.shape_cast %154 : vector<2x1x1x32xf32> to vector<2x32xf32>
    %156 = arith.maximumf %153, %155 : vector<2x32xf32>
    %c0_235 = arith.constant 0 : index
    %c96_236 = arith.constant 96 : index
    %157 = vector.load %arg17[%c0_235, %c96_236] : memref<2x512xf32, #tpu.memory_space<vmem>>, vector<2x32xf32>
    tpu.vector_store %arg17[%c0_235, %c96_236], %156 {strides = array<i32>} : memref<2x512xf32, #tpu.memory_space<vmem>>, vector<2x32xf32>,
    %158 = vector.extract_strided_slice %133 {offsets = [0, 1, 0, 0], sizes = [2, 1, 1, 32], strides = [1, 1, 1, 1]} : vector<2x4x8x32xf32> to vector<2x1x1x32xf32>
    %159 = vector.shape_cast %158 : vector<2x1x1x32xf32> to vector<2x32xf32>
    %160 = vector.extract_strided_slice %133 {offsets = [0, 1, 1, 0], sizes = [2, 1, 1, 32], strides = [1, 1, 1, 1]} : vector<2x4x8x32xf32> to vector<2x1x1x32xf32>
    %161 = vector.shape_cast %160 : vector<2x1x1x32xf32> to vector<2x32xf32>
    %162 = arith.maximumf %159, %161 : vector<2x32xf32>
    %c0_237 = arith.constant 0 : index
    %c128_238 = arith.constant 128 : index
    %163 = vector.load %arg17[%c0_237, %c128_238] : memref<2x512xf32, #tpu.memory_space<vmem>>, vector<2x32xf32>
    tpu.vector_store %arg17[%c0_237, %c128_238], %162 {strides = array<i32>} : memref<2x512xf32, #tpu.memory_space<vmem>>, vector<2x32xf32>,
    %164 = vector.extract_strided_slice %133 {offsets = [0, 1, 2, 0], sizes = [2, 1, 1, 32], strides = [1, 1, 1, 1]} : vector<2x4x8x32xf32> to vector<2x1x1x32xf32>
    %165 = vector.shape_cast %164 : vector<2x1x1x32xf32> to vector<2x32xf32>
    %166 = vector.extract_strided_slice %133 {offsets = [0, 1, 3, 0], sizes = [2, 1, 1, 32], strides = [1, 1, 1, 1]} : vector<2x4x8x32xf32> to vector<2x1x1x32xf32>
    %167 = vector.shape_cast %166 : vector<2x1x1x32xf32> to vector<2x32xf32>
    %168 = arith.maximumf %165, %167 : vector<2x32xf32>
    %c0_239 = arith.constant 0 : index
    %c160_240 = arith.constant 160 : index
    %169 = vector.load %arg17[%c0_239, %c160_240] : memref<2x512xf32, #tpu.memory_space<vmem>>, vector<2x32xf32>
    tpu.vector_store %arg17[%c0_239, %c160_240], %168 {strides = array<i32>} : memref<2x512xf32, #tpu.memory_space<vmem>>, vector<2x32xf32>,
    %170 = vector.extract_strided_slice %133 {offsets = [0, 1, 4, 0], sizes = [2, 1, 1, 32], strides = [1, 1, 1, 1]} : vector<2x4x8x32xf32> to vector<2x1x1x32xf32>
    %171 = vector.shape_cast %170 : vector<2x1x1x32xf32> to vector<2x32xf32>
    %172 = vector.extract_strided_slice %133 {offsets = [0, 1, 5, 0], sizes = [2, 1, 1, 32], strides = [1, 1, 1, 1]} : vector<2x4x8x32xf32> to vector<2x1x1x32xf32>
    %173 = vector.shape_cast %172 : vector<2x1x1x32xf32> to vector<2x32xf32>
    %174 = arith.maximumf %171, %173 : vector<2x32xf32>
    %c0_241 = arith.constant 0 : index
    %c192_242 = arith.constant 192 : index
    %175 = vector.load %arg17[%c0_241, %c192_242] : memref<2x512xf32, #tpu.memory_space<vmem>>, vector<2x32xf32>
    tpu.vector_store %arg17[%c0_241, %c192_242], %174 {strides = array<i32>} : memref<2x512xf32, #tpu.memory_space<vmem>>, vector<2x32xf32>,
    %176 = vector.extract_strided_slice %133 {offsets = [0, 1, 6, 0], sizes = [2, 1, 1, 32], strides = [1, 1, 1, 1]} : vector<2x4x8x32xf32> to vector<2x1x1x32xf32>
    %177 = vector.shape_cast %176 : vector<2x1x1x32xf32> to vector<2x32xf32>
    %178 = vector.extract_strided_slice %133 {offsets = [0, 1, 7, 0], sizes = [2, 1, 1, 32], strides = [1, 1, 1, 1]} : vector<2x4x8x32xf32> to vector<2x1x1x32xf32>
    %179 = vector.shape_cast %178 : vector<2x1x1x32xf32> to vector<2x32xf32>
    %180 = arith.maximumf %177, %179 : vector<2x32xf32>
    %c0_243 = arith.constant 0 : index
    %c224_244 = arith.constant 224 : index
    %181 = vector.load %arg17[%c0_243, %c224_244] : memref<2x512xf32, #tpu.memory_space<vmem>>, vector<2x32xf32>
    tpu.vector_store %arg17[%c0_243, %c224_244], %180 {strides = array<i32>} : memref<2x512xf32, #tpu.memory_space<vmem>>, vector<2x32xf32>,
    %182 = vector.extract_strided_slice %133 {offsets = [0, 2, 0, 0], sizes = [2, 1, 1, 32], strides = [1, 1, 1, 1]} : vector<2x4x8x32xf32> to vector<2x1x1x32xf32>
    %183 = vector.shape_cast %182 : vector<2x1x1x32xf32> to vector<2x32xf32>
    %184 = vector.extract_strided_slice %133 {offsets = [0, 2, 1, 0], sizes = [2, 1, 1, 32], strides = [1, 1, 1, 1]} : vector<2x4x8x32xf32> to vector<2x1x1x32xf32>
    %185 = vector.shape_cast %184 : vector<2x1x1x32xf32> to vector<2x32xf32>
    %186 = arith.maximumf %183, %185 : vector<2x32xf32>
    %c0_245 = arith.constant 0 : index
    %c256_246 = arith.constant 256 : index
    %187 = vector.load %arg17[%c0_245, %c256_246] : memref<2x512xf32, #tpu.memory_space<vmem>>, vector<2x32xf32>
    tpu.vector_store %arg17[%c0_245, %c256_246], %186 {strides = array<i32>} : memref<2x512xf32, #tpu.memory_space<vmem>>, vector<2x32xf32>,
    %188 = vector.extract_strided_slice %133 {offsets = [0, 2, 2, 0], sizes = [2, 1, 1, 32], strides = [1, 1, 1, 1]} : vector<2x4x8x32xf32> to vector<2x1x1x32xf32>
    %189 = vector.shape_cast %188 : vector<2x1x1x32xf32> to vector<2x32xf32>
    %190 = vector.extract_strided_slice %133 {offsets = [0, 2, 3, 0], sizes = [2, 1, 1, 32], strides = [1, 1, 1, 1]} : vector<2x4x8x32xf32> to vector<2x1x1x32xf32>
    %191 = vector.shape_cast %190 : vector<2x1x1x32xf32> to vector<2x32xf32>
    %192 = arith.maximumf %189, %191 : vector<2x32xf32>
    %c0_247 = arith.constant 0 : index
    %c288_248 = arith.constant 288 : index
    %193 = vector.load %arg17[%c0_247, %c288_248] : memref<2x512xf32, #tpu.memory_space<vmem>>, vector<2x32xf32>
    tpu.vector_store %arg17[%c0_247, %c288_248], %192 {strides = array<i32>} : memref<2x512xf32, #tpu.memory_space<vmem>>, vector<2x32xf32>,
    %194 = vector.extract_strided_slice %133 {offsets = [0, 2, 4, 0], sizes = [2, 1, 1, 32], strides = [1, 1, 1, 1]} : vector<2x4x8x32xf32> to vector<2x1x1x32xf32>
    %195 = vector.shape_cast %194 : vector<2x1x1x32xf32> to vector<2x32xf32>
    %196 = vector.extract_strided_slice %133 {offsets = [0, 2, 5, 0], sizes = [2, 1, 1, 32], strides = [1, 1, 1, 1]} : vector<2x4x8x32xf32> to vector<2x1x1x32xf32>
    %197 = vector.shape_cast %196 : vector<2x1x1x32xf32> to vector<2x32xf32>
    %198 = arith.maximumf %195, %197 : vector<2x32xf32>
    %c0_249 = arith.constant 0 : index
    %c320_250 = arith.constant 320 : index
    %199 = vector.load %arg17[%c0_249, %c320_250] : memref<2x512xf32, #tpu.memory_space<vmem>>, vector<2x32xf32>
    tpu.vector_store %arg17[%c0_249, %c320_250], %198 {strides = array<i32>} : memref<2x512xf32, #tpu.memory_space<vmem>>, vector<2x32xf32>,
    %200 = vector.extract_strided_slice %133 {offsets = [0, 2, 6, 0], sizes = [2, 1, 1, 32], strides = [1, 1, 1, 1]} : vector<2x4x8x32xf32> to vector<2x1x1x32xf32>
    %201 = vector.shape_cast %200 : vector<2x1x1x32xf32> to vector<2x32xf32>
    %202 = vector.extract_strided_slice %133 {offsets = [0, 2, 7, 0], sizes = [2, 1, 1, 32], strides = [1, 1, 1, 1]} : vector<2x4x8x32xf32> to vector<2x1x1x32xf32>
    %203 = vector.shape_cast %202 : vector<2x1x1x32xf32> to vector<2x32xf32>
    %204 = arith.maximumf %201, %203 : vector<2x32xf32>
    %c0_251 = arith.constant 0 : index
    %c352_252 = arith.constant 352 : index
    %205 = vector.load %arg17[%c0_251, %c352_252] : memref<2x512xf32, #tpu.memory_space<vmem>>, vector<2x32xf32>
    tpu.vector_store %arg17[%c0_251, %c352_252], %204 {strides = array<i32>} : memref<2x512xf32, #tpu.memory_space<vmem>>, vector<2x32xf32>,
    %206 = vector.extract_strided_slice %133 {offsets = [0, 3, 0, 0], sizes = [2, 1, 1, 32], strides = [1, 1, 1, 1]} : vector<2x4x8x32xf32> to vector<2x1x1x32xf32>
    %207 = vector.shape_cast %206 : vector<2x1x1x32xf32> to vector<2x32xf32>
    %208 = vector.extract_strided_slice %133 {offsets = [0, 3, 1, 0], sizes = [2, 1, 1, 32], strides = [1, 1, 1, 1]} : vector<2x4x8x32xf32> to vector<2x1x1x32xf32>
    %209 = vector.shape_cast %208 : vector<2x1x1x32xf32> to vector<2x32xf32>
    %210 = arith.maximumf %207, %209 : vector<2x32xf32>
    %c0_253 = arith.constant 0 : index
    %c384_254 = arith.constant 384 : index
    %211 = vector.load %arg17[%c0_253, %c384_254] : memref<2x512xf32, #tpu.memory_space<vmem>>, vector<2x32xf32>
    tpu.vector_store %arg17[%c0_253, %c384_254], %210 {strides = array<i32>} : memref<2x512xf32, #tpu.memory_space<vmem>>, vector<2x32xf32>,
    %212 = vector.extract_strided_slice %133 {offsets = [0, 3, 2, 0], sizes = [2, 1, 1, 32], strides = [1, 1, 1, 1]} : vector<2x4x8x32xf32> to vector<2x1x1x32xf32>
    %213 = vector.shape_cast %212 : vector<2x1x1x32xf32> to vector<2x32xf32>
    %214 = vector.extract_strided_slice %133 {offsets = [0, 3, 3, 0], sizes = [2, 1, 1, 32], strides = [1, 1, 1, 1]} : vector<2x4x8x32xf32> to vector<2x1x1x32xf32>
    %215 = vector.shape_cast %214 : vector<2x1x1x32xf32> to vector<2x32xf32>
    %216 = arith.maximumf %213, %215 : vector<2x32xf32>
    %c0_255 = arith.constant 0 : index
    %c416 = arith.constant 416 : index
    %217 = vector.load %arg17[%c0_255, %c416] : memref<2x512xf32, #tpu.memory_space<vmem>>, vector<2x32xf32>
    tpu.vector_store %arg17[%c0_255, %c416], %216 {strides = array<i32>} : memref<2x512xf32, #tpu.memory_space<vmem>>, vector<2x32xf32>,
    %218 = vector.extract_strided_slice %133 {offsets = [0, 3, 4, 0], sizes = [2, 1, 1, 32], strides = [1, 1, 1, 1]} : vector<2x4x8x32xf32> to vector<2x1x1x32xf32>
    %219 = vector.shape_cast %218 : vector<2x1x1x32xf32> to vector<2x32xf32>
    %220 = vector.extract_strided_slice %133 {offsets = [0, 3, 5, 0], sizes = [2, 1, 1, 32], strides = [1, 1, 1, 1]} : vector<2x4x8x32xf32> to vector<2x1x1x32xf32>
    %221 = vector.shape_cast %220 : vector<2x1x1x32xf32> to vector<2x32xf32>
    %222 = arith.maximumf %219, %221 : vector<2x32xf32>
    %c0_256 = arith.constant 0 : index
    %c448 = arith.constant 448 : index
    %223 = vector.load %arg17[%c0_256, %c448] : memref<2x512xf32, #tpu.memory_space<vmem>>, vector<2x32xf32>
    tpu.vector_store %arg17[%c0_256, %c448], %222 {strides = array<i32>} : memref<2x512xf32, #tpu.memory_space<vmem>>, vector<2x32xf32>,
    %224 = vector.extract_strided_slice %133 {offsets = [0, 3, 6, 0], sizes = [2, 1, 1, 32], strides = [1, 1, 1, 1]} : vector<2x4x8x32xf32> to vector<2x1x1x32xf32>
    %225 = vector.shape_cast %224 : vector<2x1x1x32xf32> to vector<2x32xf32>
    %226 = vector.extract_strided_slice %133 {offsets = [0, 3, 7, 0], sizes = [2, 1, 1, 32], strides = [1, 1, 1, 1]} : vector<2x4x8x32xf32> to vector<2x1x1x32xf32>
    %227 = vector.shape_cast %226 : vector<2x1x1x32xf32> to vector<2x32xf32>
    %228 = arith.maximumf %225, %227 : vector<2x32xf32>
    %c0_257 = arith.constant 0 : index
    %c480 = arith.constant 480 : index
    %229 = vector.load %arg17[%c0_257, %c480] : memref<2x512xf32, #tpu.memory_space<vmem>>, vector<2x32xf32>
    tpu.vector_store %arg17[%c0_257, %c480], %228 {strides = array<i32>} : memref<2x512xf32, #tpu.memory_space<vmem>>, vector<2x32xf32>,
    %c0_258 = arith.constant 0 : index
    %c0_259 = arith.constant 0 : index
    %230 = vector.load %arg17[%c0_258, %c0_259] : memref<2x512xf32, #tpu.memory_space<vmem>>, vector<2x512xf32>
    %231 = arith.truncf %230 : vector<2x512xf32> to vector<2x512xbf16>
    %c0_260 = arith.constant 0 : index
    %c0_261 = arith.constant 0 : index
    %232 = vector.load %arg6[%c0_260, %c0_261] : memref<512x256xbf16, #tpu.memory_space<vmem>>, vector<512x256xbf16>
    %cst_262 = arith.constant dense<0.000000e+00> : vector<2x256xf32>
    %233 = tpu.matmul %231, %232, %cst_262 {dimension_numbers = #tpu.dot_dimension_numbers<[1], [0], [0], [1], [0, 0, 1, 1], [], []>} : vector<2x512xbf16>, vector<512x256xbf16>, vector<2x256xf32> -> vector<2x256xf32>
    %c0_263 = arith.constant 0 : index
    %c0_264 = arith.constant 0 : index
    %234 = vector.load %arg7[%c0_263, %c0_264] : memref<1x256xf32, #tpu.memory_space<vmem>>, vector<1x256xf32>
    %235 = vector.broadcast %234 : vector<1x256xf32> to vector<2x256xf32>
    %236 = arith.addf %233, %235 : vector<2x256xf32>
    %cst_265 = arith.constant 0.000000e+00 : f32
    %237 = vector.broadcast %cst_265 : f32 to vector<2x256xf32>
    %238 = arith.maximumf %236, %237 : vector<2x256xf32>
    %239 = arith.truncf %238 : vector<2x256xf32> to vector<2x256xbf16>
    %c0_266 = arith.constant 0 : index
    %c0_267 = arith.constant 0 : index
    %240 = vector.load %arg8[%c0_266, %c0_267] : memref<256x128xbf16, #tpu.memory_space<vmem>>, vector<256x128xbf16>
    %cst_268 = arith.constant dense<0.000000e+00> : vector<2x128xf32>
    %241 = tpu.matmul %239, %240, %cst_268 {dimension_numbers = #tpu.dot_dimension_numbers<[1], [0], [0], [1], [0, 0, 1, 1], [], []>} : vector<2x256xbf16>, vector<256x128xbf16>, vector<2x128xf32> -> vector<2x128xf32>
    %c0_269 = arith.constant 0 : index
    %c0_270 = arith.constant 0 : index
    %242 = vector.load %arg9[%c0_269, %c0_270] : memref<1x128xf32, #tpu.memory_space<vmem>>, vector<1x128xf32>
    %243 = vector.broadcast %242 : vector<1x128xf32> to vector<2x128xf32>
    %244 = arith.addf %241, %243 : vector<2x128xf32>
    %cst_271 = arith.constant 0.000000e+00 : f32
    %245 = vector.broadcast %cst_271 : f32 to vector<2x128xf32>
    %246 = arith.maximumf %244, %245 : vector<2x128xf32>
    %247 = arith.truncf %246 : vector<2x128xf32> to vector<2x128xbf16>
    %c0_272 = arith.constant 0 : index
    %c0_273 = arith.constant 0 : index
    %248 = vector.load %arg10[%c0_272, %c0_273] : memref<128x128xbf16, #tpu.memory_space<vmem>>, vector<128x128xbf16>
    %cst_274 = arith.constant dense<0.000000e+00> : vector<2x128xf32>
    %249 = tpu.matmul %247, %248, %cst_274 {dimension_numbers = #tpu.dot_dimension_numbers<[1], [0], [0], [1], [0, 0, 1, 1], [], []>} : vector<2x128xbf16>, vector<128x128xbf16>, vector<2x128xf32> -> vector<2x128xf32>
    %c0_275 = arith.constant 0 : index
    %c0_276 = arith.constant 0 : index
    %250 = vector.load %arg11[%c0_275, %c0_276] : memref<1x128xf32, #tpu.memory_space<vmem>>, vector<1x128xf32>
    %251 = vector.broadcast %250 : vector<1x128xf32> to vector<2x128xf32>
    %252 = arith.addf %249, %251 : vector<2x128xf32>
    %cst_277 = arith.constant 0.000000e+00 : f32
    %253 = vector.broadcast %cst_277 : f32 to vector<2x128xf32>
    %254 = arith.maximumf %252, %253 : vector<2x128xf32>
    %255 = arith.truncf %254 : vector<2x128xf32> to vector<2x128xbf16>
    %c0_278 = arith.constant 0 : index
    %c0_279 = arith.constant 0 : index
    %256 = vector.load %arg12[%c0_278, %c0_279] : memref<128x128xbf16, #tpu.memory_space<vmem>>, vector<128x128xbf16>
    %cst_280 = arith.constant dense<0.000000e+00> : vector<2x128xf32>
    %257 = tpu.matmul %255, %256, %cst_280 {dimension_numbers = #tpu.dot_dimension_numbers<[1], [0], [0], [1], [0, 0, 1, 1], [], []>} : vector<2x128xbf16>, vector<128x128xbf16>, vector<2x128xf32> -> vector<2x128xf32>
    %c0_281 = arith.constant 0 : index
    %c0_282 = arith.constant 0 : index
    %258 = vector.load %arg13[%c0_281, %c0_282] : memref<1x128xf32, #tpu.memory_space<vmem>>, vector<1x128xf32>
    %259 = vector.broadcast %258 : vector<1x128xf32> to vector<2x128xf32>
    %260 = arith.addf %257, %259 : vector<2x128xf32>
    %c0_283 = arith.constant 0 : index
    %c0_284 = arith.constant 0 : index
    %261 = vector.load %arg14[%c0_283, %c0_284] : memref<2x128xf32, #tpu.memory_space<vmem>>, vector<2x128xf32>
    tpu.vector_store %arg14[%c0_283, %c0_284], %260 {strides = array<i32>} : memref<2x128xf32, #tpu.memory_space<vmem>>, vector<2x128xf32>,
    return
  }
  func.func @transform_0(%arg0: i32) -> (i32, i32) {
    %c0_i32 = arith.constant 0 : i32
    %c0_i32_0 = arith.constant 0 : i32
    return %arg0, %c0_i32 : i32, i32
  }
  func.func @transform_1(%arg0: i32) -> (i32, i32) {
    %c0_i32 = arith.constant 0 : i32
    %c0_i32_0 = arith.constant 0 : i32
    %c0_i32_1 = arith.constant 0 : i32
    return %c0_i32, %c0_i32_0 : i32, i32
  }
  func.func @transform_2(%arg0: i32) -> (i32, i32) {
    %c0_i32 = arith.constant 0 : i32
    %c0_i32_0 = arith.constant 0 : i32
    %c0_i32_1 = arith.constant 0 : i32
    return %c0_i32, %c0_i32_0 : i32, i32
  }
  func.func @transform_3(%arg0: i32) -> (i32, i32) {
    %c0_i32 = arith.constant 0 : i32
    %c0_i32_0 = arith.constant 0 : i32
    %c0_i32_1 = arith.constant 0 : i32
    return %c0_i32, %c0_i32_0 : i32, i32
  }
  func.func @transform_4(%arg0: i32) -> (i32, i32) {
    %c0_i32 = arith.constant 0 : i32
    %c0_i32_0 = arith.constant 0 : i32
    %c0_i32_1 = arith.constant 0 : i32
    return %c0_i32, %c0_i32_0 : i32, i32
  }
  func.func @transform_5(%arg0: i32) -> (i32, i32) {
    %c0_i32 = arith.constant 0 : i32
    %c0_i32_0 = arith.constant 0 : i32
    %c0_i32_1 = arith.constant 0 : i32
    return %c0_i32, %c0_i32_0 : i32, i32
  }
  func.func @transform_6(%arg0: i32) -> (i32, i32) {
    %c0_i32 = arith.constant 0 : i32
    %c0_i32_0 = arith.constant 0 : i32
    %c0_i32_1 = arith.constant 0 : i32
    return %c0_i32, %c0_i32_0 : i32, i32
  }
  func.func @transform_7(%arg0: i32) -> (i32, i32) {
    %c0_i32 = arith.constant 0 : i32
    %c0_i32_0 = arith.constant 0 : i32
    %c0_i32_1 = arith.constant 0 : i32
    return %c0_i32, %c0_i32_0 : i32, i32
  }
  func.func @transform_8(%arg0: i32) -> (i32, i32) {
    %c0_i32 = arith.constant 0 : i32
    %c0_i32_0 = arith.constant 0 : i32
    %c0_i32_1 = arith.constant 0 : i32
    return %c0_i32, %c0_i32_0 : i32, i32
  }
  func.func @transform_9(%arg0: i32) -> (i32, i32) {
    %c0_i32 = arith.constant 0 : i32
    %c0_i32_0 = arith.constant 0 : i32
    %c0_i32_1 = arith.constant 0 : i32
    return %c0_i32, %c0_i32_0 : i32, i32
  }
  func.func @transform_10(%arg0: i32) -> (i32, i32) {
    %c0_i32 = arith.constant 0 : i32
    %c0_i32_0 = arith.constant 0 : i32
    %c0_i32_1 = arith.constant 0 : i32
    return %c0_i32, %c0_i32_0 : i32, i32
  }
  func.func @transform_11(%arg0: i32) -> (i32, i32) {
    %c0_i32 = arith.constant 0 : i32
    %c0_i32_0 = arith.constant 0 : i32
    %c0_i32_1 = arith.constant 0 : i32
    return %c0_i32, %c0_i32_0 : i32, i32
  }
  func.func @transform_12(%arg0: i32) -> (i32, i32) {
    %c0_i32 = arith.constant 0 : i32
    %c0_i32_0 = arith.constant 0 : i32
    %c0_i32_1 = arith.constant 0 : i32
    return %c0_i32, %c0_i32_0 : i32, i32
  }
  func.func @transform_13(%arg0: i32) -> (i32, i32) {
    %c0_i32 = arith.constant 0 : i32
    %c0_i32_0 = arith.constant 0 : i32
    return %arg0, %c0_i32 : i32, i32
  }
}

</mosaic_0001>

<llo_original>
// kernel: lenet_forward.1
$region0: #{lenet_forward.1}
  #allocation0 [shape = 'u32[]', space=smem, size = 0x4, offset = 0x4, fixed_abs, tag = 'smem constant byte address 0x4 - core index']
  #allocation1 [shape = 'u32[144,128]{1,0:T(1,128)}', space=vmem, size = 0x12000, scoped, tag = 'internal scratch']
  #allocation2 [shape = 'f32[2,12,12,16]{3,2,1,0:T(8,128)}', space=vmem, size = 0x30000, scoped, tag = 'scratch operand']
  #allocation3 [shape = 'f32[2,8,8,400]{3,2,1,0:T(8,128)}', space=vmem, size = 0x40000, scoped, tag = 'scratch operand']
  #allocation4 [shape = 'f32[2,512]{1,0:T(2,128)}', space=vmem, size = 0x1000, scoped, tag = 'scratch operand']
  %s0 = inlined_call_operand.vmem [shape: bf16[1152,32], index: 0, kind: input, shape index: {}]
  %s1 = inlined_call_operand.vmem [shape: bf16[32,16], index: 1, kind: input, shape index: {}]
  %s2 = inlined_call_operand.vmem [shape: f32[1,16], index: 2, kind: input, shape index: {}]
  %s3 = inlined_call_operand.vmem [shape: bf16[400,32], index: 3, kind: input, shape index: {}]
  %s4 = inlined_call_operand.vmem [shape: f32[1,32], index: 4, kind: input, shape index: {}]
  %s5 = inlined_call_operand.vmem [shape: bf16[512,256], index: 5, kind: input, shape index: {}]
  %s6 = inlined_call_operand.vmem [shape: f32[1,256], index: 6, kind: input, shape index: {}]
  %s7 = inlined_call_operand.vmem [shape: bf16[256,128], index: 7, kind: input, shape index: {}]
  %s8 = inlined_call_operand.vmem [shape: f32[1,128], index: 8, kind: input, shape index: {}]
  %s9 = inlined_call_operand.vmem [shape: bf16[128,128], index: 9, kind: input, shape index: {}]
  %s10 = inlined_call_operand.vmem [shape: f32[1,128], index: 10, kind: input, shape index: {}]
  %s11 = inlined_call_operand.vmem [shape: bf16[128,128], index: 11, kind: input, shape index: {}]
  %s12 = inlined_call_operand.vmem [shape: f32[1,128], index: 12, kind: input, shape index: {}]
  %s13 = inlined_call_operand.hbm [shape: f32[2,128], index: 13, kind: output, shape index: {}]
  %s14 = sld [smem:[#allocation0]]
  $region62: #{lenet_forward.1} parent=0
    _
  %s16 = ssub.s32 1, %s14
  %s17 = scalar_select 0, %s16, %s14
  $region1: #{lenet_forward.1} parent=0
    #allocation5 [shape = 'u8[1024]{0}', space=vmem, size = 0x400, scoped, tag = 'output window, operand 0, single buffered']
    #allocation6 [shape = 's32[1]{0}', space=sflag, size = 0x4, scoped, tag = 'scoped memory for lenet_forward.1']
    %18 = vsyncpa [#allocation6], 0
    // Predicated region
    $region2: #{lenet_forward.1} parent=1 // pred_check
      _
    $region3: #{lenet_forward.1} parent=1 // pred_check_branch
      %20 = sbr.rel (0) target = $region5
    $region4: #{lenet_forward.1} parent=1 // pred_region
      _
    $region5: #{lenet_forward.1} parent=1 // pred_fallthru
      _
    // Predicated region
    $region6: #{lenet_forward.1} parent=1 // pred_check
      _
    $region7: #{lenet_forward.1} parent=1 // pred_check_branch
      %22 = sbr.rel (0) target = $region9
    $region8: #{lenet_forward.1} parent=1 // pred_region
      _
    $region9: #{lenet_forward.1} parent=1 // pred_fallthru
      _
    // Predicated region
    $region10: #{lenet_forward.1} parent=1 // pred_check
      _
    $region11: #{lenet_forward.1} parent=1 // pred_check_branch
      %24 = sbr.rel (0) target = $region13
    $region12: #{lenet_forward.1} parent=1 // pred_region
      _
    $region13: #{lenet_forward.1} parent=1 // pred_fallthru
      _
    // Predicated region
    $region14: #{lenet_forward.1} parent=1 // pred_check
      _
    $region15: #{lenet_forward.1} parent=1 // pred_check_branch
      %26 = sbr.rel (0) target = $region17
    $region16: #{lenet_forward.1} parent=1 // pred_region
      _
    $region17: #{lenet_forward.1} parent=1 // pred_fallthru
      _
    // Predicated region
    $region18: #{lenet_forward.1} parent=1 // pred_check
      _
    $region19: #{lenet_forward.1} parent=1 // pred_check_branch
      %28 = sbr.rel (0) target = $region21
    $region20: #{lenet_forward.1} parent=1 // pred_region
      _
    $region21: #{lenet_forward.1} parent=1 // pred_fallthru
      _
    // Predicated region
    $region22: #{lenet_forward.1} parent=1 // pred_check
      _
    $region23: #{lenet_forward.1} parent=1 // pred_check_branch
      %30 = sbr.rel (0) target = $region25
    $region24: #{lenet_forward.1} parent=1 // pred_region
      _
    $region25: #{lenet_forward.1} parent=1 // pred_fallthru
      _
    // Predicated region
    $region26: #{lenet_forward.1} parent=1 // pred_check
      _
    $region27: #{lenet_forward.1} parent=1 // pred_check_branch
      %32 = sbr.rel (0) target = $region29
    $region28: #{lenet_forward.1} parent=1 // pred_region
      _
    $region29: #{lenet_forward.1} parent=1 // pred_fallthru
      _
    // Predicated region
    $region30: #{lenet_forward.1} parent=1 // pred_check
      _
    $region31: #{lenet_forward.1} parent=1 // pred_check_branch
      %34 = sbr.rel (0) target = $region33
    $region32: #{lenet_forward.1} parent=1 // pred_region
      _
    $region33: #{lenet_forward.1} parent=1 // pred_fallthru
      _
    // Predicated region
    $region34: #{lenet_forward.1} parent=1 // pred_check
      _
    $region35: #{lenet_forward.1} parent=1 // pred_check_branch
      %36 = sbr.rel (0) target = $region37
    $region36: #{lenet_forward.1} parent=1 // pred_region
      _
    $region37: #{lenet_forward.1} parent=1 // pred_fallthru
      _
    // Predicated region
    $region38: #{lenet_forward.1} parent=1 // pred_check
      _
    $region39: #{lenet_forward.1} parent=1 // pred_check_branch
      %38 = sbr.rel (0) target = $region41
    $region40: #{lenet_forward.1} parent=1 // pred_region
      _
    $region41: #{lenet_forward.1} parent=1 // pred_fallthru
      _
    // Predicated region
    $region42: #{lenet_forward.1} parent=1 // pred_check
      _
    $region43: #{lenet_forward.1} parent=1 // pred_check_branch
      %40 = sbr.rel (0) target = $region45
    $region44: #{lenet_forward.1} parent=1 // pred_region
      _
    $region45: #{lenet_forward.1} parent=1 // pred_fallthru
      _
    // Predicated region
    $region46: #{lenet_forward.1} parent=1 // pred_check
      _
    $region47: #{lenet_forward.1} parent=1 // pred_check_branch
      %42 = sbr.rel (0) target = $region49
    $region48: #{lenet_forward.1} parent=1 // pred_region
      _
    $region49: #{lenet_forward.1} parent=1 // pred_fallthru
      _
    // Predicated region
    $region50: #{lenet_forward.1} parent=1 // pred_check
      _
    $region51: #{lenet_forward.1} parent=1 // pred_check_branch
      %44 = sbr.rel (0) target = $region53
    $region52: #{lenet_forward.1} parent=1 // pred_region
      _
    $region53: #{lenet_forward.1} parent=1 // pred_fallthru
      _
    %v46 = vld [vmem:[%s0] sm:$0xf]
    %v47 = vld [vmem:[%s0 + $0x4] sm:$0xf]
    %v48 = vld [vmem:[%s0 + $0x8] sm:$0xf]
    %v49 = vld [vmem:[%s0 + $0xc] sm:$0xf]
    %v50 = vld [vmem:[%s0 + $0x10] sm:$0xf]
    %v51 = vld [vmem:[%s0 + $0x14] sm:$0xf]
    %v52 = vld [vmem:[%s0 + $0x18] sm:$0xf]
    %v53 = vld [vmem:[%s0 + $0x1c] sm:$0xf]
    %v54 = vld [vmem:[%s0 + $0x20] sm:$0xf]
    %v55 = vld [vmem:[%s0 + $0x24] sm:$0xf]
    %v56 = vld [vmem:[%s0 + $0x28] sm:$0xf]
    %v57 = vld [vmem:[%s0 + $0x2c] sm:$0xf]
    %v58 = vld [vmem:[%s0 + $0x30] sm:$0xf]
    %v59 = vld [vmem:[%s0 + $0x34] sm:$0xf]
    %v60 = vld [vmem:[%s0 + $0x38] sm:$0xf]
    %v61 = vld [vmem:[%s0 + $0x3c] sm:$0xf]
    %v62 = vld [vmem:[%s0 + $0x40] sm:$0xf]
    %v63 = vld [vmem:[%s0 + $0x44] sm:$0xf]
    %v64 = vld [vmem:[%s0 + $0x48] sm:$0xf]
    %v65 = vld [vmem:[%s0 + $0x4c] sm:$0xf]
    %v66 = vld [vmem:[%s0 + $0x50] sm:$0xf]
    %v67 = vld [vmem:[%s0 + $0x54] sm:$0xf]
    %v68 = vld [vmem:[%s0 + $0x58] sm:$0xf]
    %v69 = vld [vmem:[%s0 + $0x5c] sm:$0xf]
    %v70 = vld [vmem:[%s0 + $0x60] sm:$0xf]
    %v71 = vld [vmem:[%s0 + $0x64] sm:$0xf]
    %v72 = vld [vmem:[%s0 + $0x68] sm:$0xf]
    %v73 = vld [vmem:[%s0 + $0x6c] sm:$0xf]
    %v74 = vld [vmem:[%s0 + $0x70] sm:$0xf]
    %v75 = vld [vmem:[%s0 + $0x74] sm:$0xf]
    %v76 = vld [vmem:[%s0 + $0x78] sm:$0xf]
    %v77 = vld [vmem:[%s0 + $0x7c] sm:$0xf]
    %v78 = vld [vmem:[%s0 + $0x80] sm:$0xf]
    %v79 = vld [vmem:[%s0 + $0x84] sm:$0xf]
    %v80 = vld [vmem:[%s0 + $0x88] sm:$0xf]
    %v81 = vld [vmem:[%s0 + $0x8c] sm:$0xf]
    %v82 = vld [vmem:[%s0 + $0x90] sm:$0xf]
    %v83 = vld [vmem:[%s0 + $0x94] sm:$0xf]
    %v84 = vld [vmem:[%s0 + $0x98] sm:$0xf]
    %v85 = vld [vmem:[%s0 + $0x9c] sm:$0xf]
    %v86 = vld [vmem:[%s0 + $0xa0] sm:$0xf]
    %v87 = vld [vmem:[%s0 + $0xa4] sm:$0xf]
    %v88 = vld [vmem:[%s0 + $0xa8] sm:$0xf]
    %v89 = vld [vmem:[%s0 + $0xac] sm:$0xf]
    %v90 = vld [vmem:[%s0 + $0xb0] sm:$0xf]
    %v91 = vld [vmem:[%s0 + $0xb4] sm:$0xf]
    %v92 = vld [vmem:[%s0 + $0xb8] sm:$0xf]
    %v93 = vld [vmem:[%s0 + $0xbc] sm:$0xf]
    %v94 = vld [vmem:[%s0 + $0xc0] sm:$0xf]
    %v95 = vld [vmem:[%s0 + $0xc4] sm:$0xf]
    %v96 = vld [vmem:[%s0 + $0xc8] sm:$0xf]
    %v97 = vld [vmem:[%s0 + $0xcc] sm:$0xf]
    %v98 = vld [vmem:[%s0 + $0xd0] sm:$0xf]
    %v99 = vld [vmem:[%s0 + $0xd4] sm:$0xf]
    %v100 = vld [vmem:[%s0 + $0xd8] sm:$0xf]
    %v101 = vld [vmem:[%s0 + $0xdc] sm:$0xf]
    %v102 = vld [vmem:[%s0 + $0xe0] sm:$0xf]
    %v103 = vld [vmem:[%s0 + $0xe4] sm:$0xf]
    %v104 = vld [vmem:[%s0 + $0xe8] sm:$0xf]
    %v105 = vld [vmem:[%s0 + $0xec] sm:$0xf]
    %v106 = vld [vmem:[%s0 + $0xf0] sm:$0xf]
    %v107 = vld [vmem:[%s0 + $0xf4] sm:$0xf]
    %v108 = vld [vmem:[%s0 + $0xf8] sm:$0xf]
    %v109 = vld [vmem:[%s0 + $0xfc] sm:$0xf]
    %v110 = vld [vmem:[%s0 + $0x100] sm:$0xf]
    %v111 = vld [vmem:[%s0 + $0x104] sm:$0xf]
    %v112 = vld [vmem:[%s0 + $0x108] sm:$0xf]
    %v113 = vld [vmem:[%s0 + $0x10c] sm:$0xf]
    %v114 = vld [vmem:[%s0 + $0x110] sm:$0xf]
    %v115 = vld [vmem:[%s0 + $0x114] sm:$0xf]
    %v116 = vld [vmem:[%s0 + $0x118] sm:$0xf]
    %v117 = vld [vmem:[%s0 + $0x11c] sm:$0xf]
    %v118 = vld [vmem:[%s0 + $0x120] sm:$0xf]
    %v119 = vld [vmem:[%s0 + $0x124] sm:$0xf]
    %v120 = vld [vmem:[%s0 + $0x128] sm:$0xf]
    %v121 = vld [vmem:[%s0 + $0x12c] sm:$0xf]
    %v122 = vld [vmem:[%s0 + $0x130] sm:$0xf]
    %v123 = vld [vmem:[%s0 + $0x134] sm:$0xf]
    %v124 = vld [vmem:[%s0 + $0x138] sm:$0xf]
    %v125 = vld [vmem:[%s0 + $0x13c] sm:$0xf]
    %v126 = vld [vmem:[%s0 + $0x140] sm:$0xf]
    %v127 = vld [vmem:[%s0 + $0x144] sm:$0xf]
    %v128 = vld [vmem:[%s0 + $0x148] sm:$0xf]
    %v129 = vld [vmem:[%s0 + $0x14c] sm:$0xf]
    %v130 = vld [vmem:[%s0 + $0x150] sm:$0xf]
    %v131 = vld [vmem:[%s0 + $0x154] sm:$0xf]
    %v132 = vld [vmem:[%s0 + $0x158] sm:$0xf]
    %v133 = vld [vmem:[%s0 + $0x15c] sm:$0xf]
    %v134 = vld [vmem:[%s0 + $0x160] sm:$0xf]
    %v135 = vld [vmem:[%s0 + $0x164] sm:$0xf]
    %v136 = vld [vmem:[%s0 + $0x168] sm:$0xf]
    %v137 = vld [vmem:[%s0 + $0x16c] sm:$0xf]
    %v138 = vld [vmem:[%s0 + $0x170] sm:$0xf]
    %v139 = vld [vmem:[%s0 + $0x174] sm:$0xf]
    %v140 = vld [vmem:[%s0 + $0x178] sm:$0xf]
    %v141 = vld [vmem:[%s0 + $0x17c] sm:$0xf]
    %v142 = vld [vmem:[%s0 + $0x180] sm:$0xf]
    %v143 = vld [vmem:[%s0 + $0x184] sm:$0xf]
    %v144 = vld [vmem:[%s0 + $0x188] sm:$0xf]
    %v145 = vld [vmem:[%s0 + $0x18c] sm:$0xf]
    %v146 = vld [vmem:[%s0 + $0x190] sm:$0xf]
    %v147 = vld [vmem:[%s0 + $0x194] sm:$0xf]
    %v148 = vld [vmem:[%s0 + $0x198] sm:$0xf]
    %v149 = vld [vmem:[%s0 + $0x19c] sm:$0xf]
    %v150 = vld [vmem:[%s0 + $0x1a0] sm:$0xf]
    %v151 = vld [vmem:[%s0 + $0x1a4] sm:$0xf]
    %v152 = vld [vmem:[%s0 + $0x1a8] sm:$0xf]
    %v153 = vld [vmem:[%s0 + $0x1ac] sm:$0xf]
    %v154 = vld [vmem:[%s0 + $0x1b0] sm:$0xf]
    %v155 = vld [vmem:[%s0 + $0x1b4] sm:$0xf]
    %v156 = vld [vmem:[%s0 + $0x1b8] sm:$0xf]
    %v157 = vld [vmem:[%s0 + $0x1bc] sm:$0xf]
    %v158 = vld [vmem:[%s0 + $0x1c0] sm:$0xf]
    %v159 = vld [vmem:[%s0 + $0x1c4] sm:$0xf]
    %v160 = vld [vmem:[%s0 + $0x1c8] sm:$0xf]
    %v161 = vld [vmem:[%s0 + $0x1cc] sm:$0xf]
    %v162 = vld [vmem:[%s0 + $0x1d0] sm:$0xf]
    %v163 = vld [vmem:[%s0 + $0x1d4] sm:$0xf]
    %v164 = vld [vmem:[%s0 + $0x1d8] sm:$0xf]
    %v165 = vld [vmem:[%s0 + $0x1dc] sm:$0xf]
    %v166 = vld [vmem:[%s0 + $0x1e0] sm:$0xf]
    %v167 = vld [vmem:[%s0 + $0x1e4] sm:$0xf]
    %v168 = vld [vmem:[%s0 + $0x1e8] sm:$0xf]
    %v169 = vld [vmem:[%s0 + $0x1ec] sm:$0xf]
    %v170 = vld [vmem:[%s0 + $0x1f0] sm:$0xf]
    %v171 = vld [vmem:[%s0 + $0x1f4] sm:$0xf]
    %v172 = vld [vmem:[%s0 + $0x1f8] sm:$0xf]
    %v173 = vld [vmem:[%s0 + $0x1fc] sm:$0xf]
    %v174 = vld [vmem:[%s0 + $0x200] sm:$0xf]
    %v175 = vld [vmem:[%s0 + $0x204] sm:$0xf]
    %v176 = vld [vmem:[%s0 + $0x208] sm:$0xf]
    %v177 = vld [vmem:[%s0 + $0x20c] sm:$0xf]
    %v178 = vld [vmem:[%s0 + $0x210] sm:$0xf]
    %v179 = vld [vmem:[%s0 + $0x214] sm:$0xf]
    %v180 = vld [vmem:[%s0 + $0x218] sm:$0xf]
    %v181 = vld [vmem:[%s0 + $0x21c] sm:$0xf]
    %v182 = vld [vmem:[%s0 + $0x220] sm:$0xf]
    %v183 = vld [vmem:[%s0 + $0x224] sm:$0xf]
    %v184 = vld [vmem:[%s0 + $0x228] sm:$0xf]
    %v185 = vld [vmem:[%s0 + $0x22c] sm:$0xf]
    %v186 = vld [vmem:[%s0 + $0x230] sm:$0xf]
    %v187 = vld [vmem:[%s0 + $0x234] sm:$0xf]
    %v188 = vld [vmem:[%s0 + $0x238] sm:$0xf]
    %v189 = vld [vmem:[%s0 + $0x23c] sm:$0xf]
    %v190 = vld [vmem:[%s1] sm:$0xf]
    %v191 = vld [vmem:[%s1 + $0x4] sm:$0xf]
    %v192 = vld [vmem:[%s1 + $0x8] sm:$0xf]
    %v193 = vld [vmem:[%s1 + $0xc] sm:$0xf]
    %v194 = vld [vmem:[%s2] sm:$0x1]
    %v196 = vlaneseq
    %v197 = vshrl.u32 %v196, 7
    %v198 = vsub.s32 0, %v197
    %v199 = vrot.slane %v194, %v198
    %v345 = vunpack.c.l.b16 %v46
    %v346 = vunpack.c.l.b16 %v47
    %v347 = vunpack.c.l.b16 %v48
    %v348 = vunpack.c.l.b16 %v49
    %v349 = vunpack.c.l.b16 %v50
    %v350 = vunpack.c.l.b16 %v51
    %v351 = vunpack.c.l.b16 %v52
    %v352 = vunpack.c.l.b16 %v53
    %v353 = vunpack.c.l.b16 %v54
    %v354 = vunpack.c.l.b16 %v55
    %v355 = vunpack.c.l.b16 %v56
    %v356 = vunpack.c.l.b16 %v57
    %v357 = vunpack.c.l.b16 %v58
    %v358 = vunpack.c.l.b16 %v59
    %v359 = vunpack.c.l.b16 %v60
    %v360 = vunpack.c.l.b16 %v61
    %v361 = vunpack.c.l.b16 %v62
    %v362 = vunpack.c.l.b16 %v63
    %v363 = vunpack.c.l.b16 %v64
    %v364 = vunpack.c.l.b16 %v65
    %v365 = vunpack.c.l.b16 %v66
    %v366 = vunpack.c.l.b16 %v67
    %v367 = vunpack.c.l.b16 %v68
    %v368 = vunpack.c.l.b16 %v69
    %v369 = vunpack.c.l.b16 %v70
    %v370 = vunpack.c.l.b16 %v71
    %v371 = vunpack.c.l.b16 %v72
    %v372 = vunpack.c.l.b16 %v73
    %v373 = vunpack.c.l.b16 %v74
    %v374 = vunpack.c.l.b16 %v75
    %v375 = vunpack.c.l.b16 %v76
    %v376 = vunpack.c.l.b16 %v77
    %v377 = vunpack.c.l.b16 %v78
    %v378 = vunpack.c.l.b16 %v79
    %v379 = vunpack.c.l.b16 %v80
    %v380 = vunpack.c.l.b16 %v81
    %v381 = vunpack.c.l.b16 %v82
    %v382 = vunpack.c.l.b16 %v83
    %v383 = vunpack.c.l.b16 %v84
    %v384 = vunpack.c.l.b16 %v85
    %v385 = vunpack.c.l.b16 %v86
    %v386 = vunpack.c.l.b16 %v87
    %v387 = vunpack.c.l.b16 %v88
    %v388 = vunpack.c.l.b16 %v89
    %v389 = vunpack.c.l.b16 %v90
    %v390 = vunpack.c.l.b16 %v91
    %v391 = vunpack.c.l.b16 %v92
    %v392 = vunpack.c.l.b16 %v93
    %v393 = vunpack.c.l.b16 %v94
    %v394 = vunpack.c.l.b16 %v95
    %v395 = vunpack.c.l.b16 %v96
    %v396 = vunpack.c.l.b16 %v97
    %v397 = vunpack.c.l.b16 %v98
    %v398 = vunpack.c.l.b16 %v99
    %v399 = vunpack.c.l.b16 %v100
    %v400 = vunpack.c.l.b16 %v101
    %v401 = vunpack.c.l.b16 %v102
    %v402 = vunpack.c.l.b16 %v103
    %v403 = vunpack.c.l.b16 %v104
    %v404 = vunpack.c.l.b16 %v105
    %v405 = vunpack.c.l.b16 %v106
    %v406 = vunpack.c.l.b16 %v107
    %v407 = vunpack.c.l.b16 %v108
    %v408 = vunpack.c.l.b16 %v109
    %v409 = vunpack.c.l.b16 %v110
    %v410 = vunpack.c.l.b16 %v111
    %v411 = vunpack.c.l.b16 %v112
    %v412 = vunpack.c.l.b16 %v113
    %v413 = vunpack.c.l.b16 %v114
    %v414 = vunpack.c.l.b16 %v115
    %v415 = vunpack.c.l.b16 %v116
    %v416 = vunpack.c.l.b16 %v117
    %v417 = vunpack.c.l.b16 %v118
    %v418 = vunpack.c.l.b16 %v119
    %v419 = vunpack.c.l.b16 %v120
    %v420 = vunpack.c.l.b16 %v121
    %v421 = vunpack.c.l.b16 %v122
    %v422 = vunpack.c.l.b16 %v123
    %v423 = vunpack.c.l.b16 %v124
    %v424 = vunpack.c.l.b16 %v125
    %v425 = vunpack.c.l.b16 %v126
    %v426 = vunpack.c.l.b16 %v127
    %v427 = vunpack.c.l.b16 %v128
    %v428 = vunpack.c.l.b16 %v129
    %v429 = vunpack.c.l.b16 %v130
    %v430 = vunpack.c.l.b16 %v131
    %v431 = vunpack.c.l.b16 %v132
    %v432 = vunpack.c.l.b16 %v133
    %v433 = vunpack.c.l.b16 %v134
    %v434 = vunpack.c.l.b16 %v135
    %v435 = vunpack.c.l.b16 %v136
    %v436 = vunpack.c.l.b16 %v137
    %v437 = vunpack.c.l.b16 %v138
    %v438 = vunpack.c.l.b16 %v139
    %v439 = vunpack.c.l.b16 %v140
    %v440 = vunpack.c.l.b16 %v141
    %v441 = vunpack.c.l.b16 %v142
    %v442 = vunpack.c.l.b16 %v143
    %v443 = vunpack.c.l.b16 %v144
    %v444 = vunpack.c.l.b16 %v145
    %v445 = vunpack.c.l.b16 %v146
    %v446 = vunpack.c.l.b16 %v147
    %v447 = vunpack.c.l.b16 %v148
    %v448 = vunpack.c.l.b16 %v149
    %v449 = vunpack.c.l.b16 %v150
    %v450 = vunpack.c.l.b16 %v151
    %v451 = vunpack.c.l.b16 %v152
    %v452 = vunpack.c.l.b16 %v153
    %v453 = vunpack.c.l.b16 %v154
    %v454 = vunpack.c.l.b16 %v155
    %v455 = vunpack.c.l.b16 %v156
    %v456 = vunpack.c.l.b16 %v157
    %v457 = vunpack.c.l.b16 %v158
    %v458 = vunpack.c.l.b16 %v159
    %v459 = vunpack.c.l.b16 %v160
    %v460 = vunpack.c.l.b16 %v161
    %v461 = vunpack.c.l.b16 %v162
    %v462 = vunpack.c.l.b16 %v163
    %v463 = vunpack.c.l.b16 %v164
    %v464 = vunpack.c.l.b16 %v165
    %v465 = vunpack.c.l.b16 %v166
    %v466 = vunpack.c.l.b16 %v167
    %v467 = vunpack.c.l.b16 %v168
    %v468 = vunpack.c.l.b16 %v169
    %v469 = vunpack.c.l.b16 %v170
    %v470 = vunpack.c.l.b16 %v171
    %v471 = vunpack.c.l.b16 %v172
    %v472 = vunpack.c.l.b16 %v173
    %v473 = vunpack.c.l.b16 %v174
    %v474 = vunpack.c.l.b16 %v175
    %v475 = vunpack.c.l.b16 %v176
    %v476 = vunpack.c.l.b16 %v177
    %v477 = vunpack.c.l.b16 %v178
    %v478 = vunpack.c.l.b16 %v179
    %v479 = vunpack.c.l.b16 %v180
    %v480 = vunpack.c.l.b16 %v181
    %v481 = vunpack.c.l.b16 %v182
    %v482 = vunpack.c.l.b16 %v183
    %v483 = vunpack.c.l.b16 %v184
    %v484 = vunpack.c.l.b16 %v185
    %v485 = vunpack.c.l.b16 %v186
    %v486 = vunpack.c.l.b16 %v187
    %v487 = vunpack.c.l.b16 %v188
    %v488 = vunpack.c.l.b16 %v189
    %v489 = vpack.c.b16 %v346, %v345
    %v490 = vpack.c.b16 %v348, %v347
    %v491 = vpack.c.b16 %v350, %v349
    %v492 = vpack.c.b16 %v352, %v351
    %v493 = vpack.c.b16 %v354, %v353
    %v494 = vpack.c.b16 %v356, %v355
    %v495 = vpack.c.b16 %v358, %v357
    %v496 = vpack.c.b16 %v360, %v359
    %v497 = vpack.c.b16 %v362, %v361
    %v498 = vpack.c.b16 %v364, %v363
    %v499 = vpack.c.b16 %v366, %v365
    %v500 = vpack.c.b16 %v368, %v367
    %v501 = vpack.c.b16 %v370, %v369
    %v502 = vpack.c.b16 %v372, %v371
    %v503 = vpack.c.b16 %v374, %v373
    %v504 = vpack.c.b16 %v376, %v375
    %v505 = vpack.c.b16 %v378, %v377
    %v506 = vpack.c.b16 %v380, %v379
    %v507 = vpack.c.b16 %v382, %v381
    %v508 = vpack.c.b16 %v384, %v383
    %v509 = vpack.c.b16 %v386, %v385
    %v510 = vpack.c.b16 %v388, %v387
    %v511 = vpack.c.b16 %v390, %v389
    %v512 = vpack.c.b16 %v392, %v391
    %v513 = vpack.c.b16 %v394, %v393
    %v514 = vpack.c.b16 %v396, %v395
    %v515 = vpack.c.b16 %v398, %v397
    %v516 = vpack.c.b16 %v400, %v399
    %v517 = vpack.c.b16 %v402, %v401
    %v518 = vpack.c.b16 %v404, %v403
    %v519 = vpack.c.b16 %v406, %v405
    %v520 = vpack.c.b16 %v408, %v407
    %v521 = vpack.c.b16 %v410, %v409
    %v522 = vpack.c.b16 %v412, %v411
    %v523 = vpack.c.b16 %v414, %v413
    %v524 = vpack.c.b16 %v416, %v415
    %v525 = vpack.c.b16 %v418, %v417
    %v526 = vpack.c.b16 %v420, %v419
    %v527 = vpack.c.b16 %v422, %v421
    %v528 = vpack.c.b16 %v424, %v423
    %v529 = vpack.c.b16 %v426, %v425
    %v530 = vpack.c.b16 %v428, %v427
    %v531 = vpack.c.b16 %v430, %v429
    %v532 = vpack.c.b16 %v432, %v431
    %v533 = vpack.c.b16 %v434, %v433
    %v534 = vpack.c.b16 %v436, %v435
    %v535 = vpack.c.b16 %v438, %v437
    %v536 = vpack.c.b16 %v440, %v439
    %v537 = vpack.c.b16 %v442, %v441
    %v538 = vpack.c.b16 %v444, %v443
    %v539 = vpack.c.b16 %v446, %v445
    %v540 = vpack.c.b16 %v448, %v447
    %v541 = vpack.c.b16 %v450, %v449
    %v542 = vpack.c.b16 %v452, %v451
    %v543 = vpack.c.b16 %v454, %v453
    %v544 = vpack.c.b16 %v456, %v455
    %v545 = vpack.c.b16 %v458, %v457
    %v546 = vpack.c.b16 %v460, %v459
    %v547 = vpack.c.b16 %v462, %v461
    %v548 = vpack.c.b16 %v464, %v463
    %v549 = vpack.c.b16 %v466, %v465
    %v550 = vpack.c.b16 %v468, %v467
    %v551 = vpack.c.b16 %v470, %v469
    %v552 = vpack.c.b16 %v472, %v471
    %v553 = vpack.c.b16 %v474, %v473
    %v554 = vpack.c.b16 %v476, %v475
    %v555 = vpack.c.b16 %v478, %v477
    %v556 = vpack.c.b16 %v480, %v479
    %v557 = vpack.c.b16 %v482, %v481
    %v558 = vpack.c.b16 %v484, %v483
    %v559 = vpack.c.b16 %v486, %v485
    %v560 = vpack.c.b16 %v488, %v487
    %v565 = vunpack.c.l.b16 %v190
    %v566 = vunpack.c.l.b16 %v191
    %v567 = vunpack.c.l.b16 %v192
    %v568 = vunpack.c.l.b16 %v193
    %v569 = vpack.c.b16 %v566, %v565
    %v570 = vpack.c.b16 %v568, %v567
    %vm573 = vcmask 261120
    %v575 = vsel %vm573, %v489, 0
    %v578 = vsel %vm573, %v490, 0
    %v581 = vsel %vm573, %v491, 0
    %v584 = vsel %vm573, %v492, 0
    %v587 = vsel %vm573, %v493, 0
    %v590 = vsel %vm573, %v494, 0
    %v593 = vsel %vm573, %v495, 0
    %v596 = vsel %vm573, %v496, 0
    %v599 = vsel %vm573, %v497, 0
    %v602 = vsel %vm573, %v498, 0
    %v605 = vsel %vm573, %v499, 0
    %v608 = vsel %vm573, %v500, 0
    %v611 = vsel %vm573, %v501, 0
    %v614 = vsel %vm573, %v502, 0
    %v617 = vsel %vm573, %v503, 0
    %v620 = vsel %vm573, %v504, 0
    %v623 = vsel %vm573, %v505, 0
    %v626 = vsel %vm573, %v506, 0
    %v629 = vsel %vm573, %v507, 0
    %v632 = vsel %vm573, %v508, 0
    %v635 = vsel %vm573, %v509, 0
    %v638 = vsel %vm573, %v510, 0
    %v641 = vsel %vm573, %v511, 0
    %v644 = vsel %vm573, %v512, 0
    %v647 = vsel %vm573, %v513, 0
    %v650 = vsel %vm573, %v514, 0
    %v653 = vsel %vm573, %v515, 0
    %v656 = vsel %vm573, %v516, 0
    %v659 = vsel %vm573, %v517, 0
    %v662 = vsel %vm573, %v518, 0
    %v665 = vsel %vm573, %v519, 0
    %v668 = vsel %vm573, %v520, 0
    %v671 = vsel %vm573, %v521, 0
    %v674 = vsel %vm573, %v522, 0
    %v677 = vsel %vm573, %v523, 0
    %v680 = vsel %vm573, %v524, 0
    %v683 = vsel %vm573, %v525, 0
    %v686 = vsel %vm573, %v526, 0
    %v689 = vsel %vm573, %v527, 0
    %v692 = vsel %vm573, %v528, 0
    %v695 = vsel %vm573, %v529, 0
    %v698 = vsel %vm573, %v530, 0
    %v701 = vsel %vm573, %v531, 0
    %v704 = vsel %vm573, %v532, 0
    %v707 = vsel %vm573, %v533, 0
    %v710 = vsel %vm573, %v534, 0
    %v713 = vsel %vm573, %v535, 0
    %v716 = vsel %vm573, %v536, 0
    %v719 = vsel %vm573, %v537, 0
    %v722 = vsel %vm573, %v538, 0
    %v725 = vsel %vm573, %v539, 0
    %v728 = vsel %vm573, %v540, 0
    %v731 = vsel %vm573, %v541, 0
    %v734 = vsel %vm573, %v542, 0
    %v737 = vsel %vm573, %v543, 0
    %v740 = vsel %vm573, %v544, 0
    %v743 = vsel %vm573, %v545, 0
    %v746 = vsel %vm573, %v546, 0
    %v749 = vsel %vm573, %v547, 0
    %v752 = vsel %vm573, %v548, 0
    %v755 = vsel %vm573, %v549, 0
    %v758 = vsel %vm573, %v550, 0
    %v761 = vsel %vm573, %v551, 0
    %v764 = vsel %vm573, %v552, 0
    %v767 = vsel %vm573, %v553, 0
    %v770 = vsel %vm573, %v554, 0
    %v773 = vsel %vm573, %v555, 0
    %v776 = vsel %vm573, %v556, 0
    %v779 = vsel %vm573, %v557, 0
    %v782 = vsel %vm573, %v558, 0
    %v785 = vsel %vm573, %v559, 0
    %v788 = vsel %vm573, %v560, 0
    %790 = vmatprep.subr.bf16.mxu0 0
    %791 = vmatpush1.bf16.msra.mxu0 0
    %792 = vmatprep.subr.bf16.mxu0 0
    %793 = vmatpush1.bf16.msra.mxu0 0
    %794 = vmatprep.subr.bf16.mxu0 0
    %795 = vmatpush1.bf16.msra.mxu0 0
    %796 = vmatprep.subr.bf16.mxu0 0
    %797 = vmatpush1.bf16.msra.mxu0 0
    %798 = vmatprep.subr.bf16.mxu0 0
    %799 = vmatpush1.bf16.msra.mxu0 0
    %800 = vmatprep.subr.bf16.mxu0 0
    %801 = vmatpush1.bf16.msra.mxu0 0
    %802 = vmatprep.subr.bf16.mxu0 0
    %803 = vmatpush1.bf16.msra.mxu0 %v570
    %804 = vmatprep.subr.bf16.mxu0 0
    %805 = vmatpush1.bf16.msra.mxu0 %v569
    %806 = vmatprep.subr.bf16.mxu0 0
    %807 = vmatpush2.bf16.msra.mxu0 0
    %808 = vmatprep.subr.bf16.mxu0 0
    %809 = vmatpush2.bf16.msra.mxu0 0
    %810 = vmatprep.subr.bf16.mxu0 0
    %811 = vmatpush2.bf16.msra.mxu0 0
    %812 = vmatprep.subr.bf16.mxu0 0
    %813 = vmatpush2.bf16.msra.mxu0 0
    %814 = vmatprep.subr.bf16.mxu0 0
    %815 = vmatpush2.bf16.msra.mxu0 0
    %816 = vmatprep.subr.bf16.mxu0 0
    %817 = vmatpush2.bf16.msra.mxu0 0
    %818 = vmatprep.subr.bf16.mxu0 0
    %819 = vmatpush2.bf16.msra.mxu0 0
    %820 = vmatprep.subr.bf16.mxu0 0
    %821 = vmatpush2.bf16.msra.mxu0 0
    %822 = vmatprep.mubr.bf16.mxu0 0
    %823 = vmatmul.mubr.bf16.gmra.mxu0 %v575
    %v824 = vpop.f32.mrf.mxu0
    %v825 = vadd.f32 %v199, %v824
    %v826 = vpop.f32.mrf.mxu0
    %v827 = vpop.f32.mrf.mxu0
    %v828 = vadd.f32 %v199, %v827
    %v829 = vpop.f32.mrf.mxu0
    %830 = vmatprep.mubr.bf16.mxu0 0
    %831 = vmatmul.mubr.bf16.gmra.mxu0 %v578
    %v832 = vpop.f32.mrf.mxu0
    %v833 = vadd.f32 %v199, %v832
    %v834 = vpop.f32.mrf.mxu0
    %v835 = vpop.f32.mrf.mxu0
    %v836 = vadd.f32 %v199, %v835
    %v837 = vpop.f32.mrf.mxu0
    %838 = vmatprep.mubr.bf16.mxu0 0
    %839 = vmatmul.mubr.bf16.gmra.mxu0 %v581
    %v840 = vpop.f32.mrf.mxu0
    %v841 = vadd.f32 %v199, %v840
    %v842 = vpop.f32.mrf.mxu0
    %v843 = vpop.f32.mrf.mxu0
    %v844 = vadd.f32 %v199, %v843
    %v845 = vpop.f32.mrf.mxu0
    %846 = vmatprep.mubr.bf16.mxu0 0
    %847 = vmatmul.mubr.bf16.gmra.mxu0 %v584
    %v848 = vpop.f32.mrf.mxu0
    %v849 = vadd.f32 %v199, %v848
    %v850 = vpop.f32.mrf.mxu0
    %v851 = vpop.f32.mrf.mxu0
    %v852 = vadd.f32 %v199, %v851
    %v853 = vpop.f32.mrf.mxu0
    %854 = vmatprep.mubr.bf16.mxu0 0
    %855 = vmatmul.mubr.bf16.gmra.mxu0 %v587
    %v856 = vpop.f32.mrf.mxu0
    %v857 = vadd.f32 %v199, %v856
    %v858 = vpop.f32.mrf.mxu0
    %v859 = vpop.f32.mrf.mxu0
    %v860 = vadd.f32 %v199, %v859
    %v861 = vpop.f32.mrf.mxu0
    %862 = vmatprep.mubr.bf16.mxu0 0
    %863 = vmatmul.mubr.bf16.gmra.mxu0 %v590
    %v864 = vpop.f32.mrf.mxu0
    %v865 = vadd.f32 %v199, %v864
    %v866 = vpop.f32.mrf.mxu0
    %v867 = vpop.f32.mrf.mxu0
    %v868 = vadd.f32 %v199, %v867
    %v869 = vpop.f32.mrf.mxu0
    %870 = vmatprep.mubr.bf16.mxu0 0
    %871 = vmatmul.mubr.bf16.gmra.mxu0 %v593
    %v872 = vpop.f32.mrf.mxu0
    %v873 = vadd.f32 %v199, %v872
    %v874 = vpop.f32.mrf.mxu0
    %v875 = vpop.f32.mrf.mxu0
    %v876 = vadd.f32 %v199, %v875
    %v877 = vpop.f32.mrf.mxu0
    %878 = vmatprep.mubr.bf16.mxu0 0
    %879 = vmatmul.mubr.bf16.gmra.mxu0 %v596
    %v880 = vpop.f32.mrf.mxu0
    %v881 = vadd.f32 %v199, %v880
    %v882 = vpop.f32.mrf.mxu0
    %v883 = vpop.f32.mrf.mxu0
    %v884 = vadd.f32 %v199, %v883
    %v885 = vpop.f32.mrf.mxu0
    %886 = vmatprep.mubr.bf16.mxu0 0
    %887 = vmatmul.mubr.bf16.gmra.mxu0 %v599
    %v888 = vpop.f32.mrf.mxu0
    %v889 = vadd.f32 %v199, %v888
    %v890 = vpop.f32.mrf.mxu0
    %v891 = vpop.f32.mrf.mxu0
    %v892 = vadd.f32 %v199, %v891
    %v893 = vpop.f32.mrf.mxu0
    %894 = vmatprep.mubr.bf16.mxu0 0
    %895 = vmatmul.mubr.bf16.gmra.mxu0 %v602
    %v896 = vpop.f32.mrf.mxu0
    %v897 = vadd.f32 %v199, %v896
    %v898 = vpop.f32.mrf.mxu0
    %v899 = vpop.f32.mrf.mxu0
    %v900 = vadd.f32 %v199, %v899
    %v901 = vpop.f32.mrf.mxu0
    %902 = vmatprep.mubr.bf16.mxu0 0
    %903 = vmatmul.mubr.bf16.gmra.mxu0 %v605
    %v904 = vpop.f32.mrf.mxu0
    %v905 = vadd.f32 %v199, %v904
    %v906 = vpop.f32.mrf.mxu0
    %v907 = vpop.f32.mrf.mxu0
    %v908 = vadd.f32 %v199, %v907
    %v909 = vpop.f32.mrf.mxu0
    %910 = vmatprep.mubr.bf16.mxu0 0
    %911 = vmatmul.mubr.bf16.gmra.mxu0 %v608
    %v912 = vpop.f32.mrf.mxu0
    %v913 = vadd.f32 %v199, %v912
    %v914 = vpop.f32.mrf.mxu0
    %v915 = vpop.f32.mrf.mxu0
    %v916 = vadd.f32 %v199, %v915
    %v917 = vpop.f32.mrf.mxu0
    %918 = vmatprep.mubr.bf16.mxu0 0
    %919 = vmatmul.mubr.bf16.gmra.mxu0 %v611
    %v920 = vpop.f32.mrf.mxu0
    %v921 = vadd.f32 %v199, %v920
    %v922 = vpop.f32.mrf.mxu0
    %v923 = vpop.f32.mrf.mxu0
    %v924 = vadd.f32 %v199, %v923
    %v925 = vpop.f32.mrf.mxu0
    %926 = vmatprep.mubr.bf16.mxu0 0
    %927 = vmatmul.mubr.bf16.gmra.mxu0 %v614
    %v928 = vpop.f32.mrf.mxu0
    %v929 = vadd.f32 %v199, %v928
    %v930 = vpop.f32.mrf.mxu0
    %v931 = vpop.f32.mrf.mxu0
    %v932 = vadd.f32 %v199, %v931
    %v933 = vpop.f32.mrf.mxu0
    %934 = vmatprep.mubr.bf16.mxu0 0
    %935 = vmatmul.mubr.bf16.gmra.mxu0 %v617
    %v936 = vpop.f32.mrf.mxu0
    %v937 = vadd.f32 %v199, %v936
    %v938 = vpop.f32.mrf.mxu0
    %v939 = vpop.f32.mrf.mxu0
    %v940 = vadd.f32 %v199, %v939
    %v941 = vpop.f32.mrf.mxu0
    %942 = vmatprep.mubr.bf16.mxu0 0
    %943 = vmatmul.mubr.bf16.gmra.mxu0 %v620
    %v944 = vpop.f32.mrf.mxu0
    %v945 = vadd.f32 %v199, %v944
    %v946 = vpop.f32.mrf.mxu0
    %v947 = vpop.f32.mrf.mxu0
    %v948 = vadd.f32 %v199, %v947
    %v949 = vpop.f32.mrf.mxu0
    %950 = vmatprep.mubr.bf16.mxu0 0
    %951 = vmatmul.mubr.bf16.gmra.mxu0 %v623
    %v952 = vpop.f32.mrf.mxu0
    %v953 = vadd.f32 %v199, %v952
    %v954 = vpop.f32.mrf.mxu0
    %v955 = vpop.f32.mrf.mxu0
    %v956 = vadd.f32 %v199, %v955
    %v957 = vpop.f32.mrf.mxu0
    %958 = vmatprep.mubr.bf16.mxu0 0
    %959 = vmatmul.mubr.bf16.gmra.mxu0 %v626
    %v960 = vpop.f32.mrf.mxu0
    %v961 = vadd.f32 %v199, %v960
    %v962 = vpop.f32.mrf.mxu0
    %v963 = vpop.f32.mrf.mxu0
    %v964 = vadd.f32 %v199, %v963
    %v965 = vpop.f32.mrf.mxu0
    %966 = vmatprep.mubr.bf16.mxu0 0
    %967 = vmatmul.mubr.bf16.gmra.mxu0 %v629
    %v968 = vpop.f32.mrf.mxu0
    %v969 = vadd.f32 %v199, %v968
    %v970 = vpop.f32.mrf.mxu0
    %v971 = vpop.f32.mrf.mxu0
    %v972 = vadd.f32 %v199, %v971
    %v973 = vpop.f32.mrf.mxu0
    %974 = vmatprep.mubr.bf16.mxu0 0
    %975 = vmatmul.mubr.bf16.gmra.mxu0 %v632
    %v976 = vpop.f32.mrf.mxu0
    %v977 = vadd.f32 %v199, %v976
    %v978 = vpop.f32.mrf.mxu0
    %v979 = vpop.f32.mrf.mxu0
    %v980 = vadd.f32 %v199, %v979
    %v981 = vpop.f32.mrf.mxu0
    %982 = vmatprep.mubr.bf16.mxu0 0
    %983 = vmatmul.mubr.bf16.gmra.mxu0 %v635
    %v984 = vpop.f32.mrf.mxu0
    %v985 = vadd.f32 %v199, %v984
    %v986 = vpop.f32.mrf.mxu0
    %v987 = vpop.f32.mrf.mxu0
    %v988 = vadd.f32 %v199, %v987
    %v989 = vpop.f32.mrf.mxu0
    %990 = vmatprep.mubr.bf16.mxu0 0
    %991 = vmatmul.mubr.bf16.gmra.mxu0 %v638
    %v992 = vpop.f32.mrf.mxu0
    %v993 = vadd.f32 %v199, %v992
    %v994 = vpop.f32.mrf.mxu0
    %v995 = vpop.f32.mrf.mxu0
    %v996 = vadd.f32 %v199, %v995
    %v997 = vpop.f32.mrf.mxu0
    %998 = vmatprep.mubr.bf16.mxu0 0
    %999 = vmatmul.mubr.bf16.gmra.mxu0 %v641
    %v1000 = vpop.f32.mrf.mxu0
    %v1001 = vadd.f32 %v199, %v1000
    %v1002 = vpop.f32.mrf.mxu0
    %v1003 = vpop.f32.mrf.mxu0
    %v1004 = vadd.f32 %v199, %v1003
    %v1005 = vpop.f32.mrf.mxu0
    %1006 = vmatprep.mubr.bf16.mxu0 0
    %1007 = vmatmul.mubr.bf16.gmra.mxu0 %v644
    %v1008 = vpop.f32.mrf.mxu0
    %v1009 = vadd.f32 %v199, %v1008
    %v1010 = vpop.f32.mrf.mxu0
    %v1011 = vpop.f32.mrf.mxu0
    %v1012 = vadd.f32 %v199, %v1011
    %v1013 = vpop.f32.mrf.mxu0
    %1014 = vmatprep.mubr.bf16.mxu0 0
    %1015 = vmatmul.mubr.bf16.gmra.mxu0 %v647
    %v1016 = vpop.f32.mrf.mxu0
    %v1017 = vadd.f32 %v199, %v1016
    %v1018 = vpop.f32.mrf.mxu0
    %v1019 = vpop.f32.mrf.mxu0
    %v1020 = vadd.f32 %v199, %v1019
    %v1021 = vpop.f32.mrf.mxu0
    %1022 = vmatprep.mubr.bf16.mxu0 0
    %1023 = vmatmul.mubr.bf16.gmra.mxu0 %v650
    %v1024 = vpop.f32.mrf.mxu0
    %v1025 = vadd.f32 %v199, %v1024
    %v1026 = vpop.f32.mrf.mxu0
    %v1027 = vpop.f32.mrf.mxu0
    %v1028 = vadd.f32 %v199, %v1027
    %v1029 = vpop.f32.mrf.mxu0
    %1030 = vmatprep.mubr.bf16.mxu0 0
    %1031 = vmatmul.mubr.bf16.gmra.mxu0 %v653
    %v1032 = vpop.f32.mrf.mxu0
    %v1033 = vadd.f32 %v199, %v1032
    %v1034 = vpop.f32.mrf.mxu0
    %v1035 = vpop.f32.mrf.mxu0
    %v1036 = vadd.f32 %v199, %v1035
    %v1037 = vpop.f32.mrf.mxu0
    %1038 = vmatprep.mubr.bf16.mxu0 0
    %1039 = vmatmul.mubr.bf16.gmra.mxu0 %v656
    %v1040 = vpop.f32.mrf.mxu0
    %v1041 = vadd.f32 %v199, %v1040
    %v1042 = vpop.f32.mrf.mxu0
    %v1043 = vpop.f32.mrf.mxu0
    %v1044 = vadd.f32 %v199, %v1043
    %v1045 = vpop.f32.mrf.mxu0
    %1046 = vmatprep.mubr.bf16.mxu0 0
    %1047 = vmatmul.mubr.bf16.gmra.mxu0 %v659
    %v1048 = vpop.f32.mrf.mxu0
    %v1049 = vadd.f32 %v199, %v1048
    %v1050 = vpop.f32.mrf.mxu0
    %v1051 = vpop.f32.mrf.mxu0
    %v1052 = vadd.f32 %v199, %v1051
    %v1053 = vpop.f32.mrf.mxu0
    %1054 = vmatprep.mubr.bf16.mxu0 0
    %1055 = vmatmul.mubr.bf16.gmra.mxu0 %v662
    %v1056 = vpop.f32.mrf.mxu0
    %v1057 = vadd.f32 %v199, %v1056
    %v1058 = vpop.f32.mrf.mxu0
    %v1059 = vpop.f32.mrf.mxu0
    %v1060 = vadd.f32 %v199, %v1059
    %v1061 = vpop.f32.mrf.mxu0
    %1062 = vmatprep.mubr.bf16.mxu0 0
    %1063 = vmatmul.mubr.bf16.gmra.mxu0 %v665
    %v1064 = vpop.f32.mrf.mxu0
    %v1065 = vadd.f32 %v199, %v1064
    %v1066 = vpop.f32.mrf.mxu0
    %v1067 = vpop.f32.mrf.mxu0
    %v1068 = vadd.f32 %v199, %v1067
    %v1069 = vpop.f32.mrf.mxu0
    %1070 = vmatprep.mubr.bf16.mxu0 0
    %1071 = vmatmul.mubr.bf16.gmra.mxu0 %v668
    %v1072 = vpop.f32.mrf.mxu0
    %v1073 = vadd.f32 %v199, %v1072
    %v1074 = vpop.f32.mrf.mxu0
    %v1075 = vpop.f32.mrf.mxu0
    %v1076 = vadd.f32 %v199, %v1075
    %v1077 = vpop.f32.mrf.mxu0
    %1078 = vmatprep.mubr.bf16.mxu0 0
    %1079 = vmatmul.mubr.bf16.gmra.mxu0 %v671
    %v1080 = vpop.f32.mrf.mxu0
    %v1081 = vadd.f32 %v199, %v1080
    %v1082 = vpop.f32.mrf.mxu0
    %v1083 = vpop.f32.mrf.mxu0
    %v1084 = vadd.f32 %v199, %v1083
    %v1085 = vpop.f32.mrf.mxu0
    %1086 = vmatprep.mubr.bf16.mxu0 0
    %1087 = vmatmul.mubr.bf16.gmra.mxu0 %v674
    %v1088 = vpop.f32.mrf.mxu0
    %v1089 = vadd.f32 %v199, %v1088
    %v1090 = vpop.f32.mrf.mxu0
    %v1091 = vpop.f32.mrf.mxu0
    %v1092 = vadd.f32 %v199, %v1091
    %v1093 = vpop.f32.mrf.mxu0
    %1094 = vmatprep.mubr.bf16.mxu0 0
    %1095 = vmatmul.mubr.bf16.gmra.mxu0 %v677
    %v1096 = vpop.f32.mrf.mxu0
    %v1097 = vadd.f32 %v199, %v1096
    %v1098 = vpop.f32.mrf.mxu0
    %v1099 = vpop.f32.mrf.mxu0
    %v1100 = vadd.f32 %v199, %v1099
    %v1101 = vpop.f32.mrf.mxu0
    %1102 = vmatprep.mubr.bf16.mxu0 0
    %1103 = vmatmul.mubr.bf16.gmra.mxu0 %v680
    %v1104 = vpop.f32.mrf.mxu0
    %v1105 = vadd.f32 %v199, %v1104
    %v1106 = vpop.f32.mrf.mxu0
    %v1107 = vpop.f32.mrf.mxu0
    %v1108 = vadd.f32 %v199, %v1107
    %v1109 = vpop.f32.mrf.mxu0
    %1110 = vmatprep.mubr.bf16.mxu0 0
    %1111 = vmatmul.mubr.bf16.gmra.mxu0 %v683
    %v1112 = vpop.f32.mrf.mxu0
    %v1113 = vadd.f32 %v199, %v1112
    %v1114 = vpop.f32.mrf.mxu0
    %v1115 = vpop.f32.mrf.mxu0
    %v1116 = vadd.f32 %v199, %v1115
    %v1117 = vpop.f32.mrf.mxu0
    %1118 = vmatprep.mubr.bf16.mxu0 0
    %1119 = vmatmul.mubr.bf16.gmra.mxu0 %v686
    %v1120 = vpop.f32.mrf.mxu0
    %v1121 = vadd.f32 %v199, %v1120
    %v1122 = vpop.f32.mrf.mxu0
    %v1123 = vpop.f32.mrf.mxu0
    %v1124 = vadd.f32 %v199, %v1123
    %v1125 = vpop.f32.mrf.mxu0
    %1126 = vmatprep.mubr.bf16.mxu0 0
    %1127 = vmatmul.mubr.bf16.gmra.mxu0 %v689
    %v1128 = vpop.f32.mrf.mxu0
    %v1129 = vadd.f32 %v199, %v1128
    %v1130 = vpop.f32.mrf.mxu0
    %v1131 = vpop.f32.mrf.mxu0
    %v1132 = vadd.f32 %v199, %v1131
    %v1133 = vpop.f32.mrf.mxu0
    %1134 = vmatprep.mubr.bf16.mxu0 0
    %1135 = vmatmul.mubr.bf16.gmra.mxu0 %v692
    %v1136 = vpop.f32.mrf.mxu0
    %v1137 = vadd.f32 %v199, %v1136
    %v1138 = vpop.f32.mrf.mxu0
    %v1139 = vpop.f32.mrf.mxu0
    %v1140 = vadd.f32 %v199, %v1139
    %v1141 = vpop.f32.mrf.mxu0
    %1142 = vmatprep.mubr.bf16.mxu0 0
    %1143 = vmatmul.mubr.bf16.gmra.mxu0 %v695
    %v1144 = vpop.f32.mrf.mxu0
    %v1145 = vadd.f32 %v199, %v1144
    %v1146 = vpop.f32.mrf.mxu0
    %v1147 = vpop.f32.mrf.mxu0
    %v1148 = vadd.f32 %v199, %v1147
    %v1149 = vpop.f32.mrf.mxu0
    %1150 = vmatprep.mubr.bf16.mxu0 0
    %1151 = vmatmul.mubr.bf16.gmra.mxu0 %v698
    %v1152 = vpop.f32.mrf.mxu0
    %v1153 = vadd.f32 %v199, %v1152
    %v1154 = vpop.f32.mrf.mxu0
    %v1155 = vpop.f32.mrf.mxu0
    %v1156 = vadd.f32 %v199, %v1155
    %v1157 = vpop.f32.mrf.mxu0
    %1158 = vmatprep.mubr.bf16.mxu0 0
    %1159 = vmatmul.mubr.bf16.gmra.mxu0 %v701
    %v1160 = vpop.f32.mrf.mxu0
    %v1161 = vadd.f32 %v199, %v1160
    %v1162 = vpop.f32.mrf.mxu0
    %v1163 = vpop.f32.mrf.mxu0
    %v1164 = vadd.f32 %v199, %v1163
    %v1165 = vpop.f32.mrf.mxu0
    %1166 = vmatprep.mubr.bf16.mxu0 0
    %1167 = vmatmul.mubr.bf16.gmra.mxu0 %v704
    %v1168 = vpop.f32.mrf.mxu0
    %v1169 = vadd.f32 %v199, %v1168
    %v1170 = vpop.f32.mrf.mxu0
    %v1171 = vpop.f32.mrf.mxu0
    %v1172 = vadd.f32 %v199, %v1171
    %v1173 = vpop.f32.mrf.mxu0
    %1174 = vmatprep.mubr.bf16.mxu0 0
    %1175 = vmatmul.mubr.bf16.gmra.mxu0 %v707
    %v1176 = vpop.f32.mrf.mxu0
    %v1177 = vadd.f32 %v199, %v1176
    %v1178 = vpop.f32.mrf.mxu0
    %v1179 = vpop.f32.mrf.mxu0
    %v1180 = vadd.f32 %v199, %v1179
    %v1181 = vpop.f32.mrf.mxu0
    %1182 = vmatprep.mubr.bf16.mxu0 0
    %1183 = vmatmul.mubr.bf16.gmra.mxu0 %v710
    %v1184 = vpop.f32.mrf.mxu0
    %v1185 = vadd.f32 %v199, %v1184
    %v1186 = vpop.f32.mrf.mxu0
    %v1187 = vpop.f32.mrf.mxu0
    %v1188 = vadd.f32 %v199, %v1187
    %v1189 = vpop.f32.mrf.mxu0
    %1190 = vmatprep.mubr.bf16.mxu0 0
    %1191 = vmatmul.mubr.bf16.gmra.mxu0 %v713
    %v1192 = vpop.f32.mrf.mxu0
    %v1193 = vadd.f32 %v199, %v1192
    %v1194 = vpop.f32.mrf.mxu0
    %v1195 = vpop.f32.mrf.mxu0
    %v1196 = vadd.f32 %v199, %v1195
    %v1197 = vpop.f32.mrf.mxu0
    %1198 = vmatprep.mubr.bf16.mxu0 0
    %1199 = vmatmul.mubr.bf16.gmra.mxu0 %v716
    %v1200 = vpop.f32.mrf.mxu0
    %v1201 = vadd.f32 %v199, %v1200
    %v1202 = vpop.f32.mrf.mxu0
    %v1203 = vpop.f32.mrf.mxu0
    %v1204 = vadd.f32 %v199, %v1203
    %v1205 = vpop.f32.mrf.mxu0
    %1206 = vmatprep.mubr.bf16.mxu0 0
    %1207 = vmatmul.mubr.bf16.gmra.mxu0 %v719
    %v1208 = vpop.f32.mrf.mxu0
    %v1209 = vadd.f32 %v199, %v1208
    %v1210 = vpop.f32.mrf.mxu0
    %v1211 = vpop.f32.mrf.mxu0
    %v1212 = vadd.f32 %v199, %v1211
    %v1213 = vpop.f32.mrf.mxu0
    %1214 = vmatprep.mubr.bf16.mxu0 0
    %1215 = vmatmul.mubr.bf16.gmra.mxu0 %v722
    %v1216 = vpop.f32.mrf.mxu0
    %v1217 = vadd.f32 %v199, %v1216
    %v1218 = vpop.f32.mrf.mxu0
    %v1219 = vpop.f32.mrf.mxu0
    %v1220 = vadd.f32 %v199, %v1219
    %v1221 = vpop.f32.mrf.mxu0
    %1222 = vmatprep.mubr.bf16.mxu0 0
    %1223 = vmatmul.mubr.bf16.gmra.mxu0 %v725
    %v1224 = vpop.f32.mrf.mxu0
    %v1225 = vadd.f32 %v199, %v1224
    %v1226 = vpop.f32.mrf.mxu0
    %v1227 = vpop.f32.mrf.mxu0
    %v1228 = vadd.f32 %v199, %v1227
    %v1229 = vpop.f32.mrf.mxu0
    %1230 = vmatprep.mubr.bf16.mxu0 0
    %1231 = vmatmul.mubr.bf16.gmra.mxu0 %v728
    %v1232 = vpop.f32.mrf.mxu0
    %v1233 = vadd.f32 %v199, %v1232
    %v1234 = vpop.f32.mrf.mxu0
    %v1235 = vpop.f32.mrf.mxu0
    %v1236 = vadd.f32 %v199, %v1235
    %v1237 = vpop.f32.mrf.mxu0
    %1238 = vmatprep.mubr.bf16.mxu0 0
    %1239 = vmatmul.mubr.bf16.gmra.mxu0 %v731
    %v1240 = vpop.f32.mrf.mxu0
    %v1241 = vadd.f32 %v199, %v1240
    %v1242 = vpop.f32.mrf.mxu0
    %v1243 = vpop.f32.mrf.mxu0
    %v1244 = vadd.f32 %v199, %v1243
    %v1245 = vpop.f32.mrf.mxu0
    %1246 = vmatprep.mubr.bf16.mxu0 0
    %1247 = vmatmul.mubr.bf16.gmra.mxu0 %v734
    %v1248 = vpop.f32.mrf.mxu0
    %v1249 = vadd.f32 %v199, %v1248
    %v1250 = vpop.f32.mrf.mxu0
    %v1251 = vpop.f32.mrf.mxu0
    %v1252 = vadd.f32 %v199, %v1251
    %v1253 = vpop.f32.mrf.mxu0
    %1254 = vmatprep.mubr.bf16.mxu0 0
    %1255 = vmatmul.mubr.bf16.gmra.mxu0 %v737
    %v1256 = vpop.f32.mrf.mxu0
    %v1257 = vadd.f32 %v199, %v1256
    %v1258 = vpop.f32.mrf.mxu0
    %v1259 = vpop.f32.mrf.mxu0
    %v1260 = vadd.f32 %v199, %v1259
    %v1261 = vpop.f32.mrf.mxu0
    %1262 = vmatprep.mubr.bf16.mxu0 0
    %1263 = vmatmul.mubr.bf16.gmra.mxu0 %v740
    %v1264 = vpop.f32.mrf.mxu0
    %v1265 = vadd.f32 %v199, %v1264
    %v1266 = vpop.f32.mrf.mxu0
    %v1267 = vpop.f32.mrf.mxu0
    %v1268 = vadd.f32 %v199, %v1267
    %v1269 = vpop.f32.mrf.mxu0
    %1270 = vmatprep.mubr.bf16.mxu0 0
    %1271 = vmatmul.mubr.bf16.gmra.mxu0 %v743
    %v1272 = vpop.f32.mrf.mxu0
    %v1273 = vadd.f32 %v199, %v1272
    %v1274 = vpop.f32.mrf.mxu0
    %v1275 = vpop.f32.mrf.mxu0
    %v1276 = vadd.f32 %v199, %v1275
    %v1277 = vpop.f32.mrf.mxu0
    %1278 = vmatprep.mubr.bf16.mxu0 0
    %1279 = vmatmul.mubr.bf16.gmra.mxu0 %v746
    %v1280 = vpop.f32.mrf.mxu0
    %v1281 = vadd.f32 %v199, %v1280
    %v1282 = vpop.f32.mrf.mxu0
    %v1283 = vpop.f32.mrf.mxu0
    %v1284 = vadd.f32 %v199, %v1283
    %v1285 = vpop.f32.mrf.mxu0
    %1286 = vmatprep.mubr.bf16.mxu0 0
    %1287 = vmatmul.mubr.bf16.gmra.mxu0 %v749
    %v1288 = vpop.f32.mrf.mxu0
    %v1289 = vadd.f32 %v199, %v1288
    %v1290 = vpop.f32.mrf.mxu0
    %v1291 = vpop.f32.mrf.mxu0
    %v1292 = vadd.f32 %v199, %v1291
    %v1293 = vpop.f32.mrf.mxu0
    %1294 = vmatprep.mubr.bf16.mxu0 0
    %1295 = vmatmul.mubr.bf16.gmra.mxu0 %v752
    %v1296 = vpop.f32.mrf.mxu0
    %v1297 = vadd.f32 %v199, %v1296
    %v1298 = vpop.f32.mrf.mxu0
    %v1299 = vpop.f32.mrf.mxu0
    %v1300 = vadd.f32 %v199, %v1299
    %v1301 = vpop.f32.mrf.mxu0
    %1302 = vmatprep.mubr.bf16.mxu0 0
    %1303 = vmatmul.mubr.bf16.gmra.mxu0 %v755
    %v1304 = vpop.f32.mrf.mxu0
    %v1305 = vadd.f32 %v199, %v1304
    %v1306 = vpop.f32.mrf.mxu0
    %v1307 = vpop.f32.mrf.mxu0
    %v1308 = vadd.f32 %v199, %v1307
    %v1309 = vpop.f32.mrf.mxu0
    %1310 = vmatprep.mubr.bf16.mxu0 0
    %1311 = vmatmul.mubr.bf16.gmra.mxu0 %v758
    %v1312 = vpop.f32.mrf.mxu0
    %v1313 = vadd.f32 %v199, %v1312
    %v1314 = vpop.f32.mrf.mxu0
    %v1315 = vpop.f32.mrf.mxu0
    %v1316 = vadd.f32 %v199, %v1315
    %v1317 = vpop.f32.mrf.mxu0
    %1318 = vmatprep.mubr.bf16.mxu0 0
    %1319 = vmatmul.mubr.bf16.gmra.mxu0 %v761
    %v1320 = vpop.f32.mrf.mxu0
    %v1321 = vadd.f32 %v199, %v1320
    %v1322 = vpop.f32.mrf.mxu0
    %v1323 = vpop.f32.mrf.mxu0
    %v1324 = vadd.f32 %v199, %v1323
    %v1325 = vpop.f32.mrf.mxu0
    %1326 = vmatprep.mubr.bf16.mxu0 0
    %1327 = vmatmul.mubr.bf16.gmra.mxu0 %v764
    %v1328 = vpop.f32.mrf.mxu0
    %v1329 = vadd.f32 %v199, %v1328
    %v1330 = vpop.f32.mrf.mxu0
    %v1331 = vpop.f32.mrf.mxu0
    %v1332 = vadd.f32 %v199, %v1331
    %v1333 = vpop.f32.mrf.mxu0
    %1334 = vmatprep.mubr.bf16.mxu0 0
    %1335 = vmatmul.mubr.bf16.gmra.mxu0 %v767
    %v1336 = vpop.f32.mrf.mxu0
    %v1337 = vadd.f32 %v199, %v1336
    %v1338 = vpop.f32.mrf.mxu0
    %v1339 = vpop.f32.mrf.mxu0
    %v1340 = vadd.f32 %v199, %v1339
    %v1341 = vpop.f32.mrf.mxu0
    %1342 = vmatprep.mubr.bf16.mxu0 0
    %1343 = vmatmul.mubr.bf16.gmra.mxu0 %v770
    %v1344 = vpop.f32.mrf.mxu0
    %v1345 = vadd.f32 %v199, %v1344
    %v1346 = vpop.f32.mrf.mxu0
    %v1347 = vpop.f32.mrf.mxu0
    %v1348 = vadd.f32 %v199, %v1347
    %v1349 = vpop.f32.mrf.mxu0
    %1350 = vmatprep.mubr.bf16.mxu0 0
    %1351 = vmatmul.mubr.bf16.gmra.mxu0 %v773
    %v1352 = vpop.f32.mrf.mxu0
    %v1353 = vadd.f32 %v199, %v1352
    %v1354 = vpop.f32.mrf.mxu0
    %v1355 = vpop.f32.mrf.mxu0
    %v1356 = vadd.f32 %v199, %v1355
    %v1357 = vpop.f32.mrf.mxu0
    %1358 = vmatprep.mubr.bf16.mxu0 0
    %1359 = vmatmul.mubr.bf16.gmra.mxu0 %v776
    %v1360 = vpop.f32.mrf.mxu0
    %v1361 = vadd.f32 %v199, %v1360
    %v1362 = vpop.f32.mrf.mxu0
    %v1363 = vpop.f32.mrf.mxu0
    %v1364 = vadd.f32 %v199, %v1363
    %v1365 = vpop.f32.mrf.mxu0
    %1366 = vmatprep.mubr.bf16.mxu0 0
    %1367 = vmatmul.mubr.bf16.gmra.mxu0 %v779
    %v1368 = vpop.f32.mrf.mxu0
    %v1369 = vadd.f32 %v199, %v1368
    %v1370 = vpop.f32.mrf.mxu0
    %v1371 = vpop.f32.mrf.mxu0
    %v1372 = vadd.f32 %v199, %v1371
    %v1373 = vpop.f32.mrf.mxu0
    %1374 = vmatprep.mubr.bf16.mxu0 0
    %1375 = vmatmul.mubr.bf16.gmra.mxu0 %v782
    %v1376 = vpop.f32.mrf.mxu0
    %v1377 = vadd.f32 %v199, %v1376
    %v1378 = vpop.f32.mrf.mxu0
    %v1379 = vpop.f32.mrf.mxu0
    %v1380 = vadd.f32 %v199, %v1379
    %v1381 = vpop.f32.mrf.mxu0
    %1382 = vmatprep.mubr.bf16.mxu0 0
    %1383 = vmatmul.mubr.bf16.gmra.mxu0 %v785
    %v1384 = vpop.f32.mrf.mxu0
    %v1385 = vadd.f32 %v199, %v1384
    %v1386 = vpop.f32.mrf.mxu0
    %v1387 = vpop.f32.mrf.mxu0
    %v1388 = vadd.f32 %v199, %v1387
    %v1389 = vpop.f32.mrf.mxu0
    %1390 = vmatprep.mubr.bf16.mxu0 0
    %1391 = vmatmul.mubr.bf16.gmra.mxu0 %v788
    %v1392 = vpop.f32.mrf.mxu0
    %v1393 = vadd.f32 %v199, %v1392
    %v1394 = vpop.f32.mrf.mxu0
    %v1395 = vpop.f32.mrf.mxu0
    %v1396 = vadd.f32 %v199, %v1395
    %v1397 = vpop.f32.mrf.mxu0
    %1398 = vdwg.mxu0
    %v1399 = vmax.f32 %v825, 0.0
    %v1400 = vmax.f32 %v828, 0.0
    %v1401 = vmax.f32 %v833, 0.0
    %v1402 = vmax.f32 %v836, 0.0
    %v1403 = vmax.f32 %v841, 0.0
    %v1404 = vmax.f32 %v844, 0.0
    %v1405 = vmax.f32 %v849, 0.0
    %v1406 = vmax.f32 %v852, 0.0
    %v1407 = vmax.f32 %v857, 0.0
    %v1408 = vmax.f32 %v860, 0.0
    %v1409 = vmax.f32 %v865, 0.0
    %v1410 = vmax.f32 %v868, 0.0
    %v1411 = vmax.f32 %v873, 0.0
    %v1412 = vmax.f32 %v876, 0.0
    %v1413 = vmax.f32 %v881, 0.0
    %v1414 = vmax.f32 %v884, 0.0
    %v1415 = vmax.f32 %v889, 0.0
    %v1416 = vmax.f32 %v892, 0.0
    %v1417 = vmax.f32 %v897, 0.0
    %v1418 = vmax.f32 %v900, 0.0
    %v1419 = vmax.f32 %v905, 0.0
    %v1420 = vmax.f32 %v908, 0.0
    %v1421 = vmax.f32 %v913, 0.0
    %v1422 = vmax.f32 %v916, 0.0
    %v1423 = vmax.f32 %v921, 0.0
    %v1424 = vmax.f32 %v924, 0.0
    %v1425 = vmax.f32 %v929, 0.0
    %v1426 = vmax.f32 %v932, 0.0
    %v1427 = vmax.f32 %v937, 0.0
    %v1428 = vmax.f32 %v940, 0.0
    %v1429 = vmax.f32 %v945, 0.0
    %v1430 = vmax.f32 %v948, 0.0
    %v1431 = vmax.f32 %v953, 0.0
    %v1432 = vmax.f32 %v956, 0.0
    %v1433 = vmax.f32 %v961, 0.0
    %v1434 = vmax.f32 %v964, 0.0
    %v1435 = vmax.f32 %v969, 0.0
    %v1436 = vmax.f32 %v972, 0.0
    %v1437 = vmax.f32 %v977, 0.0
    %v1438 = vmax.f32 %v980, 0.0
    %v1439 = vmax.f32 %v985, 0.0
    %v1440 = vmax.f32 %v988, 0.0
    %v1441 = vmax.f32 %v993, 0.0
    %v1442 = vmax.f32 %v996, 0.0
    %v1443 = vmax.f32 %v1001, 0.0
    %v1444 = vmax.f32 %v1004, 0.0
    %v1445 = vmax.f32 %v1009, 0.0
    %v1446 = vmax.f32 %v1012, 0.0
    %v1447 = vmax.f32 %v1017, 0.0
    %v1448 = vmax.f32 %v1020, 0.0
    %v1449 = vmax.f32 %v1025, 0.0
    %v1450 = vmax.f32 %v1028, 0.0
    %v1451 = vmax.f32 %v1033, 0.0
    %v1452 = vmax.f32 %v1036, 0.0
    %v1453 = vmax.f32 %v1041, 0.0
    %v1454 = vmax.f32 %v1044, 0.0
    %v1455 = vmax.f32 %v1049, 0.0
    %v1456 = vmax.f32 %v1052, 0.0
    %v1457 = vmax.f32 %v1057, 0.0
    %v1458 = vmax.f32 %v1060, 0.0
    %v1459 = vmax.f32 %v1065, 0.0
    %v1460 = vmax.f32 %v1068, 0.0
    %v1461 = vmax.f32 %v1073, 0.0
    %v1462 = vmax.f32 %v1076, 0.0
    %v1463 = vmax.f32 %v1081, 0.0
    %v1464 = vmax.f32 %v1084, 0.0
    %v1465 = vmax.f32 %v1089, 0.0
    %v1466 = vmax.f32 %v1092, 0.0
    %v1467 = vmax.f32 %v1097, 0.0
    %v1468 = vmax.f32 %v1100, 0.0
    %v1469 = vmax.f32 %v1105, 0.0
    %v1470 = vmax.f32 %v1108, 0.0
    %v1471 = vmax.f32 %v1113, 0.0
    %v1472 = vmax.f32 %v1116, 0.0
    %v1473 = vmax.f32 %v1121, 0.0
    %v1474 = vmax.f32 %v1124, 0.0
    %v1475 = vmax.f32 %v1129, 0.0
    %v1476 = vmax.f32 %v1132, 0.0
    %v1477 = vmax.f32 %v1137, 0.0
    %v1478 = vmax.f32 %v1140, 0.0
    %v1479 = vmax.f32 %v1145, 0.0
    %v1480 = vmax.f32 %v1148, 0.0
    %v1481 = vmax.f32 %v1153, 0.0
    %v1482 = vmax.f32 %v1156, 0.0
    %v1483 = vmax.f32 %v1161, 0.0
    %v1484 = vmax.f32 %v1164, 0.0
    %v1485 = vmax.f32 %v1169, 0.0
    %v1486 = vmax.f32 %v1172, 0.0
    %v1487 = vmax.f32 %v1177, 0.0
    %v1488 = vmax.f32 %v1180, 0.0
    %v1489 = vmax.f32 %v1185, 0.0
    %v1490 = vmax.f32 %v1188, 0.0
    %v1491 = vmax.f32 %v1193, 0.0
    %v1492 = vmax.f32 %v1196, 0.0
    %v1493 = vmax.f32 %v1201, 0.0
    %v1494 = vmax.f32 %v1204, 0.0
    %v1495 = vmax.f32 %v1209, 0.0
    %v1496 = vmax.f32 %v1212, 0.0
    %v1497 = vmax.f32 %v1217, 0.0
    %v1498 = vmax.f32 %v1220, 0.0
    %v1499 = vmax.f32 %v1225, 0.0
    %v1500 = vmax.f32 %v1228, 0.0
    %v1501 = vmax.f32 %v1233, 0.0
    %v1502 = vmax.f32 %v1236, 0.0
    %v1503 = vmax.f32 %v1241, 0.0
    %v1504 = vmax.f32 %v1244, 0.0
    %v1505 = vmax.f32 %v1249, 0.0
    %v1506 = vmax.f32 %v1252, 0.0
    %v1507 = vmax.f32 %v1257, 0.0
    %v1508 = vmax.f32 %v1260, 0.0
    %v1509 = vmax.f32 %v1265, 0.0
    %v1510 = vmax.f32 %v1268, 0.0
    %v1511 = vmax.f32 %v1273, 0.0
    %v1512 = vmax.f32 %v1276, 0.0
    %v1513 = vmax.f32 %v1281, 0.0
    %v1514 = vmax.f32 %v1284, 0.0
    %v1515 = vmax.f32 %v1289, 0.0
    %v1516 = vmax.f32 %v1292, 0.0
    %v1517 = vmax.f32 %v1297, 0.0
    %v1518 = vmax.f32 %v1300, 0.0
    %v1519 = vmax.f32 %v1305, 0.0
    %v1520 = vmax.f32 %v1308, 0.0
    %v1521 = vmax.f32 %v1313, 0.0
    %v1522 = vmax.f32 %v1316, 0.0
    %v1523 = vmax.f32 %v1321, 0.0
    %v1524 = vmax.f32 %v1324, 0.0
    %v1525 = vmax.f32 %v1329, 0.0
    %v1526 = vmax.f32 %v1332, 0.0
    %v1527 = vmax.f32 %v1337, 0.0
    %v1528 = vmax.f32 %v1340, 0.0
    %v1529 = vmax.f32 %v1345, 0.0
    %v1530 = vmax.f32 %v1348, 0.0
    %v1531 = vmax.f32 %v1353, 0.0
    %v1532 = vmax.f32 %v1356, 0.0
    %v1533 = vmax.f32 %v1361, 0.0
    %v1534 = vmax.f32 %v1364, 0.0
    %v1535 = vmax.f32 %v1369, 0.0
    %v1536 = vmax.f32 %v1372, 0.0
    %v1537 = vmax.f32 %v1377, 0.0
    %v1538 = vmax.f32 %v1380, 0.0
    %v1539 = vmax.f32 %v1385, 0.0
    %v1540 = vmax.f32 %v1388, 0.0
    %v1541 = vmax.f32 %v1393, 0.0
    %v1542 = vmax.f32 %v1396, 0.0
    %v1543 = vmax.f32 %v1399, %v1417
    %v1544 = vmax.f32 %v1400, %v1418
    %v1545 = vmax.f32 %v1401, %v1419
    %v1546 = vmax.f32 %v1402, %v1420
    %v1547 = vmax.f32 %v1403, %v1421
    %v1548 = vmax.f32 %v1404, %v1422
    %v1549 = vmax.f32 %v1405, %v1423
    %v1550 = vmax.f32 %v1406, %v1424
    %v1551 = vmax.f32 %v1407, %v1425
    %v1552 = vmax.f32 %v1408, %v1426
    %v1553 = vmax.f32 %v1409, %v1427
    %v1554 = vmax.f32 %v1410, %v1428
    %v1555 = vmax.f32 %v1411, %v1429
    %v1556 = vmax.f32 %v1412, %v1430
    %v1557 = vmax.f32 %v1413, %v1431
    %v1558 = vmax.f32 %v1414, %v1432
    %v1559 = vmax.f32 %v1415, %v1433
    %v1560 = vmax.f32 %v1416, %v1434
    %v1561 = vmax.f32 %v1471, %v1489
    %v1562 = vmax.f32 %v1472, %v1490
    %v1563 = vmax.f32 %v1473, %v1491
    %v1564 = vmax.f32 %v1474, %v1492
    %v1565 = vmax.f32 %v1475, %v1493
    %v1566 = vmax.f32 %v1476, %v1494
    %v1567 = vmax.f32 %v1477, %v1495
    %v1568 = vmax.f32 %v1478, %v1496
    %v1569 = vmax.f32 %v1479, %v1497
    %v1570 = vmax.f32 %v1480, %v1498
    %v1571 = vmax.f32 %v1481, %v1499
    %v1572 = vmax.f32 %v1482, %v1500
    %v1573 = vmax.f32 %v1483, %v1501
    %v1574 = vmax.f32 %v1484, %v1502
    %v1575 = vmax.f32 %v1485, %v1503
    %v1576 = vmax.f32 %v1486, %v1504
    %v1577 = vmax.f32 %v1487, %v1505
    %v1578 = vmax.f32 %v1488, %v1506
    %v1579 = vmax.f32 %v1435, %v1453
    %v1580 = vmax.f32 %v1436, %v1454
    %v1581 = vmax.f32 %v1437, %v1455
    %v1582 = vmax.f32 %v1438, %v1456
    %v1583 = vmax.f32 %v1439, %v1457
    %v1584 = vmax.f32 %v1440, %v1458
    %v1585 = vmax.f32 %v1441, %v1459
    %v1586 = vmax.f32 %v1442, %v1460
    %v1587 = vmax.f32 %v1443, %v1461
    %v1588 = vmax.f32 %v1444, %v1462
    %v1589 = vmax.f32 %v1445, %v1463
    %v1590 = vmax.f32 %v1446, %v1464
    %v1591 = vmax.f32 %v1447, %v1465
    %v1592 = vmax.f32 %v1448, %v1466
    %v1593 = vmax.f32 %v1449, %v1467
    %v1594 = vmax.f32 %v1450, %v1468
    %v1595 = vmax.f32 %v1451, %v1469
    %v1596 = vmax.f32 %v1452, %v1470
    %v1597 = vmax.f32 %v1507, %v1525
    %v1598 = vmax.f32 %v1508, %v1526
    %v1599 = vmax.f32 %v1509, %v1527
    %v1600 = vmax.f32 %v1510, %v1528
    %v1601 = vmax.f32 %v1511, %v1529
    %v1602 = vmax.f32 %v1512, %v1530
    %v1603 = vmax.f32 %v1513, %v1531
    %v1604 = vmax.f32 %v1514, %v1532
    %v1605 = vmax.f32 %v1515, %v1533
    %v1606 = vmax.f32 %v1516, %v1534
    %v1607 = vmax.f32 %v1517, %v1535
    %v1608 = vmax.f32 %v1518, %v1536
    %v1609 = vmax.f32 %v1519, %v1537
    %v1610 = vmax.f32 %v1520, %v1538
    %v1611 = vmax.f32 %v1521, %v1539
    %v1612 = vmax.f32 %v1522, %v1540
    %v1613 = vmax.f32 %v1523, %v1541
    %v1614 = vmax.f32 %v1524, %v1542
    %v1615 = vmax.f32 %v1543, %v1579
    %v1616 = vmax.f32 %v1544, %v1580
    %v1617 = vmax.f32 %v1545, %v1581
    %v1618 = vmax.f32 %v1546, %v1582
    %v1619 = vmax.f32 %v1547, %v1583
    %v1620 = vmax.f32 %v1548, %v1584
    %v1621 = vmax.f32 %v1549, %v1585
    %v1622 = vmax.f32 %v1550, %v1586
    %v1623 = vmax.f32 %v1551, %v1587
    %v1624 = vmax.f32 %v1552, %v1588
    %v1625 = vmax.f32 %v1553, %v1589
    %v1626 = vmax.f32 %v1554, %v1590
    %v1627 = vmax.f32 %v1555, %v1591
    %v1628 = vmax.f32 %v1556, %v1592
    %v1629 = vmax.f32 %v1557, %v1593
    %v1630 = vmax.f32 %v1558, %v1594
    %v1631 = vmax.f32 %v1559, %v1595
    %v1632 = vmax.f32 %v1560, %v1596
    %v1633 = vmax.f32 %v1561, %v1597
    %v1634 = vmax.f32 %v1562, %v1598
    %v1635 = vmax.f32 %v1563, %v1599
    %v1636 = vmax.f32 %v1564, %v1600
    %v1637 = vmax.f32 %v1565, %v1601
    %v1638 = vmax.f32 %v1566, %v1602
    %v1639 = vmax.f32 %v1567, %v1603
    %v1640 = vmax.f32 %v1568, %v1604
    %v1641 = vmax.f32 %v1569, %v1605
    %v1642 = vmax.f32 %v1570, %v1606
    %v1643 = vmax.f32 %v1571, %v1607
    %v1644 = vmax.f32 %v1572, %v1608
    %v1645 = vmax.f32 %v1573, %v1609
    %v1646 = vmax.f32 %v1574, %v1610
    %v1647 = vmax.f32 %v1575, %v1611
    %v1648 = vmax.f32 %v1576, %v1612
    %v1649 = vmax.f32 %v1577, %v1613
    %v1650 = vmax.f32 %v1578, %v1614
    %vm1651 = vcmask 130048
    %1652 = vst.msk [vmem:[#allocation2] sm:$0xff] %vm1651, %v1615
    %vm1653 = vcmask 125952
    %1654 = vst.msk [vmem:[#allocation2 + $0x8] sm:$0xf] %vm1653, %v1616
    %1655 = vst.msk [vmem:[#allocation2 + $0xc0] sm:$0xff] %vm1651, %v1633
    %1656 = vst.msk [vmem:[#allocation2 + $0xc8] sm:$0xf] %vm1653, %v1634
    %s1657 = scalar_lea.vmem [#allocation2], 16
    %vm1658 = vcmask 130052
    %1659 = vst.msk [vmem:[%s1657 - $0x4] sm:$0xf0] %vm1658, %v1616
    %1660 = vst.msk [vmem:[%s1657 + $0x4] sm:$0xff] %vm1651, %v1617
    %1661 = vst.msk [vmem:[%s1657 + $0xbc] sm:$0xf0] %vm1658, %v1634
    %1662 = vst.msk [vmem:[%s1657 + $0xc4] sm:$0xff] %vm1651, %v1635
    %s1663 = scalar_lea.vmem [#allocation2], 32
    %1664 = vst.msk [vmem:[%s1663] sm:$0xff] %vm1651, %v1618
    %1665 = vst.msk [vmem:[%s1663 + $0x8] sm:$0xf] %vm1653, %v1619
    %1666 = vst.msk [vmem:[%s1663 + $0xc0] sm:$0xff] %vm1651, %v1636
    %1667 = vst.msk [vmem:[%s1663 + $0xc8] sm:$0xf] %vm1653, %v1637
    %s1668 = scalar_lea.vmem [#allocation2], 48
    %1669 = vst.msk [vmem:[%s1668 - $0x4] sm:$0xf0] %vm1658, %v1619
    %1670 = vst.msk [vmem:[%s1668 + $0x4] sm:$0xff] %vm1651, %v1620
    %1671 = vst.msk [vmem:[%s1668 + $0xbc] sm:$0xf0] %vm1658, %v1637
    %1672 = vst.msk [vmem:[%s1668 + $0xc4] sm:$0xff] %vm1651, %v1638
    %s1673 = scalar_lea.vmem [#allocation2], 64
    %1674 = vst.msk [vmem:[%s1673] sm:$0xff] %vm1651, %v1621
    %1675 = vst.msk [vmem:[%s1673 + $0x8] sm:$0xf] %vm1653, %v1622
    %1676 = vst.msk [vmem:[%s1673 + $0xc0] sm:$0xff] %vm1651, %v1639
    %1677 = vst.msk [vmem:[%s1673 + $0xc8] sm:$0xf] %vm1653, %v1640
    %s1678 = scalar_lea.vmem [#allocation2], 80
    %1679 = vst.msk [vmem:[%s1678 - $0x4] sm:$0xf0] %vm1658, %v1622
    %1680 = vst.msk [vmem:[%s1678 + $0x4] sm:$0xff] %vm1651, %v1623
    %1681 = vst.msk [vmem:[%s1678 + $0xbc] sm:$0xf0] %vm1658, %v1640
    %1682 = vst.msk [vmem:[%s1678 + $0xc4] sm:$0xff] %vm1651, %v1641
    %s1683 = scalar_lea.vmem [#allocation2], 96
    %1684 = vst.msk [vmem:[%s1683] sm:$0xff] %vm1651, %v1624
    %1685 = vst.msk [vmem:[%s1683 + $0x8] sm:$0xf] %vm1653, %v1625
    %1686 = vst.msk [vmem:[%s1683 + $0xc0] sm:$0xff] %vm1651, %v1642
    %1687 = vst.msk [vmem:[%s1683 + $0xc8] sm:$0xf] %vm1653, %v1643
    %s1688 = scalar_lea.vmem [#allocation2], 112
    %1689 = vst.msk [vmem:[%s1688 - $0x4] sm:$0xf0] %vm1658, %v1625
    %1690 = vst.msk [vmem:[%s1688 + $0x4] sm:$0xff] %vm1651, %v1626
    %1691 = vst.msk [vmem:[%s1688 + $0xbc] sm:$0xf0] %vm1658, %v1643
    %1692 = vst.msk [vmem:[%s1688 + $0xc4] sm:$0xff] %vm1651, %v1644
    %s1693 = scalar_lea.vmem [#allocation2], 128
    %1694 = vst.msk [vmem:[%s1693] sm:$0xff] %vm1651, %v1627
    %1695 = vst.msk [vmem:[%s1693 + $0x8] sm:$0xf] %vm1653, %v1628
    %1696 = vst.msk [vmem:[%s1693 + $0xc0] sm:$0xff] %vm1651, %v1645
    %1697 = vst.msk [vmem:[%s1693 + $0xc8] sm:$0xf] %vm1653, %v1646
    %s1698 = scalar_lea.vmem [#allocation2], 144
    %1699 = vst.msk [vmem:[%s1698 - $0x4] sm:$0xf0] %vm1658, %v1628
    %1700 = vst.msk [vmem:[%s1698 + $0x4] sm:$0xff] %vm1651, %v1629
    %1701 = vst.msk [vmem:[%s1698 + $0xbc] sm:$0xf0] %vm1658, %v1646
    %1702 = vst.msk [vmem:[%s1698 + $0xc4] sm:$0xff] %vm1651, %v1647
    %s1703 = scalar_lea.vmem [#allocation2], 160
    %1704 = vst.msk [vmem:[%s1703] sm:$0xff] %vm1651, %v1630
    %1705 = vst.msk [vmem:[%s1703 + $0x8] sm:$0xf] %vm1653, %v1631
    %1706 = vst.msk [vmem:[%s1703 + $0xc0] sm:$0xff] %vm1651, %v1648
    %1707 = vst.msk [vmem:[%s1703 + $0xc8] sm:$0xf] %vm1653, %v1649
    %s1708 = scalar_lea.vmem [#allocation2], 176
    %1709 = vst.msk [vmem:[%s1708 - $0x4] sm:$0xf0] %vm1658, %v1631
    %1710 = vst.msk [vmem:[%s1708 + $0x4] sm:$0xff] %vm1651, %v1632
    %1711 = vst.msk [vmem:[%s1708 + $0xbc] sm:$0xf0] %vm1658, %v1649
    %1712 = vst.msk [vmem:[%s1708 + $0xc4] sm:$0xff] %vm1651, %v1650
    %v1713 = vld [vmem:[#allocation2] sm:$0xff]
    %v1714 = vld [vmem:[#allocation2 + $0x10] sm:$0xff]
    %v1715 = vld [vmem:[#allocation2 + $0x20] sm:$0xff]
    %v1716 = vld [vmem:[#allocation2 + $0x30] sm:$0xff]
    %v1717 = vld [vmem:[#allocation2 + $0x40] sm:$0xff]
    %v1718 = vld [vmem:[#allocation2 + $0x50] sm:$0xff]
    %v1719 = vld [vmem:[#allocation2 + $0x60] sm:$0xff]
    %v1720 = vld [vmem:[#allocation2 + $0x70] sm:$0xff]
    %v1721 = vld [vmem:[#allocation2 + $0xc0] sm:$0xff]
    %v1722 = vld [vmem:[#allocation2 + $0xd0] sm:$0xff]
    %v1723 = vld [vmem:[#allocation2 + $0xe0] sm:$0xff]
    %v1724 = vld [vmem:[#allocation2 + $0xf0] sm:$0xff]
    %v1725 = vld [vmem:[#allocation2 + $0x100] sm:$0xff]
    %v1726 = vld [vmem:[#allocation2 + $0x110] sm:$0xff]
    %v1727 = vld [vmem:[#allocation2 + $0x120] sm:$0xff]
    %v1728 = vld [vmem:[#allocation2 + $0x130] sm:$0xff]
    %1729 = vst.msk [vmem:[#allocation3] sm:$0xff] %vm1651, %v1713
    %1730 = vst.msk [vmem:[#allocation3 + $0x20] sm:$0xff] %vm1651, %v1714
    %1731 = vst.msk [vmem:[#allocation3 + $0x40] sm:$0xff] %vm1651, %v1715
    %1732 = vst.msk [vmem:[#allocation3 + $0x60] sm:$0xff] %vm1651, %v1716
    %1733 = vst.msk [vmem:[#allocation3 + $0x80] sm:$0xff] %vm1651, %v1717
    %1734 = vst.msk [vmem:[#allocation3 + $0xa0] sm:$0xff] %vm1651, %v1718
    %1735 = vst.msk [vmem:[#allocation3 + $0xc0] sm:$0xff] %vm1651, %v1719
    %1736 = vst.msk [vmem:[#allocation3 + $0xe0] sm:$0xff] %vm1651, %v1720
    %1737 = vst.msk [vmem:[#allocation3 + $0x100] sm:$0xff] %vm1651, %v1721
    %1738 = vst.msk [vmem:[#allocation3 + $0x120] sm:$0xff] %vm1651, %v1722
    %1739 = vst.msk [vmem:[#allocation3 + $0x140] sm:$0xff] %vm1651, %v1723
    %1740 = vst.msk [vmem:[#allocation3 + $0x160] sm:$0xff] %vm1651, %v1724
    %1741 = vst.msk [vmem:[#allocation3 + $0x180] sm:$0xff] %vm1651, %v1725
    %1742 = vst.msk [vmem:[#allocation3 + $0x1a0] sm:$0xff] %vm1651, %v1726
    %1743 = vst.msk [vmem:[#allocation3 + $0x1c0] sm:$0xff] %vm1651, %v1727
    %1744 = vst.msk [vmem:[#allocation3 + $0x1e0] sm:$0xff] %vm1651, %v1728
    %v1745 = vld [vmem:[#allocation2 + $0x1] sm:$0xff]
    %v1746 = vld [vmem:[#allocation2 + $0x11] sm:$0xff]
    %v1747 = vld [vmem:[#allocation2 + $0x21] sm:$0xff]
    %v1748 = vld [vmem:[#allocation2 + $0x31] sm:$0xff]
    %v1749 = vld [vmem:[#allocation2 + $0x41] sm:$0xff]
    %v1750 = vld [vmem:[#allocation2 + $0x51] sm:$0xff]
    %v1751 = vld [vmem:[#allocation2 + $0x61] sm:$0xff]
    %v1752 = vld [vmem:[#allocation2 + $0x71] sm:$0xff]
    %v1753 = vld [vmem:[#allocation2 + $0xc1] sm:$0xff]
    %v1754 = vld [vmem:[#allocation2 + $0xd1] sm:$0xff]
    %v1755 = vld [vmem:[#allocation2 + $0xe1] sm:$0xff]
    %v1756 = vld [vmem:[#allocation2 + $0xf1] sm:$0xff]
    %v1757 = vld [vmem:[#allocation2 + $0x101] sm:$0xff]
    %v1758 = vld [vmem:[#allocation2 + $0x111] sm:$0xff]
    %v1759 = vld [vmem:[#allocation2 + $0x121] sm:$0xff]
    %v1760 = vld [vmem:[#allocation2 + $0x131] sm:$0xff]
    %1777 = vrot.lane.b32.xlu0 %v1745, 16
    %v1778 = vpop.permute.xlu0 %1777
    %1779 = vrot.lane.b32.xlu0 %v1746, 16
    %v1780 = vpop.permute.xlu0 %1779
    %1781 = vrot.lane.b32.xlu0 %v1747, 16
    %v1782 = vpop.permute.xlu0 %1781
    %1783 = vrot.lane.b32.xlu0 %v1748, 16
    %v1784 = vpop.permute.xlu0 %1783
    %1785 = vrot.lane.b32.xlu0 %v1749, 16
    %v1786 = vpop.permute.xlu0 %1785
    %1787 = vrot.lane.b32.xlu0 %v1750, 16
    %v1788 = vpop.permute.xlu0 %1787
    %1789 = vrot.lane.b32.xlu0 %v1751, 16
    %v1790 = vpop.permute.xlu0 %1789
    %1791 = vrot.lane.b32.xlu0 %v1752, 16
    %v1792 = vpop.permute.xlu0 %1791
    %1793 = vrot.lane.b32.xlu0 %v1753, 16
    %v1794 = vpop.permute.xlu0 %1793
    %1795 = vrot.lane.b32.xlu0 %v1754, 16
    %v1796 = vpop.permute.xlu0 %1795
    %1797 = vrot.lane.b32.xlu0 %v1755, 16
    %v1798 = vpop.permute.xlu0 %1797
    %1799 = vrot.lane.b32.xlu0 %v1756, 16
    %v1800 = vpop.permute.xlu0 %1799
    %1801 = vrot.lane.b32.xlu0 %v1757, 16
    %v1802 = vpop.permute.xlu0 %1801
    %1803 = vrot.lane.b32.xlu0 %v1758, 16
    %v1804 = vpop.permute.xlu0 %1803
    %1805 = vrot.lane.b32.xlu0 %v1759, 16
    %v1806 = vpop.permute.xlu0 %1805
    %1807 = vrot.lane.b32.xlu0 %v1760, 16
    %v1808 = vpop.permute.xlu0 %1807
    %vm1825 = vcmask 261248
    %1826 = vst.msk [vmem:[#allocation3] sm:$0xff] %vm1825, %v1778
    %1827 = vst.msk [vmem:[#allocation3 + $0x20] sm:$0xff] %vm1825, %v1780
    %1828 = vst.msk [vmem:[#allocation3 + $0x40] sm:$0xff] %vm1825, %v1782
    %1829 = vst.msk [vmem:[#allocation3 + $0x60] sm:$0xff] %vm1825, %v1784
    %1830 = vst.msk [vmem:[#allocation3 + $0x80] sm:$0xff] %vm1825, %v1786
    %1831 = vst.msk [vmem:[#allocation3 + $0xa0] sm:$0xff] %vm1825, %v1788
    %1832 = vst.msk [vmem:[#allocation3 + $0xc0] sm:$0xff] %vm1825, %v1790
    %1833 = vst.msk [vmem:[#allocation3 + $0xe0] sm:$0xff] %vm1825, %v1792
    %1834 = vst.msk [vmem:[#allocation3 + $0x100] sm:$0xff] %vm1825, %v1794
    %1835 = vst.msk [vmem:[#allocation3 + $0x120] sm:$0xff] %vm1825, %v1796
    %1836 = vst.msk [vmem:[#allocation3 + $0x140] sm:$0xff] %vm1825, %v1798
    %1837 = vst.msk [vmem:[#allocation3 + $0x160] sm:$0xff] %vm1825, %v1800
    %1838 = vst.msk [vmem:[#allocation3 + $0x180] sm:$0xff] %vm1825, %v1802
    %1839 = vst.msk [vmem:[#allocation3 + $0x1a0] sm:$0xff] %vm1825, %v1804
    %1840 = vst.msk [vmem:[#allocation3 + $0x1c0] sm:$0xff] %vm1825, %v1806
    %1841 = vst.msk [vmem:[#allocation3 + $0x1e0] sm:$0xff] %vm1825, %v1808
    %v1842 = vld [vmem:[#allocation2 + $0x2] sm:$0xff]
    %v1843 = vld [vmem:[#allocation2 + $0x12] sm:$0xff]
    %v1844 = vld [vmem:[#allocation2 + $0x22] sm:$0xff]
    %v1845 = vld [vmem:[#allocation2 + $0x32] sm:$0xff]
    %v1846 = vld [vmem:[#allocation2 + $0x42] sm:$0xff]
    %v1847 = vld [vmem:[#allocation2 + $0x52] sm:$0xff]
    %v1848 = vld [vmem:[#allocation2 + $0x62] sm:$0xff]
    %v1849 = vld [vmem:[#allocation2 + $0x72] sm:$0xff]
    %v1850 = vld [vmem:[#allocation2 + $0xc2] sm:$0xff]
    %v1851 = vld [vmem:[#allocation2 + $0xd2] sm:$0xff]
    %v1852 = vld [vmem:[#allocation2 + $0xe2] sm:$0xff]
    %v1853 = vld [vmem:[#allocation2 + $0xf2] sm:$0xff]
    %v1854 = vld [vmem:[#allocation2 + $0x102] sm:$0xff]
    %v1855 = vld [vmem:[#allocation2 + $0x112] sm:$0xff]
    %v1856 = vld [vmem:[#allocation2 + $0x122] sm:$0xff]
    %v1857 = vld [vmem:[#allocation2 + $0x132] sm:$0xff]
    %1874 = vrot.lane.b32.xlu0 %v1842, 32
    %v1875 = vpop.permute.xlu0 %1874
    %1876 = vrot.lane.b32.xlu0 %v1843, 32
    %v1877 = vpop.permute.xlu0 %1876
    %1878 = vrot.lane.b32.xlu0 %v1844, 32
    %v1879 = vpop.permute.xlu0 %1878
    %1880 = vrot.lane.b32.xlu0 %v1845, 32
    %v1881 = vpop.permute.xlu0 %1880
    %1882 = vrot.lane.b32.xlu0 %v1846, 32
    %v1883 = vpop.permute.xlu0 %1882
    %1884 = vrot.lane.b32.xlu0 %v1847, 32
    %v1885 = vpop.permute.xlu0 %1884
    %1886 = vrot.lane.b32.xlu0 %v1848, 32
    %v1887 = vpop.permute.xlu0 %1886
    %1888 = vrot.lane.b32.xlu0 %v1849, 32
    %v1889 = vpop.permute.xlu0 %1888
    %1890 = vrot.lane.b32.xlu0 %v1850, 32
    %v1891 = vpop.permute.xlu0 %1890
    %1892 = vrot.lane.b32.xlu0 %v1851, 32
    %v1893 = vpop.permute.xlu0 %1892
    %1894 = vrot.lane.b32.xlu0 %v1852, 32
    %v1895 = vpop.permute.xlu0 %1894
    %1896 = vrot.lane.b32.xlu0 %v1853, 32
    %v1897 = vpop.permute.xlu0 %1896
    %1898 = vrot.lane.b32.xlu0 %v1854, 32
    %v1899 = vpop.permute.xlu0 %1898
    %1900 = vrot.lane.b32.xlu0 %v1855, 32
    %v1901 = vpop.permute.xlu0 %1900
    %1902 = vrot.lane.b32.xlu0 %v1856, 32
    %v1903 = vpop.permute.xlu0 %1902
    %1904 = vrot.lane.b32.xlu0 %v1857, 32
    %v1905 = vpop.permute.xlu0 %1904
    %vm1922 = vcmask 392448
    %1923 = vst.msk [vmem:[#allocation3] sm:$0xff] %vm1922, %v1875
    %1924 = vst.msk [vmem:[#allocation3 + $0x20] sm:$0xff] %vm1922, %v1877
    %1925 = vst.msk [vmem:[#allocation3 + $0x40] sm:$0xff] %vm1922, %v1879
    %1926 = vst.msk [vmem:[#allocation3 + $0x60] sm:$0xff] %vm1922, %v1881
    %1927 = vst.msk [vmem:[#allocation3 + $0x80] sm:$0xff] %vm1922, %v1883
    %1928 = vst.msk [vmem:[#allocation3 + $0xa0] sm:$0xff] %vm1922, %v1885
    %1929 = vst.msk [vmem:[#allocation3 + $0xc0] sm:$0xff] %vm1922, %v1887
    %1930 = vst.msk [vmem:[#allocation3 + $0xe0] sm:$0xff] %vm1922, %v1889
    %1931 = vst.msk [vmem:[#allocation3 + $0x100] sm:$0xff] %vm1922, %v1891
    %1932 = vst.msk [vmem:[#allocation3 + $0x120] sm:$0xff] %vm1922, %v1893
    %1933 = vst.msk [vmem:[#allocation3 + $0x140] sm:$0xff] %vm1922, %v1895
    %1934 = vst.msk [vmem:[#allocation3 + $0x160] sm:$0xff] %vm1922, %v1897
    %1935 = vst.msk [vmem:[#allocation3 + $0x180] sm:$0xff] %vm1922, %v1899
    %1936 = vst.msk [vmem:[#allocation3 + $0x1a0] sm:$0xff] %vm1922, %v1901
    %1937 = vst.msk [vmem:[#allocation3 + $0x1c0] sm:$0xff] %vm1922, %v1903
    %1938 = vst.msk [vmem:[#allocation3 + $0x1e0] sm:$0xff] %vm1922, %v1905
    %v1939 = vld [vmem:[#allocation2 + $0x3] sm:$0xff]
    %v1940 = vld [vmem:[#allocation2 + $0x13] sm:$0xff]
    %v1941 = vld [vmem:[#allocation2 + $0x23] sm:$0xff]
    %v1942 = vld [vmem:[#allocation2 + $0x33] sm:$0xff]
    %v1943 = vld [vmem:[#allocation2 + $0x43] sm:$0xff]
    %v1944 = vld [vmem:[#allocation2 + $0x53] sm:$0xff]
    %v1945 = vld [vmem:[#allocation2 + $0x63] sm:$0xff]
    %v1946 = vld [vmem:[#allocation2 + $0x73] sm:$0xff]
    %v1947 = vld [vmem:[#allocation2 + $0xc3] sm:$0xff]
    %v1948 = vld [vmem:[#allocation2 + $0xd3] sm:$0xff]
    %v1949 = vld [vmem:[#allocation2 + $0xe3] sm:$0xff]
    %v1950 = vld [vmem:[#allocation2 + $0xf3] sm:$0xff]
    %v1951 = vld [vmem:[#allocation2 + $0x103] sm:$0xff]
    %v1952 = vld [vmem:[#allocation2 + $0x113] sm:$0xff]
    %v1953 = vld [vmem:[#allocation2 + $0x123] sm:$0xff]
    %v1954 = vld [vmem:[#allocation2 + $0x133] sm:$0xff]
    %1971 = vrot.lane.b32.xlu0 %v1939, 48
    %v1972 = vpop.permute.xlu0 %1971
    %1973 = vrot.lane.b32.xlu0 %v1940, 48
    %v1974 = vpop.permute.xlu0 %1973
    %1975 = vrot.lane.b32.xlu0 %v1941, 48
    %v1976 = vpop.permute.xlu0 %1975
    %1977 = vrot.lane.b32.xlu0 %v1942, 48
    %v1978 = vpop.permute.xlu0 %1977
    %1979 = vrot.lane.b32.xlu0 %v1943, 48
    %v1980 = vpop.permute.xlu0 %1979
    %1981 = vrot.lane.b32.xlu0 %v1944, 48
    %v1982 = vpop.permute.xlu0 %1981
    %1983 = vrot.lane.b32.xlu0 %v1945, 48
    %v1984 = vpop.permute.xlu0 %1983
    %1985 = vrot.lane.b32.xlu0 %v1946, 48
    %v1986 = vpop.permute.xlu0 %1985
    %1987 = vrot.lane.b32.xlu0 %v1947, 48
    %v1988 = vpop.permute.xlu0 %1987
    %1989 = vrot.lane.b32.xlu0 %v1948, 48
    %v1990 = vpop.permute.xlu0 %1989
    %1991 = vrot.lane.b32.xlu0 %v1949, 48
    %v1992 = vpop.permute.xlu0 %1991
    %1993 = vrot.lane.b32.xlu0 %v1950, 48
    %v1994 = vpop.permute.xlu0 %1993
    %1995 = vrot.lane.b32.xlu0 %v1951, 48
    %v1996 = vpop.permute.xlu0 %1995
    %1997 = vrot.lane.b32.xlu0 %v1952, 48
    %v1998 = vpop.permute.xlu0 %1997
    %1999 = vrot.lane.b32.xlu0 %v1953, 48
    %v2000 = vpop.permute.xlu0 %1999
    %2001 = vrot.lane.b32.xlu0 %v1954, 48
    %v2002 = vpop.permute.xlu0 %2001
    %vm2019 = vcmask 523648
    %2020 = vst.msk [vmem:[#allocation3] sm:$0xff] %vm2019, %v1972
    %2021 = vst.msk [vmem:[#allocation3 + $0x20] sm:$0xff] %vm2019, %v1974
    %2022 = vst.msk [vmem:[#allocation3 + $0x40] sm:$0xff] %vm2019, %v1976
    %2023 = vst.msk [vmem:[#allocation3 + $0x60] sm:$0xff] %vm2019, %v1978
    %2024 = vst.msk [vmem:[#allocation3 + $0x80] sm:$0xff] %vm2019, %v1980
    %2025 = vst.msk [vmem:[#allocation3 + $0xa0] sm:$0xff] %vm2019, %v1982
    %2026 = vst.msk [vmem:[#allocation3 + $0xc0] sm:$0xff] %vm2019, %v1984
    %2027 = vst.msk [vmem:[#allocation3 + $0xe0] sm:$0xff] %vm2019, %v1986
    %2028 = vst.msk [vmem:[#allocation3 + $0x100] sm:$0xff] %vm2019, %v1988
    %2029 = vst.msk [vmem:[#allocation3 + $0x120] sm:$0xff] %vm2019, %v1990
    %2030 = vst.msk [vmem:[#allocation3 + $0x140] sm:$0xff] %vm2019, %v1992
    %2031 = vst.msk [vmem:[#allocation3 + $0x160] sm:$0xff] %vm2019, %v1994
    %2032 = vst.msk [vmem:[#allocation3 + $0x180] sm:$0xff] %vm2019, %v1996
    %2033 = vst.msk [vmem:[#allocation3 + $0x1a0] sm:$0xff] %vm2019, %v1998
    %2034 = vst.msk [vmem:[#allocation3 + $0x1c0] sm:$0xff] %vm2019, %v2000
    %2035 = vst.msk [vmem:[#allocation3 + $0x1e0] sm:$0xff] %vm2019, %v2002
    %v2036 = vld [vmem:[#allocation2 + $0x4] sm:$0xff]
    %v2037 = vld [vmem:[#allocation2 + $0x14] sm:$0xff]
    %v2038 = vld [vmem:[#allocation2 + $0x24] sm:$0xff]
    %v2039 = vld [vmem:[#allocation2 + $0x34] sm:$0xff]
    %v2040 = vld [vmem:[#allocation2 + $0x44] sm:$0xff]
    %v2041 = vld [vmem:[#allocation2 + $0x54] sm:$0xff]
    %v2042 = vld [vmem:[#allocation2 + $0x64] sm:$0xff]
    %v2043 = vld [vmem:[#allocation2 + $0x74] sm:$0xff]
    %v2044 = vld [vmem:[#allocation2 + $0xc4] sm:$0xff]
    %v2045 = vld [vmem:[#allocation2 + $0xd4] sm:$0xff]
    %v2046 = vld [vmem:[#allocation2 + $0xe4] sm:$0xff]
    %v2047 = vld [vmem:[#allocation2 + $0xf4] sm:$0xff]
    %v2048 = vld [vmem:[#allocation2 + $0x104] sm:$0xff]
    %v2049 = vld [vmem:[#allocation2 + $0x114] sm:$0xff]
    %v2050 = vld [vmem:[#allocation2 + $0x124] sm:$0xff]
    %v2051 = vld [vmem:[#allocation2 + $0x134] sm:$0xff]
    %2068 = vrot.lane.b32.xlu0 %v2036, 64
    %v2069 = vpop.permute.xlu0 %2068
    %2070 = vrot.lane.b32.xlu0 %v2037, 64
    %v2071 = vpop.permute.xlu0 %2070
    %2072 = vrot.lane.b32.xlu0 %v2038, 64
    %v2073 = vpop.permute.xlu0 %2072
    %2074 = vrot.lane.b32.xlu0 %v2039, 64
    %v2075 = vpop.permute.xlu0 %2074
    %2076 = vrot.lane.b32.xlu0 %v2040, 64
    %v2077 = vpop.permute.xlu0 %2076
    %2078 = vrot.lane.b32.xlu0 %v2041, 64
    %v2079 = vpop.permute.xlu0 %2078
    %2080 = vrot.lane.b32.xlu0 %v2042, 64
    %v2081 = vpop.permute.xlu0 %2080
    %2082 = vrot.lane.b32.xlu0 %v2043, 64
    %v2083 = vpop.permute.xlu0 %2082
    %2084 = vrot.lane.b32.xlu0 %v2044, 64
    %v2085 = vpop.permute.xlu0 %2084
    %2086 = vrot.lane.b32.xlu0 %v2045, 64
    %v2087 = vpop.permute.xlu0 %2086
    %2088 = vrot.lane.b32.xlu0 %v2046, 64
    %v2089 = vpop.permute.xlu0 %2088
    %2090 = vrot.lane.b32.xlu0 %v2047, 64
    %v2091 = vpop.permute.xlu0 %2090
    %2092 = vrot.lane.b32.xlu0 %v2048, 64
    %v2093 = vpop.permute.xlu0 %2092
    %2094 = vrot.lane.b32.xlu0 %v2049, 64
    %v2095 = vpop.permute.xlu0 %2094
    %2096 = vrot.lane.b32.xlu0 %v2050, 64
    %v2097 = vpop.permute.xlu0 %2096
    %2098 = vrot.lane.b32.xlu0 %v2051, 64
    %v2099 = vpop.permute.xlu0 %2098
    %vm2116 = vcmask 654848
    %2117 = vst.msk [vmem:[#allocation3] sm:$0xff] %vm2116, %v2069
    %2118 = vst.msk [vmem:[#allocation3 + $0x20] sm:$0xff] %vm2116, %v2071
    %2119 = vst.msk [vmem:[#allocation3 + $0x40] sm:$0xff] %vm2116, %v2073
    %2120 = vst.msk [vmem:[#allocation3 + $0x60] sm:$0xff] %vm2116, %v2075
    %2121 = vst.msk [vmem:[#allocation3 + $0x80] sm:$0xff] %vm2116, %v2077
    %2122 = vst.msk [vmem:[#allocation3 + $0xa0] sm:$0xff] %vm2116, %v2079
    %2123 = vst.msk [vmem:[#allocation3 + $0xc0] sm:$0xff] %vm2116, %v2081
    %2124 = vst.msk [vmem:[#allocation3 + $0xe0] sm:$0xff] %vm2116, %v2083
    %2125 = vst.msk [vmem:[#allocation3 + $0x100] sm:$0xff] %vm2116, %v2085
    %2126 = vst.msk [vmem:[#allocation3 + $0x120] sm:$0xff] %vm2116, %v2087
    %2127 = vst.msk [vmem:[#allocation3 + $0x140] sm:$0xff] %vm2116, %v2089
    %2128 = vst.msk [vmem:[#allocation3 + $0x160] sm:$0xff] %vm2116, %v2091
    %2129 = vst.msk [vmem:[#allocation3 + $0x180] sm:$0xff] %vm2116, %v2093
    %2130 = vst.msk [vmem:[#allocation3 + $0x1a0] sm:$0xff] %vm2116, %v2095
    %2131 = vst.msk [vmem:[#allocation3 + $0x1c0] sm:$0xff] %vm2116, %v2097
    %2132 = vst.msk [vmem:[#allocation3 + $0x1e0] sm:$0xff] %vm2116, %v2099
    %v2133 = vld [vmem:[%s1657] sm:$0xff]
    %v2134 = vld [vmem:[%s1657 + $0x10] sm:$0xff]
    %v2135 = vld [vmem:[%s1657 + $0x20] sm:$0xff]
    %v2136 = vld [vmem:[%s1657 + $0x30] sm:$0xff]
    %v2137 = vld [vmem:[%s1657 + $0x40] sm:$0xff]
    %v2138 = vld [vmem:[%s1657 + $0x50] sm:$0xff]
    %v2139 = vld [vmem:[%s1657 + $0x60] sm:$0xff]
    %v2140 = vld [vmem:[%s1657 + $0x70] sm:$0xff]
    %v2141 = vld [vmem:[%s1657 + $0xc0] sm:$0xff]
    %v2142 = vld [vmem:[%s1657 + $0xd0] sm:$0xff]
    %v2143 = vld [vmem:[%s1657 + $0xe0] sm:$0xff]
    %v2144 = vld [vmem:[%s1657 + $0xf0] sm:$0xff]
    %v2145 = vld [vmem:[%s1657 + $0x100] sm:$0xff]
    %v2146 = vld [vmem:[%s1657 + $0x110] sm:$0xff]
    %v2147 = vld [vmem:[%s1657 + $0x120] sm:$0xff]
    %v2148 = vld [vmem:[%s1657 + $0x130] sm:$0xff]
    %2165 = vrot.lane.b32.xlu0 %v2133, 80
    %v2166 = vpop.permute.xlu0 %2165
    %2167 = vrot.lane.b32.xlu0 %v2134, 80
    %v2168 = vpop.permute.xlu0 %2167
    %2169 = vrot.lane.b32.xlu0 %v2135, 80
    %v2170 = vpop.permute.xlu0 %2169
    %2171 = vrot.lane.b32.xlu0 %v2136, 80
    %v2172 = vpop.permute.xlu0 %2171
    %2173 = vrot.lane.b32.xlu0 %v2137, 80
    %v2174 = vpop.permute.xlu0 %2173
    %2175 = vrot.lane.b32.xlu0 %v2138, 80
    %v2176 = vpop.permute.xlu0 %2175
    %2177 = vrot.lane.b32.xlu0 %v2139, 80
    %v2178 = vpop.permute.xlu0 %2177
    %2179 = vrot.lane.b32.xlu0 %v2140, 80
    %v2180 = vpop.permute.xlu0 %2179
    %2181 = vrot.lane.b32.xlu0 %v2141, 80
    %v2182 = vpop.permute.xlu0 %2181
    %2183 = vrot.lane.b32.xlu0 %v2142, 80
    %v2184 = vpop.permute.xlu0 %2183
    %2185 = vrot.lane.b32.xlu0 %v2143, 80
    %v2186 = vpop.permute.xlu0 %2185
    %2187 = vrot.lane.b32.xlu0 %v2144, 80
    %v2188 = vpop.permute.xlu0 %2187
    %2189 = vrot.lane.b32.xlu0 %v2145, 80
    %v2190 = vpop.permute.xlu0 %2189
    %2191 = vrot.lane.b32.xlu0 %v2146, 80
    %v2192 = vpop.permute.xlu0 %2191
    %2193 = vrot.lane.b32.xlu0 %v2147, 80
    %v2194 = vpop.permute.xlu0 %2193
    %2195 = vrot.lane.b32.xlu0 %v2148, 80
    %v2196 = vpop.permute.xlu0 %2195
    %vm2213 = vcmask 786048
    %2214 = vst.msk [vmem:[#allocation3] sm:$0xff] %vm2213, %v2166
    %2215 = vst.msk [vmem:[#allocation3 + $0x20] sm:$0xff] %vm2213, %v2168
    %2216 = vst.msk [vmem:[#allocation3 + $0x40] sm:$0xff] %vm2213, %v2170
    %2217 = vst.msk [vmem:[#allocation3 + $0x60] sm:$0xff] %vm2213, %v2172
    %2218 = vst.msk [vmem:[#allocation3 + $0x80] sm:$0xff] %vm2213, %v2174
    %2219 = vst.msk [vmem:[#allocation3 + $0xa0] sm:$0xff] %vm2213, %v2176
    %2220 = vst.msk [vmem:[#allocation3 + $0xc0] sm:$0xff] %vm2213, %v2178
    %2221 = vst.msk [vmem:[#allocation3 + $0xe0] sm:$0xff] %vm2213, %v2180
    %2222 = vst.msk [vmem:[#allocation3 + $0x100] sm:$0xff] %vm2213, %v2182
    %2223 = vst.msk [vmem:[#allocation3 + $0x120] sm:$0xff] %vm2213, %v2184
    %2224 = vst.msk [vmem:[#allocation3 + $0x140] sm:$0xff] %vm2213, %v2186
    %2225 = vst.msk [vmem:[#allocation3 + $0x160] sm:$0xff] %vm2213, %v2188
    %2226 = vst.msk [vmem:[#allocation3 + $0x180] sm:$0xff] %vm2213, %v2190
    %2227 = vst.msk [vmem:[#allocation3 + $0x1a0] sm:$0xff] %vm2213, %v2192
    %2228 = vst.msk [vmem:[#allocation3 + $0x1c0] sm:$0xff] %vm2213, %v2194
    %2229 = vst.msk [vmem:[#allocation3 + $0x1e0] sm:$0xff] %vm2213, %v2196
    %v2230 = vld [vmem:[%s1657 + $0x1] sm:$0xff]
    %v2231 = vld [vmem:[%s1657 + $0x11] sm:$0xff]
    %v2232 = vld [vmem:[%s1657 + $0x21] sm:$0xff]
    %v2233 = vld [vmem:[%s1657 + $0x31] sm:$0xff]
    %v2234 = vld [vmem:[%s1657 + $0x41] sm:$0xff]
    %v2235 = vld [vmem:[%s1657 + $0x51] sm:$0xff]
    %v2236 = vld [vmem:[%s1657 + $0x61] sm:$0xff]
    %v2237 = vld [vmem:[%s1657 + $0x71] sm:$0xff]
    %v2238 = vld [vmem:[%s1657 + $0xc1] sm:$0xff]
    %v2239 = vld [vmem:[%s1657 + $0xd1] sm:$0xff]
    %v2240 = vld [vmem:[%s1657 + $0xe1] sm:$0xff]
    %v2241 = vld [vmem:[%s1657 + $0xf1] sm:$0xff]
    %v2242 = vld [vmem:[%s1657 + $0x101] sm:$0xff]
    %v2243 = vld [vmem:[%s1657 + $0x111] sm:$0xff]
    %v2244 = vld [vmem:[%s1657 + $0x121] sm:$0xff]
    %v2245 = vld [vmem:[%s1657 + $0x131] sm:$0xff]
    %2262 = vrot.lane.b32.xlu0 %v2230, 96
    %v2263 = vpop.permute.xlu0 %2262
    %2264 = vrot.lane.b32.xlu0 %v2231, 96
    %v2265 = vpop.permute.xlu0 %2264
    %2266 = vrot.lane.b32.xlu0 %v2232, 96
    %v2267 = vpop.permute.xlu0 %2266
    %2268 = vrot.lane.b32.xlu0 %v2233, 96
    %v2269 = vpop.permute.xlu0 %2268
    %2270 = vrot.lane.b32.xlu0 %v2234, 96
    %v2271 = vpop.permute.xlu0 %2270
    %2272 = vrot.lane.b32.xlu0 %v2235, 96
    %v2273 = vpop.permute.xlu0 %2272
    %2274 = vrot.lane.b32.xlu0 %v2236, 96
    %v2275 = vpop.permute.xlu0 %2274
    %2276 = vrot.lane.b32.xlu0 %v2237, 96
    %v2277 = vpop.permute.xlu0 %2276
    %2278 = vrot.lane.b32.xlu0 %v2238, 96
    %v2279 = vpop.permute.xlu0 %2278
    %2280 = vrot.lane.b32.xlu0 %v2239, 96
    %v2281 = vpop.permute.xlu0 %2280
    %2282 = vrot.lane.b32.xlu0 %v2240, 96
    %v2283 = vpop.permute.xlu0 %2282
    %2284 = vrot.lane.b32.xlu0 %v2241, 96
    %v2285 = vpop.permute.xlu0 %2284
    %2286 = vrot.lane.b32.xlu0 %v2242, 96
    %v2287 = vpop.permute.xlu0 %2286
    %2288 = vrot.lane.b32.xlu0 %v2243, 96
    %v2289 = vpop.permute.xlu0 %2288
    %2290 = vrot.lane.b32.xlu0 %v2244, 96
    %v2291 = vpop.permute.xlu0 %2290
    %2292 = vrot.lane.b32.xlu0 %v2245, 96
    %v2293 = vpop.permute.xlu0 %2292
    %vm2310 = vcmask 917248
    %2311 = vst.msk [vmem:[#allocation3] sm:$0xff] %vm2310, %v2263
    %2312 = vst.msk [vmem:[#allocation3 + $0x20] sm:$0xff] %vm2310, %v2265
    %2313 = vst.msk [vmem:[#allocation3 + $0x40] sm:$0xff] %vm2310, %v2267
    %2314 = vst.msk [vmem:[#allocation3 + $0x60] sm:$0xff] %vm2310, %v2269
    %2315 = vst.msk [vmem:[#allocation3 + $0x80] sm:$0xff] %vm2310, %v2271
    %2316 = vst.msk [vmem:[#allocation3 + $0xa0] sm:$0xff] %vm2310, %v2273
    %2317 = vst.msk [vmem:[#allocation3 + $0xc0] sm:$0xff] %vm2310, %v2275
    %2318 = vst.msk [vmem:[#allocation3 + $0xe0] sm:$0xff] %vm2310, %v2277
    %2319 = vst.msk [vmem:[#allocation3 + $0x100] sm:$0xff] %vm2310, %v2279
    %2320 = vst.msk [vmem:[#allocation3 + $0x120] sm:$0xff] %vm2310, %v2281
    %2321 = vst.msk [vmem:[#allocation3 + $0x140] sm:$0xff] %vm2310, %v2283
    %2322 = vst.msk [vmem:[#allocation3 + $0x160] sm:$0xff] %vm2310, %v2285
    %2323 = vst.msk [vmem:[#allocation3 + $0x180] sm:$0xff] %vm2310, %v2287
    %2324 = vst.msk [vmem:[#allocation3 + $0x1a0] sm:$0xff] %vm2310, %v2289
    %2325 = vst.msk [vmem:[#allocation3 + $0x1c0] sm:$0xff] %vm2310, %v2291
    %2326 = vst.msk [vmem:[#allocation3 + $0x1e0] sm:$0xff] %vm2310, %v2293
    %v2327 = vld [vmem:[%s1657 + $0x2] sm:$0xff]
    %v2328 = vld [vmem:[%s1657 + $0x12] sm:$0xff]
    %v2329 = vld [vmem:[%s1657 + $0x22] sm:$0xff]
    %v2330 = vld [vmem:[%s1657 + $0x32] sm:$0xff]
    %v2331 = vld [vmem:[%s1657 + $0x42] sm:$0xff]
    %v2332 = vld [vmem:[%s1657 + $0x52] sm:$0xff]
    %v2333 = vld [vmem:[%s1657 + $0x62] sm:$0xff]
    %v2334 = vld [vmem:[%s1657 + $0x72] sm:$0xff]
    %v2335 = vld [vmem:[%s1657 + $0xc2] sm:$0xff]
    %v2336 = vld [vmem:[%s1657 + $0xd2] sm:$0xff]
    %v2337 = vld [vmem:[%s1657 + $0xe2] sm:$0xff]
    %v2338 = vld [vmem:[%s1657 + $0xf2] sm:$0xff]
    %v2339 = vld [vmem:[%s1657 + $0x102] sm:$0xff]
    %v2340 = vld [vmem:[%s1657 + $0x112] sm:$0xff]
    %v2341 = vld [vmem:[%s1657 + $0x122] sm:$0xff]
    %v2342 = vld [vmem:[%s1657 + $0x132] sm:$0xff]
    %2359 = vrot.lane.b32.xlu0 %v2327, 112
    %v2360 = vpop.permute.xlu0 %2359
    %2361 = vrot.lane.b32.xlu0 %v2328, 112
    %v2362 = vpop.permute.xlu0 %2361
    %2363 = vrot.lane.b32.xlu0 %v2329, 112
    %v2364 = vpop.permute.xlu0 %2363
    %2365 = vrot.lane.b32.xlu0 %v2330, 112
    %v2366 = vpop.permute.xlu0 %2365
    %2367 = vrot.lane.b32.xlu0 %v2331, 112
    %v2368 = vpop.permute.xlu0 %2367
    %2369 = vrot.lane.b32.xlu0 %v2332, 112
    %v2370 = vpop.permute.xlu0 %2369
    %2371 = vrot.lane.b32.xlu0 %v2333, 112
    %v2372 = vpop.permute.xlu0 %2371
    %2373 = vrot.lane.b32.xlu0 %v2334, 112
    %v2374 = vpop.permute.xlu0 %2373
    %2375 = vrot.lane.b32.xlu0 %v2335, 112
    %v2376 = vpop.permute.xlu0 %2375
    %2377 = vrot.lane.b32.xlu0 %v2336, 112
    %v2378 = vpop.permute.xlu0 %2377
    %2379 = vrot.lane.b32.xlu0 %v2337, 112
    %v2380 = vpop.permute.xlu0 %2379
    %2381 = vrot.lane.b32.xlu0 %v2338, 112
    %v2382 = vpop.permute.xlu0 %2381
    %2383 = vrot.lane.b32.xlu0 %v2339, 112
    %v2384 = vpop.permute.xlu0 %2383
    %2385 = vrot.lane.b32.xlu0 %v2340, 112
    %v2386 = vpop.permute.xlu0 %2385
    %2387 = vrot.lane.b32.xlu0 %v2341, 112
    %v2388 = vpop.permute.xlu0 %2387
    %2389 = vrot.lane.b32.xlu0 %v2342, 112
    %v2390 = vpop.permute.xlu0 %2389
    %vm2407 = vcmask 1048448
    %2408 = vst.msk [vmem:[#allocation3] sm:$0xff] %vm2407, %v2360
    %2409 = vst.msk [vmem:[#allocation3 + $0x20] sm:$0xff] %vm2407, %v2362
    %2410 = vst.msk [vmem:[#allocation3 + $0x40] sm:$0xff] %vm2407, %v2364
    %2411 = vst.msk [vmem:[#allocation3 + $0x60] sm:$0xff] %vm2407, %v2366
    %2412 = vst.msk [vmem:[#allocation3 + $0x80] sm:$0xff] %vm2407, %v2368
    %2413 = vst.msk [vmem:[#allocation3 + $0xa0] sm:$0xff] %vm2407, %v2370
    %2414 = vst.msk [vmem:[#allocation3 + $0xc0] sm:$0xff] %vm2407, %v2372
    %2415 = vst.msk [vmem:[#allocation3 + $0xe0] sm:$0xff] %vm2407, %v2374
    %2416 = vst.msk [vmem:[#allocation3 + $0x100] sm:$0xff] %vm2407, %v2376
    %2417 = vst.msk [vmem:[#allocation3 + $0x120] sm:$0xff] %vm2407, %v2378
    %2418 = vst.msk [vmem:[#allocation3 + $0x140] sm:$0xff] %vm2407, %v2380
    %2419 = vst.msk [vmem:[#allocation3 + $0x160] sm:$0xff] %vm2407, %v2382
    %2420 = vst.msk [vmem:[#allocation3 + $0x180] sm:$0xff] %vm2407, %v2384
    %2421 = vst.msk [vmem:[#allocation3 + $0x1a0] sm:$0xff] %vm2407, %v2386
    %2422 = vst.msk [vmem:[#allocation3 + $0x1c0] sm:$0xff] %vm2407, %v2388
    %2423 = vst.msk [vmem:[#allocation3 + $0x1e0] sm:$0xff] %vm2407, %v2390
    %v2424 = vld [vmem:[%s1657 + $0x3] sm:$0xff]
    %v2425 = vld [vmem:[%s1657 + $0x13] sm:$0xff]
    %v2426 = vld [vmem:[%s1657 + $0x23] sm:$0xff]
    %v2427 = vld [vmem:[%s1657 + $0x33] sm:$0xff]
    %v2428 = vld [vmem:[%s1657 + $0x43] sm:$0xff]
    %v2429 = vld [vmem:[%s1657 + $0x53] sm:$0xff]
    %v2430 = vld [vmem:[%s1657 + $0x63] sm:$0xff]
    %v2431 = vld [vmem:[%s1657 + $0x73] sm:$0xff]
    %v2432 = vld [vmem:[%s1657 + $0xc3] sm:$0xff]
    %v2433 = vld [vmem:[%s1657 + $0xd3] sm:$0xff]
    %v2434 = vld [vmem:[%s1657 + $0xe3] sm:$0xff]
    %v2435 = vld [vmem:[%s1657 + $0xf3] sm:$0xff]
    %v2436 = vld [vmem:[%s1657 + $0x103] sm:$0xff]
    %v2437 = vld [vmem:[%s1657 + $0x113] sm:$0xff]
    %v2438 = vld [vmem:[%s1657 + $0x123] sm:$0xff]
    %v2439 = vld [vmem:[%s1657 + $0x133] sm:$0xff]
    %2440 = vst.msk [vmem:[#allocation3 + $0x8] sm:$0xff] %vm1651, %v2424
    %2441 = vst.msk [vmem:[#allocation3 + $0x28] sm:$0xff] %vm1651, %v2425
    %2442 = vst.msk [vmem:[#allocation3 + $0x48] sm:$0xff] %vm1651, %v2426
    %2443 = vst.msk [vmem:[#allocation3 + $0x68] sm:$0xff] %vm1651, %v2427
    %2444 = vst.msk [vmem:[#allocation3 + $0x88] sm:$0xff] %vm1651, %v2428
    %2445 = vst.msk [vmem:[#allocation3 + $0xa8] sm:$0xff] %vm1651, %v2429
    %2446 = vst.msk [vmem:[#allocation3 + $0xc8] sm:$0xff] %vm1651, %v2430
    %2447 = vst.msk [vmem:[#allocation3 + $0xe8] sm:$0xff] %vm1651, %v2431
    %2448 = vst.msk [vmem:[#allocation3 + $0x108] sm:$0xff] %vm1651, %v2432
    %2449 = vst.msk [vmem:[#allocation3 + $0x128] sm:$0xff] %vm1651, %v2433
    %2450 = vst.msk [vmem:[#allocation3 + $0x148] sm:$0xff] %vm1651, %v2434
    %2451 = vst.msk [vmem:[#allocation3 + $0x168] sm:$0xff] %vm1651, %v2435
    %2452 = vst.msk [vmem:[#allocation3 + $0x188] sm:$0xff] %vm1651, %v2436
    %2453 = vst.msk [vmem:[#allocation3 + $0x1a8] sm:$0xff] %vm1651, %v2437
    %2454 = vst.msk [vmem:[#allocation3 + $0x1c8] sm:$0xff] %vm1651, %v2438
    %2455 = vst.msk [vmem:[#allocation3 + $0x1e8] sm:$0xff] %vm1651, %v2439
    %v2456 = vld [vmem:[%s1657 + $0x4] sm:$0xff]
    %v2457 = vld [vmem:[%s1657 + $0x14] sm:$0xff]
    %v2458 = vld [vmem:[%s1657 + $0x24] sm:$0xff]
    %v2459 = vld [vmem:[%s1657 + $0x34] sm:$0xff]
    %v2460 = vld [vmem:[%s1657 + $0x44] sm:$0xff]
    %v2461 = vld [vmem:[%s1657 + $0x54] sm:$0xff]
    %v2462 = vld [vmem:[%s1657 + $0x64] sm:$0xff]
    %v2463 = vld [vmem:[%s1657 + $0x74] sm:$0xff]
    %v2464 = vld [vmem:[%s1657 + $0xc4] sm:$0xff]
    %v2465 = vld [vmem:[%s1657 + $0xd4] sm:$0xff]
    %v2466 = vld [vmem:[%s1657 + $0xe4] sm:$0xff]
    %v2467 = vld [vmem:[%s1657 + $0xf4] sm:$0xff]
    %v2468 = vld [vmem:[%s1657 + $0x104] sm:$0xff]
    %v2469 = vld [vmem:[%s1657 + $0x114] sm:$0xff]
    %v2470 = vld [vmem:[%s1657 + $0x124] sm:$0xff]
    %v2471 = vld [vmem:[%s1657 + $0x134] sm:$0xff]
    %2488 = vrot.lane.b32.xlu0 %v2456, 16
    %v2489 = vpop.permute.xlu0 %2488
    %2490 = vrot.lane.b32.xlu0 %v2457, 16
    %v2491 = vpop.permute.xlu0 %2490
    %2492 = vrot.lane.b32.xlu0 %v2458, 16
    %v2493 = vpop.permute.xlu0 %2492
    %2494 = vrot.lane.b32.xlu0 %v2459, 16
    %v2495 = vpop.permute.xlu0 %2494
    %2496 = vrot.lane.b32.xlu0 %v2460, 16
    %v2497 = vpop.permute.xlu0 %2496
    %2498 = vrot.lane.b32.xlu0 %v2461, 16
    %v2499 = vpop.permute.xlu0 %2498
    %2500 = vrot.lane.b32.xlu0 %v2462, 16
    %v2501 = vpop.permute.xlu0 %2500
    %2502 = vrot.lane.b32.xlu0 %v2463, 16
    %v2503 = vpop.permute.xlu0 %2502
    %2504 = vrot.lane.b32.xlu0 %v2464, 16
    %v2505 = vpop.permute.xlu0 %2504
    %2506 = vrot.lane.b32.xlu0 %v2465, 16
    %v2507 = vpop.permute.xlu0 %2506
    %2508 = vrot.lane.b32.xlu0 %v2466, 16
    %v2509 = vpop.permute.xlu0 %2508
    %2510 = vrot.lane.b32.xlu0 %v2467, 16
    %v2511 = vpop.permute.xlu0 %2510
    %2512 = vrot.lane.b32.xlu0 %v2468, 16
    %v2513 = vpop.permute.xlu0 %2512
    %2514 = vrot.lane.b32.xlu0 %v2469, 16
    %v2515 = vpop.permute.xlu0 %2514
    %2516 = vrot.lane.b32.xlu0 %v2470, 16
    %v2517 = vpop.permute.xlu0 %2516
    %2518 = vrot.lane.b32.xlu0 %v2471, 16
    %v2519 = vpop.permute.xlu0 %2518
    %2536 = vst.msk [vmem:[#allocation3 + $0x8] sm:$0xff] %vm1825, %v2489
    %2537 = vst.msk [vmem:[#allocation3 + $0x28] sm:$0xff] %vm1825, %v2491
    %2538 = vst.msk [vmem:[#allocation3 + $0x48] sm:$0xff] %vm1825, %v2493
    %2539 = vst.msk [vmem:[#allocation3 + $0x68] sm:$0xff] %vm1825, %v2495
    %2540 = vst.msk [vmem:[#allocation3 + $0x88] sm:$0xff] %vm1825, %v2497
    %2541 = vst.msk [vmem:[#allocation3 + $0xa8] sm:$0xff] %vm1825, %v2499
    %2542 = vst.msk [vmem:[#allocation3 + $0xc8] sm:$0xff] %vm1825, %v2501
    %2543 = vst.msk [vmem:[#allocation3 + $0xe8] sm:$0xff] %vm1825, %v2503
    %2544 = vst.msk [vmem:[#allocation3 + $0x108] sm:$0xff] %vm1825, %v2505
    %2545 = vst.msk [vmem:[#allocation3 + $0x128] sm:$0xff] %vm1825, %v2507
    %2546 = vst.msk [vmem:[#allocation3 + $0x148] sm:$0xff] %vm1825, %v2509
    %2547 = vst.msk [vmem:[#allocation3 + $0x168] sm:$0xff] %vm1825, %v2511
    %2548 = vst.msk [vmem:[#allocation3 + $0x188] sm:$0xff] %vm1825, %v2513
    %2549 = vst.msk [vmem:[#allocation3 + $0x1a8] sm:$0xff] %vm1825, %v2515
    %2550 = vst.msk [vmem:[#allocation3 + $0x1c8] sm:$0xff] %vm1825, %v2517
    %2551 = vst.msk [vmem:[#allocation3 + $0x1e8] sm:$0xff] %vm1825, %v2519
    %v2552 = vld [vmem:[%s1663] sm:$0xff]
    %v2553 = vld [vmem:[%s1663 + $0x10] sm:$0xff]
    %v2554 = vld [vmem:[%s1663 + $0x20] sm:$0xff]
    %v2555 = vld [vmem:[%s1663 + $0x30] sm:$0xff]
    %v2556 = vld [vmem:[%s1663 + $0x40] sm:$0xff]
    %v2557 = vld [vmem:[%s1663 + $0x50] sm:$0xff]
    %v2558 = vld [vmem:[%s1663 + $0x60] sm:$0xff]
    %v2559 = vld [vmem:[%s1663 + $0x70] sm:$0xff]
    %v2560 = vld [vmem:[%s1663 + $0xc0] sm:$0xff]
    %v2561 = vld [vmem:[%s1663 + $0xd0] sm:$0xff]
    %v2562 = vld [vmem:[%s1663 + $0xe0] sm:$0xff]
    %v2563 = vld [vmem:[%s1663 + $0xf0] sm:$0xff]
    %v2564 = vld [vmem:[%s1663 + $0x100] sm:$0xff]
    %v2565 = vld [vmem:[%s1663 + $0x110] sm:$0xff]
    %v2566 = vld [vmem:[%s1663 + $0x120] sm:$0xff]
    %v2567 = vld [vmem:[%s1663 + $0x130] sm:$0xff]
    %2584 = vrot.lane.b32.xlu0 %v2552, 32
    %v2585 = vpop.permute.xlu0 %2584
    %2586 = vrot.lane.b32.xlu0 %v2553, 32
    %v2587 = vpop.permute.xlu0 %2586
    %2588 = vrot.lane.b32.xlu0 %v2554, 32
    %v2589 = vpop.permute.xlu0 %2588
    %2590 = vrot.lane.b32.xlu0 %v2555, 32
    %v2591 = vpop.permute.xlu0 %2590
    %2592 = vrot.lane.b32.xlu0 %v2556, 32
    %v2593 = vpop.permute.xlu0 %2592
    %2594 = vrot.lane.b32.xlu0 %v2557, 32
    %v2595 = vpop.permute.xlu0 %2594
    %2596 = vrot.lane.b32.xlu0 %v2558, 32
    %v2597 = vpop.permute.xlu0 %2596
    %2598 = vrot.lane.b32.xlu0 %v2559, 32
    %v2599 = vpop.permute.xlu0 %2598
    %2600 = vrot.lane.b32.xlu0 %v2560, 32
    %v2601 = vpop.permute.xlu0 %2600
    %2602 = vrot.lane.b32.xlu0 %v2561, 32
    %v2603 = vpop.permute.xlu0 %2602
    %2604 = vrot.lane.b32.xlu0 %v2562, 32
    %v2605 = vpop.permute.xlu0 %2604
    %2606 = vrot.lane.b32.xlu0 %v2563, 32
    %v2607 = vpop.permute.xlu0 %2606
    %2608 = vrot.lane.b32.xlu0 %v2564, 32
    %v2609 = vpop.permute.xlu0 %2608
    %2610 = vrot.lane.b32.xlu0 %v2565, 32
    %v2611 = vpop.permute.xlu0 %2610
    %2612 = vrot.lane.b32.xlu0 %v2566, 32
    %v2613 = vpop.permute.xlu0 %2612
    %2614 = vrot.lane.b32.xlu0 %v2567, 32
    %v2615 = vpop.permute.xlu0 %2614
    %2632 = vst.msk [vmem:[#allocation3 + $0x8] sm:$0xff] %vm1922, %v2585
    %2633 = vst.msk [vmem:[#allocation3 + $0x28] sm:$0xff] %vm1922, %v2587
    %2634 = vst.msk [vmem:[#allocation3 + $0x48] sm:$0xff] %vm1922, %v2589
    %2635 = vst.msk [vmem:[#allocation3 + $0x68] sm:$0xff] %vm1922, %v2591
    %2636 = vst.msk [vmem:[#allocation3 + $0x88] sm:$0xff] %vm1922, %v2593
    %2637 = vst.msk [vmem:[#allocation3 + $0xa8] sm:$0xff] %vm1922, %v2595
    %2638 = vst.msk [vmem:[#allocation3 + $0xc8] sm:$0xff] %vm1922, %v2597
    %2639 = vst.msk [vmem:[#allocation3 + $0xe8] sm:$0xff] %vm1922, %v2599
    %2640 = vst.msk [vmem:[#allocation3 + $0x108] sm:$0xff] %vm1922, %v2601
    %2641 = vst.msk [vmem:[#allocation3 + $0x128] sm:$0xff] %vm1922, %v2603
    %2642 = vst.msk [vmem:[#allocation3 + $0x148] sm:$0xff] %vm1922, %v2605
    %2643 = vst.msk [vmem:[#allocation3 + $0x168] sm:$0xff] %vm1922, %v2607
    %2644 = vst.msk [vmem:[#allocation3 + $0x188] sm:$0xff] %vm1922, %v2609
    %2645 = vst.msk [vmem:[#allocation3 + $0x1a8] sm:$0xff] %vm1922, %v2611
    %2646 = vst.msk [vmem:[#allocation3 + $0x1c8] sm:$0xff] %vm1922, %v2613
    %2647 = vst.msk [vmem:[#allocation3 + $0x1e8] sm:$0xff] %vm1922, %v2615
    %v2648 = vld [vmem:[%s1663 + $0x1] sm:$0xff]
    %v2649 = vld [vmem:[%s1663 + $0x11] sm:$0xff]
    %v2650 = vld [vmem:[%s1663 + $0x21] sm:$0xff]
    %v2651 = vld [vmem:[%s1663 + $0x31] sm:$0xff]
    %v2652 = vld [vmem:[%s1663 + $0x41] sm:$0xff]
    %v2653 = vld [vmem:[%s1663 + $0x51] sm:$0xff]
    %v2654 = vld [vmem:[%s1663 + $0x61] sm:$0xff]
    %v2655 = vld [vmem:[%s1663 + $0x71] sm:$0xff]
    %v2656 = vld [vmem:[%s1663 + $0xc1] sm:$0xff]
    %v2657 = vld [vmem:[%s1663 + $0xd1] sm:$0xff]
    %v2658 = vld [vmem:[%s1663 + $0xe1] sm:$0xff]
    %v2659 = vld [vmem:[%s1663 + $0xf1] sm:$0xff]
    %v2660 = vld [vmem:[%s1663 + $0x101] sm:$0xff]
    %v2661 = vld [vmem:[%s1663 + $0x111] sm:$0xff]
    %v2662 = vld [vmem:[%s1663 + $0x121] sm:$0xff]
    %v2663 = vld [vmem:[%s1663 + $0x131] sm:$0xff]
    %2680 = vrot.lane.b32.xlu0 %v2648, 48
    %v2681 = vpop.permute.xlu0 %2680
    %2682 = vrot.lane.b32.xlu0 %v2649, 48
    %v2683 = vpop.permute.xlu0 %2682
    %2684 = vrot.lane.b32.xlu0 %v2650, 48
    %v2685 = vpop.permute.xlu0 %2684
    %2686 = vrot.lane.b32.xlu0 %v2651, 48
    %v2687 = vpop.permute.xlu0 %2686
    %2688 = vrot.lane.b32.xlu0 %v2652, 48
    %v2689 = vpop.permute.xlu0 %2688
    %2690 = vrot.lane.b32.xlu0 %v2653, 48
    %v2691 = vpop.permute.xlu0 %2690
    %2692 = vrot.lane.b32.xlu0 %v2654, 48
    %v2693 = vpop.permute.xlu0 %2692
    %2694 = vrot.lane.b32.xlu0 %v2655, 48
    %v2695 = vpop.permute.xlu0 %2694
    %2696 = vrot.lane.b32.xlu0 %v2656, 48
    %v2697 = vpop.permute.xlu0 %2696
    %2698 = vrot.lane.b32.xlu0 %v2657, 48
    %v2699 = vpop.permute.xlu0 %2698
    %2700 = vrot.lane.b32.xlu0 %v2658, 48
    %v2701 = vpop.permute.xlu0 %2700
    %2702 = vrot.lane.b32.xlu0 %v2659, 48
    %v2703 = vpop.permute.xlu0 %2702
    %2704 = vrot.lane.b32.xlu0 %v2660, 48
    %v2705 = vpop.permute.xlu0 %2704
    %2706 = vrot.lane.b32.xlu0 %v2661, 48
    %v2707 = vpop.permute.xlu0 %2706
    %2708 = vrot.lane.b32.xlu0 %v2662, 48
    %v2709 = vpop.permute.xlu0 %2708
    %2710 = vrot.lane.b32.xlu0 %v2663, 48
    %v2711 = vpop.permute.xlu0 %2710
    %2728 = vst.msk [vmem:[#allocation3 + $0x8] sm:$0xff] %vm2019, %v2681
    %2729 = vst.msk [vmem:[#allocation3 + $0x28] sm:$0xff] %vm2019, %v2683
    %2730 = vst.msk [vmem:[#allocation3 + $0x48] sm:$0xff] %vm2019, %v2685
    %2731 = vst.msk [vmem:[#allocation3 + $0x68] sm:$0xff] %vm2019, %v2687
    %2732 = vst.msk [vmem:[#allocation3 + $0x88] sm:$0xff] %vm2019, %v2689
    %2733 = vst.msk [vmem:[#allocation3 + $0xa8] sm:$0xff] %vm2019, %v2691
    %2734 = vst.msk [vmem:[#allocation3 + $0xc8] sm:$0xff] %vm2019, %v2693
    %2735 = vst.msk [vmem:[#allocation3 + $0xe8] sm:$0xff] %vm2019, %v2695
    %2736 = vst.msk [vmem:[#allocation3 + $0x108] sm:$0xff] %vm2019, %v2697
    %2737 = vst.msk [vmem:[#allocation3 + $0x128] sm:$0xff] %vm2019, %v2699
    %2738 = vst.msk [vmem:[#allocation3 + $0x148] sm:$0xff] %vm2019, %v2701
    %2739 = vst.msk [vmem:[#allocation3 + $0x168] sm:$0xff] %vm2019, %v2703
    %2740 = vst.msk [vmem:[#allocation3 + $0x188] sm:$0xff] %vm2019, %v2705
    %2741 = vst.msk [vmem:[#allocation3 + $0x1a8] sm:$0xff] %vm2019, %v2707
    %2742 = vst.msk [vmem:[#allocation3 + $0x1c8] sm:$0xff] %vm2019, %v2709
    %2743 = vst.msk [vmem:[#allocation3 + $0x1e8] sm:$0xff] %vm2019, %v2711
    %v2744 = vld [vmem:[%s1663 + $0x2] sm:$0xff]
    %v2745 = vld [vmem:[%s1663 + $0x12] sm:$0xff]
    %v2746 = vld [vmem:[%s1663 + $0x22] sm:$0xff]
    %v2747 = vld [vmem:[%s1663 + $0x32] sm:$0xff]
    %v2748 = vld [vmem:[%s1663 + $0x42] sm:$0xff]
    %v2749 = vld [vmem:[%s1663 + $0x52] sm:$0xff]
    %v2750 = vld [vmem:[%s1663 + $0x62] sm:$0xff]
    %v2751 = vld [vmem:[%s1663 + $0x72] sm:$0xff]
    %v2752 = vld [vmem:[%s1663 + $0xc2] sm:$0xff]
    %v2753 = vld [vmem:[%s1663 + $0xd2] sm:$0xff]
    %v2754 = vld [vmem:[%s1663 + $0xe2] sm:$0xff]
    %v2755 = vld [vmem:[%s1663 + $0xf2] sm:$0xff]
    %v2756 = vld [vmem:[%s1663 + $0x102] sm:$0xff]
    %v2757 = vld [vmem:[%s1663 + $0x112] sm:$0xff]
    %v2758 = vld [vmem:[%s1663 + $0x122] sm:$0xff]
    %v2759 = vld [vmem:[%s1663 + $0x132] sm:$0xff]
    %2776 = vrot.lane.b32.xlu0 %v2744, 64
    %v2777 = vpop.permute.xlu0 %2776
    %2778 = vrot.lane.b32.xlu0 %v2745, 64
    %v2779 = vpop.permute.xlu0 %2778
    %2780 = vrot.lane.b32.xlu0 %v2746, 64
    %v2781 = vpop.permute.xlu0 %2780
    %2782 = vrot.lane.b32.xlu0 %v2747, 64
    %v2783 = vpop.permute.xlu0 %2782
    %2784 = vrot.lane.b32.xlu0 %v2748, 64
    %v2785 = vpop.permute.xlu0 %2784
    %2786 = vrot.lane.b32.xlu0 %v2749, 64
    %v2787 = vpop.permute.xlu0 %2786
    %2788 = vrot.lane.b32.xlu0 %v2750, 64
    %v2789 = vpop.permute.xlu0 %2788
    %2790 = vrot.lane.b32.xlu0 %v2751, 64
    %v2791 = vpop.permute.xlu0 %2790
    %2792 = vrot.lane.b32.xlu0 %v2752, 64
    %v2793 = vpop.permute.xlu0 %2792
    %2794 = vrot.lane.b32.xlu0 %v2753, 64
    %v2795 = vpop.permute.xlu0 %2794
    %2796 = vrot.lane.b32.xlu0 %v2754, 64
    %v2797 = vpop.permute.xlu0 %2796
    %2798 = vrot.lane.b32.xlu0 %v2755, 64
    %v2799 = vpop.permute.xlu0 %2798
    %2800 = vrot.lane.b32.xlu0 %v2756, 64
    %v2801 = vpop.permute.xlu0 %2800
    %2802 = vrot.lane.b32.xlu0 %v2757, 64
    %v2803 = vpop.permute.xlu0 %2802
    %2804 = vrot.lane.b32.xlu0 %v2758, 64
    %v2805 = vpop.permute.xlu0 %2804
    %2806 = vrot.lane.b32.xlu0 %v2759, 64
    %v2807 = vpop.permute.xlu0 %2806
    %2824 = vst.msk [vmem:[#allocation3 + $0x8] sm:$0xff] %vm2116, %v2777
    %2825 = vst.msk [vmem:[#allocation3 + $0x28] sm:$0xff] %vm2116, %v2779
    %2826 = vst.msk [vmem:[#allocation3 + $0x48] sm:$0xff] %vm2116, %v2781
    %2827 = vst.msk [vmem:[#allocation3 + $0x68] sm:$0xff] %vm2116, %v2783
    %2828 = vst.msk [vmem:[#allocation3 + $0x88] sm:$0xff] %vm2116, %v2785
    %2829 = vst.msk [vmem:[#allocation3 + $0xa8] sm:$0xff] %vm2116, %v2787
    %2830 = vst.msk [vmem:[#allocation3 + $0xc8] sm:$0xff] %vm2116, %v2789
    %2831 = vst.msk [vmem:[#allocation3 + $0xe8] sm:$0xff] %vm2116, %v2791
    %2832 = vst.msk [vmem:[#allocation3 + $0x108] sm:$0xff] %vm2116, %v2793
    %2833 = vst.msk [vmem:[#allocation3 + $0x128] sm:$0xff] %vm2116, %v2795
    %2834 = vst.msk [vmem:[#allocation3 + $0x148] sm:$0xff] %vm2116, %v2797
    %2835 = vst.msk [vmem:[#allocation3 + $0x168] sm:$0xff] %vm2116, %v2799
    %2836 = vst.msk [vmem:[#allocation3 + $0x188] sm:$0xff] %vm2116, %v2801
    %2837 = vst.msk [vmem:[#allocation3 + $0x1a8] sm:$0xff] %vm2116, %v2803
    %2838 = vst.msk [vmem:[#allocation3 + $0x1c8] sm:$0xff] %vm2116, %v2805
    %2839 = vst.msk [vmem:[#allocation3 + $0x1e8] sm:$0xff] %vm2116, %v2807
    %v2840 = vld [vmem:[%s1663 + $0x3] sm:$0xff]
    %v2841 = vld [vmem:[%s1663 + $0x13] sm:$0xff]
    %v2842 = vld [vmem:[%s1663 + $0x23] sm:$0xff]
    %v2843 = vld [vmem:[%s1663 + $0x33] sm:$0xff]
    %v2844 = vld [vmem:[%s1663 + $0x43] sm:$0xff]
    %v2845 = vld [vmem:[%s1663 + $0x53] sm:$0xff]
    %v2846 = vld [vmem:[%s1663 + $0x63] sm:$0xff]
    %v2847 = vld [vmem:[%s1663 + $0x73] sm:$0xff]
    %v2848 = vld [vmem:[%s1663 + $0xc3] sm:$0xff]
    %v2849 = vld [vmem:[%s1663 + $0xd3] sm:$0xff]
    %v2850 = vld [vmem:[%s1663 + $0xe3] sm:$0xff]
    %v2851 = vld [vmem:[%s1663 + $0xf3] sm:$0xff]
    %v2852 = vld [vmem:[%s1663 + $0x103] sm:$0xff]
    %v2853 = vld [vmem:[%s1663 + $0x113] sm:$0xff]
    %v2854 = vld [vmem:[%s1663 + $0x123] sm:$0xff]
    %v2855 = vld [vmem:[%s1663 + $0x133] sm:$0xff]
    %2872 = vrot.lane.b32.xlu0 %v2840, 80
    %v2873 = vpop.permute.xlu0 %2872
    %2874 = vrot.lane.b32.xlu0 %v2841, 80
    %v2875 = vpop.permute.xlu0 %2874
    %2876 = vrot.lane.b32.xlu0 %v2842, 80
    %v2877 = vpop.permute.xlu0 %2876
    %2878 = vrot.lane.b32.xlu0 %v2843, 80
    %v2879 = vpop.permute.xlu0 %2878
    %2880 = vrot.lane.b32.xlu0 %v2844, 80
    %v2881 = vpop.permute.xlu0 %2880
    %2882 = vrot.lane.b32.xlu0 %v2845, 80
    %v2883 = vpop.permute.xlu0 %2882
    %2884 = vrot.lane.b32.xlu0 %v2846, 80
    %v2885 = vpop.permute.xlu0 %2884
    %2886 = vrot.lane.b32.xlu0 %v2847, 80
    %v2887 = vpop.permute.xlu0 %2886
    %2888 = vrot.lane.b32.xlu0 %v2848, 80
    %v2889 = vpop.permute.xlu0 %2888
    %2890 = vrot.lane.b32.xlu0 %v2849, 80
    %v2891 = vpop.permute.xlu0 %2890
    %2892 = vrot.lane.b32.xlu0 %v2850, 80
    %v2893 = vpop.permute.xlu0 %2892
    %2894 = vrot.lane.b32.xlu0 %v2851, 80
    %v2895 = vpop.permute.xlu0 %2894
    %2896 = vrot.lane.b32.xlu0 %v2852, 80
    %v2897 = vpop.permute.xlu0 %2896
    %2898 = vrot.lane.b32.xlu0 %v2853, 80
    %v2899 = vpop.permute.xlu0 %2898
    %2900 = vrot.lane.b32.xlu0 %v2854, 80
    %v2901 = vpop.permute.xlu0 %2900
    %2902 = vrot.lane.b32.xlu0 %v2855, 80
    %v2903 = vpop.permute.xlu0 %2902
    %2920 = vst.msk [vmem:[#allocation3 + $0x8] sm:$0xff] %vm2213, %v2873
    %2921 = vst.msk [vmem:[#allocation3 + $0x28] sm:$0xff] %vm2213, %v2875
    %2922 = vst.msk [vmem:[#allocation3 + $0x48] sm:$0xff] %vm2213, %v2877
    %2923 = vst.msk [vmem:[#allocation3 + $0x68] sm:$0xff] %vm2213, %v2879
    %2924 = vst.msk [vmem:[#allocation3 + $0x88] sm:$0xff] %vm2213, %v2881
    %2925 = vst.msk [vmem:[#allocation3 + $0xa8] sm:$0xff] %vm2213, %v2883
    %2926 = vst.msk [vmem:[#allocation3 + $0xc8] sm:$0xff] %vm2213, %v2885
    %2927 = vst.msk [vmem:[#allocation3 + $0xe8] sm:$0xff] %vm2213, %v2887
    %2928 = vst.msk [vmem:[#allocation3 + $0x108] sm:$0xff] %vm2213, %v2889
    %2929 = vst.msk [vmem:[#allocation3 + $0x128] sm:$0xff] %vm2213, %v2891
    %2930 = vst.msk [vmem:[#allocation3 + $0x148] sm:$0xff] %vm2213, %v2893
    %2931 = vst.msk [vmem:[#allocation3 + $0x168] sm:$0xff] %vm2213, %v2895
    %2932 = vst.msk [vmem:[#allocation3 + $0x188] sm:$0xff] %vm2213, %v2897
    %2933 = vst.msk [vmem:[#allocation3 + $0x1a8] sm:$0xff] %vm2213, %v2899
    %2934 = vst.msk [vmem:[#allocation3 + $0x1c8] sm:$0xff] %vm2213, %v2901
    %2935 = vst.msk [vmem:[#allocation3 + $0x1e8] sm:$0xff] %vm2213, %v2903
    %v2936 = vld [vmem:[%s1663 + $0x4] sm:$0xff]
    %v2937 = vld [vmem:[%s1663 + $0x14] sm:$0xff]
    %v2938 = vld [vmem:[%s1663 + $0x24] sm:$0xff]
    %v2939 = vld [vmem:[%s1663 + $0x34] sm:$0xff]
    %v2940 = vld [vmem:[%s1663 + $0x44] sm:$0xff]
    %v2941 = vld [vmem:[%s1663 + $0x54] sm:$0xff]
    %v2942 = vld [vmem:[%s1663 + $0x64] sm:$0xff]
    %v2943 = vld [vmem:[%s1663 + $0x74] sm:$0xff]
    %v2944 = vld [vmem:[%s1663 + $0xc4] sm:$0xff]
    %v2945 = vld [vmem:[%s1663 + $0xd4] sm:$0xff]
    %v2946 = vld [vmem:[%s1663 + $0xe4] sm:$0xff]
    %v2947 = vld [vmem:[%s1663 + $0xf4] sm:$0xff]
    %v2948 = vld [vmem:[%s1663 + $0x104] sm:$0xff]
    %v2949 = vld [vmem:[%s1663 + $0x114] sm:$0xff]
    %v2950 = vld [vmem:[%s1663 + $0x124] sm:$0xff]
    %v2951 = vld [vmem:[%s1663 + $0x134] sm:$0xff]
    %2968 = vrot.lane.b32.xlu0 %v2936, 96
    %v2969 = vpop.permute.xlu0 %2968
    %2970 = vrot.lane.b32.xlu0 %v2937, 96
    %v2971 = vpop.permute.xlu0 %2970
    %2972 = vrot.lane.b32.xlu0 %v2938, 96
    %v2973 = vpop.permute.xlu0 %2972
    %2974 = vrot.lane.b32.xlu0 %v2939, 96
    %v2975 = vpop.permute.xlu0 %2974
    %2976 = vrot.lane.b32.xlu0 %v2940, 96
    %v2977 = vpop.permute.xlu0 %2976
    %2978 = vrot.lane.b32.xlu0 %v2941, 96
    %v2979 = vpop.permute.xlu0 %2978
    %2980 = vrot.lane.b32.xlu0 %v2942, 96
    %v2981 = vpop.permute.xlu0 %2980
    %2982 = vrot.lane.b32.xlu0 %v2943, 96
    %v2983 = vpop.permute.xlu0 %2982
    %2984 = vrot.lane.b32.xlu0 %v2944, 96
    %v2985 = vpop.permute.xlu0 %2984
    %2986 = vrot.lane.b32.xlu0 %v2945, 96
    %v2987 = vpop.permute.xlu0 %2986
    %2988 = vrot.lane.b32.xlu0 %v2946, 96
    %v2989 = vpop.permute.xlu0 %2988
    %2990 = vrot.lane.b32.xlu0 %v2947, 96
    %v2991 = vpop.permute.xlu0 %2990
    %2992 = vrot.lane.b32.xlu0 %v2948, 96
    %v2993 = vpop.permute.xlu0 %2992
    %2994 = vrot.lane.b32.xlu0 %v2949, 96
    %v2995 = vpop.permute.xlu0 %2994
    %2996 = vrot.lane.b32.xlu0 %v2950, 96
    %v2997 = vpop.permute.xlu0 %2996
    %2998 = vrot.lane.b32.xlu0 %v2951, 96
    %v2999 = vpop.permute.xlu0 %2998
    %3016 = vst.msk [vmem:[#allocation3 + $0x8] sm:$0xff] %vm2310, %v2969
    %3017 = vst.msk [vmem:[#allocation3 + $0x28] sm:$0xff] %vm2310, %v2971
    %3018 = vst.msk [vmem:[#allocation3 + $0x48] sm:$0xff] %vm2310, %v2973
    %3019 = vst.msk [vmem:[#allocation3 + $0x68] sm:$0xff] %vm2310, %v2975
    %3020 = vst.msk [vmem:[#allocation3 + $0x88] sm:$0xff] %vm2310, %v2977
    %3021 = vst.msk [vmem:[#allocation3 + $0xa8] sm:$0xff] %vm2310, %v2979
    %3022 = vst.msk [vmem:[#allocation3 + $0xc8] sm:$0xff] %vm2310, %v2981
    %3023 = vst.msk [vmem:[#allocation3 + $0xe8] sm:$0xff] %vm2310, %v2983
    %3024 = vst.msk [vmem:[#allocation3 + $0x108] sm:$0xff] %vm2310, %v2985
    %3025 = vst.msk [vmem:[#allocation3 + $0x128] sm:$0xff] %vm2310, %v2987
    %3026 = vst.msk [vmem:[#allocation3 + $0x148] sm:$0xff] %vm2310, %v2989
    %3027 = vst.msk [vmem:[#allocation3 + $0x168] sm:$0xff] %vm2310, %v2991
    %3028 = vst.msk [vmem:[#allocation3 + $0x188] sm:$0xff] %vm2310, %v2993
    %3029 = vst.msk [vmem:[#allocation3 + $0x1a8] sm:$0xff] %vm2310, %v2995
    %3030 = vst.msk [vmem:[#allocation3 + $0x1c8] sm:$0xff] %vm2310, %v2997
    %3031 = vst.msk [vmem:[#allocation3 + $0x1e8] sm:$0xff] %vm2310, %v2999
    %v3032 = vld [vmem:[%s1668] sm:$0xff]
    %v3033 = vld [vmem:[%s1668 + $0x10] sm:$0xff]
    %v3034 = vld [vmem:[%s1668 + $0x20] sm:$0xff]
    %v3035 = vld [vmem:[%s1668 + $0x30] sm:$0xff]
    %v3036 = vld [vmem:[%s1668 + $0x40] sm:$0xff]
    %v3037 = vld [vmem:[%s1668 + $0x50] sm:$0xff]
    %v3038 = vld [vmem:[%s1668 + $0x60] sm:$0xff]
    %v3039 = vld [vmem:[%s1668 + $0x70] sm:$0xff]
    %v3040 = vld [vmem:[%s1668 + $0xc0] sm:$0xff]
    %v3041 = vld [vmem:[%s1668 + $0xd0] sm:$0xff]
    %v3042 = vld [vmem:[%s1668 + $0xe0] sm:$0xff]
    %v3043 = vld [vmem:[%s1668 + $0xf0] sm:$0xff]
    %v3044 = vld [vmem:[%s1668 + $0x100] sm:$0xff]
    %v3045 = vld [vmem:[%s1668 + $0x110] sm:$0xff]
    %v3046 = vld [vmem:[%s1668 + $0x120] sm:$0xff]
    %v3047 = vld [vmem:[%s1668 + $0x130] sm:$0xff]
    %3064 = vrot.lane.b32.xlu0 %v3032, 112
    %v3065 = vpop.permute.xlu0 %3064
    %3066 = vrot.lane.b32.xlu0 %v3033, 112
    %v3067 = vpop.permute.xlu0 %3066
    %3068 = vrot.lane.b32.xlu0 %v3034, 112
    %v3069 = vpop.permute.xlu0 %3068
    %3070 = vrot.lane.b32.xlu0 %v3035, 112
    %v3071 = vpop.permute.xlu0 %3070
    %3072 = vrot.lane.b32.xlu0 %v3036, 112
    %v3073 = vpop.permute.xlu0 %3072
    %3074 = vrot.lane.b32.xlu0 %v3037, 112
    %v3075 = vpop.permute.xlu0 %3074
    %3076 = vrot.lane.b32.xlu0 %v3038, 112
    %v3077 = vpop.permute.xlu0 %3076
    %3078 = vrot.lane.b32.xlu0 %v3039, 112
    %v3079 = vpop.permute.xlu0 %3078
    %3080 = vrot.lane.b32.xlu0 %v3040, 112
    %v3081 = vpop.permute.xlu0 %3080
    %3082 = vrot.lane.b32.xlu0 %v3041, 112
    %v3083 = vpop.permute.xlu0 %3082
    %3084 = vrot.lane.b32.xlu0 %v3042, 112
    %v3085 = vpop.permute.xlu0 %3084
    %3086 = vrot.lane.b32.xlu0 %v3043, 112
    %v3087 = vpop.permute.xlu0 %3086
    %3088 = vrot.lane.b32.xlu0 %v3044, 112
    %v3089 = vpop.permute.xlu0 %3088
    %3090 = vrot.lane.b32.xlu0 %v3045, 112
    %v3091 = vpop.permute.xlu0 %3090
    %3092 = vrot.lane.b32.xlu0 %v3046, 112
    %v3093 = vpop.permute.xlu0 %3092
    %3094 = vrot.lane.b32.xlu0 %v3047, 112
    %v3095 = vpop.permute.xlu0 %3094
    %3112 = vst.msk [vmem:[#allocation3 + $0x8] sm:$0xff] %vm2407, %v3065
    %3113 = vst.msk [vmem:[#allocation3 + $0x28] sm:$0xff] %vm2407, %v3067
    %3114 = vst.msk [vmem:[#allocation3 + $0x48] sm:$0xff] %vm2407, %v3069
    %3115 = vst.msk [vmem:[#allocation3 + $0x68] sm:$0xff] %vm2407, %v3071
    %3116 = vst.msk [vmem:[#allocation3 + $0x88] sm:$0xff] %vm2407, %v3073
    %3117 = vst.msk [vmem:[#allocation3 + $0xa8] sm:$0xff] %vm2407, %v3075
    %3118 = vst.msk [vmem:[#allocation3 + $0xc8] sm:$0xff] %vm2407, %v3077
    %3119 = vst.msk [vmem:[#allocation3 + $0xe8] sm:$0xff] %vm2407, %v3079
    %3120 = vst.msk [vmem:[#allocation3 + $0x108] sm:$0xff] %vm2407, %v3081
    %3121 = vst.msk [vmem:[#allocation3 + $0x128] sm:$0xff] %vm2407, %v3083
    %3122 = vst.msk [vmem:[#allocation3 + $0x148] sm:$0xff] %vm2407, %v3085
    %3123 = vst.msk [vmem:[#allocation3 + $0x168] sm:$0xff] %vm2407, %v3087
    %3124 = vst.msk [vmem:[#allocation3 + $0x188] sm:$0xff] %vm2407, %v3089
    %3125 = vst.msk [vmem:[#allocation3 + $0x1a8] sm:$0xff] %vm2407, %v3091
    %3126 = vst.msk [vmem:[#allocation3 + $0x1c8] sm:$0xff] %vm2407, %v3093
    %3127 = vst.msk [vmem:[#allocation3 + $0x1e8] sm:$0xff] %vm2407, %v3095
    %v3128 = vld [vmem:[%s1668 + $0x1] sm:$0xff]
    %v3129 = vld [vmem:[%s1668 + $0x11] sm:$0xff]
    %v3130 = vld [vmem:[%s1668 + $0x21] sm:$0xff]
    %v3131 = vld [vmem:[%s1668 + $0x31] sm:$0xff]
    %v3132 = vld [vmem:[%s1668 + $0x41] sm:$0xff]
    %v3133 = vld [vmem:[%s1668 + $0x51] sm:$0xff]
    %v3134 = vld [vmem:[%s1668 + $0x61] sm:$0xff]
    %v3135 = vld [vmem:[%s1668 + $0x71] sm:$0xff]
    %v3136 = vld [vmem:[%s1668 + $0xc1] sm:$0xff]
    %v3137 = vld [vmem:[%s1668 + $0xd1] sm:$0xff]
    %v3138 = vld [vmem:[%s1668 + $0xe1] sm:$0xff]
    %v3139 = vld [vmem:[%s1668 + $0xf1] sm:$0xff]
    %v3140 = vld [vmem:[%s1668 + $0x101] sm:$0xff]
    %v3141 = vld [vmem:[%s1668 + $0x111] sm:$0xff]
    %v3142 = vld [vmem:[%s1668 + $0x121] sm:$0xff]
    %v3143 = vld [vmem:[%s1668 + $0x131] sm:$0xff]
    %3144 = vst.msk [vmem:[#allocation3 + $0x10] sm:$0xff] %vm1651, %v3128
    %3145 = vst.msk [vmem:[#allocation3 + $0x30] sm:$0xff] %vm1651, %v3129
    %3146 = vst.msk [vmem:[#allocation3 + $0x50] sm:$0xff] %vm1651, %v3130
    %3147 = vst.msk [vmem:[#allocation3 + $0x70] sm:$0xff] %vm1651, %v3131
    %3148 = vst.msk [vmem:[#allocation3 + $0x90] sm:$0xff] %vm1651, %v3132
    %3149 = vst.msk [vmem:[#allocation3 + $0xb0] sm:$0xff] %vm1651, %v3133
    %3150 = vst.msk [vmem:[#allocation3 + $0xd0] sm:$0xff] %vm1651, %v3134
    %3151 = vst.msk [vmem:[#allocation3 + $0xf0] sm:$0xff] %vm1651, %v3135
    %3152 = vst.msk [vmem:[#allocation3 + $0x110] sm:$0xff] %vm1651, %v3136
    %3153 = vst.msk [vmem:[#allocation3 + $0x130] sm:$0xff] %vm1651, %v3137
    %3154 = vst.msk [vmem:[#allocation3 + $0x150] sm:$0xff] %vm1651, %v3138
    %3155 = vst.msk [vmem:[#allocation3 + $0x170] sm:$0xff] %vm1651, %v3139
    %3156 = vst.msk [vmem:[#allocation3 + $0x190] sm:$0xff] %vm1651, %v3140
    %3157 = vst.msk [vmem:[#allocation3 + $0x1b0] sm:$0xff] %vm1651, %v3141
    %3158 = vst.msk [vmem:[#allocation3 + $0x1d0] sm:$0xff] %vm1651, %v3142
    %3159 = vst.msk [vmem:[#allocation3 + $0x1f0] sm:$0xff] %vm1651, %v3143
    %v3160 = vld [vmem:[%s1668 + $0x2] sm:$0xff]
    %v3161 = vld [vmem:[%s1668 + $0x12] sm:$0xff]
    %v3162 = vld [vmem:[%s1668 + $0x22] sm:$0xff]
    %v3163 = vld [vmem:[%s1668 + $0x32] sm:$0xff]
    %v3164 = vld [vmem:[%s1668 + $0x42] sm:$0xff]
    %v3165 = vld [vmem:[%s1668 + $0x52] sm:$0xff]
    %v3166 = vld [vmem:[%s1668 + $0x62] sm:$0xff]
    %v3167 = vld [vmem:[%s1668 + $0x72] sm:$0xff]
    %v3168 = vld [vmem:[%s1668 + $0xc2] sm:$0xff]
    %v3169 = vld [vmem:[%s1668 + $0xd2] sm:$0xff]
    %v3170 = vld [vmem:[%s1668 + $0xe2] sm:$0xff]
    %v3171 = vld [vmem:[%s1668 + $0xf2] sm:$0xff]
    %v3172 = vld [vmem:[%s1668 + $0x102] sm:$0xff]
    %v3173 = vld [vmem:[%s1668 + $0x112] sm:$0xff]
    %v3174 = vld [vmem:[%s1668 + $0x122] sm:$0xff]
    %v3175 = vld [vmem:[%s1668 + $0x132] sm:$0xff]
    %3192 = vrot.lane.b32.xlu0 %v3160, 16
    %v3193 = vpop.permute.xlu0 %3192
    %3194 = vrot.lane.b32.xlu0 %v3161, 16
    %v3195 = vpop.permute.xlu0 %3194
    %3196 = vrot.lane.b32.xlu0 %v3162, 16
    %v3197 = vpop.permute.xlu0 %3196
    %3198 = vrot.lane.b32.xlu0 %v3163, 16
    %v3199 = vpop.permute.xlu0 %3198
    %3200 = vrot.lane.b32.xlu0 %v3164, 16
    %v3201 = vpop.permute.xlu0 %3200
    %3202 = vrot.lane.b32.xlu0 %v3165, 16
    %v3203 = vpop.permute.xlu0 %3202
    %3204 = vrot.lane.b32.xlu0 %v3166, 16
    %v3205 = vpop.permute.xlu0 %3204
    %3206 = vrot.lane.b32.xlu0 %v3167, 16
    %v3207 = vpop.permute.xlu0 %3206
    %3208 = vrot.lane.b32.xlu0 %v3168, 16
    %v3209 = vpop.permute.xlu0 %3208
    %3210 = vrot.lane.b32.xlu0 %v3169, 16
    %v3211 = vpop.permute.xlu0 %3210
    %3212 = vrot.lane.b32.xlu0 %v3170, 16
    %v3213 = vpop.permute.xlu0 %3212
    %3214 = vrot.lane.b32.xlu0 %v3171, 16
    %v3215 = vpop.permute.xlu0 %3214
    %3216 = vrot.lane.b32.xlu0 %v3172, 16
    %v3217 = vpop.permute.xlu0 %3216
    %3218 = vrot.lane.b32.xlu0 %v3173, 16
    %v3219 = vpop.permute.xlu0 %3218
    %3220 = vrot.lane.b32.xlu0 %v3174, 16
    %v3221 = vpop.permute.xlu0 %3220
    %3222 = vrot.lane.b32.xlu0 %v3175, 16
    %v3223 = vpop.permute.xlu0 %3222
    %3240 = vst.msk [vmem:[#allocation3 + $0x10] sm:$0xff] %vm1825, %v3193
    %3241 = vst.msk [vmem:[#allocation3 + $0x30] sm:$0xff] %vm1825, %v3195
    %3242 = vst.msk [vmem:[#allocation3 + $0x50] sm:$0xff] %vm1825, %v3197
    %3243 = vst.msk [vmem:[#allocation3 + $0x70] sm:$0xff] %vm1825, %v3199
    %3244 = vst.msk [vmem:[#allocation3 + $0x90] sm:$0xff] %vm1825, %v3201
    %3245 = vst.msk [vmem:[#allocation3 + $0xb0] sm:$0xff] %vm1825, %v3203
    %3246 = vst.msk [vmem:[#allocation3 + $0xd0] sm:$0xff] %vm1825, %v3205
    %3247 = vst.msk [vmem:[#allocation3 + $0xf0] sm:$0xff] %vm1825, %v3207
    %3248 = vst.msk [vmem:[#allocation3 + $0x110] sm:$0xff] %vm1825, %v3209
    %3249 = vst.msk [vmem:[#allocation3 + $0x130] sm:$0xff] %vm1825, %v3211
    %3250 = vst.msk [vmem:[#allocation3 + $0x150] sm:$0xff] %vm1825, %v3213
    %3251 = vst.msk [vmem:[#allocation3 + $0x170] sm:$0xff] %vm1825, %v3215
    %3252 = vst.msk [vmem:[#allocation3 + $0x190] sm:$0xff] %vm1825, %v3217
    %3253 = vst.msk [vmem:[#allocation3 + $0x1b0] sm:$0xff] %vm1825, %v3219
    %3254 = vst.msk [vmem:[#allocation3 + $0x1d0] sm:$0xff] %vm1825, %v3221
    %3255 = vst.msk [vmem:[#allocation3 + $0x1f0] sm:$0xff] %vm1825, %v3223
    %v3256 = vld [vmem:[%s1668 + $0x3] sm:$0xff]
    %v3257 = vld [vmem:[%s1668 + $0x13] sm:$0xff]
    %v3258 = vld [vmem:[%s1668 + $0x23] sm:$0xff]
    %v3259 = vld [vmem:[%s1668 + $0x33] sm:$0xff]
    %v3260 = vld [vmem:[%s1668 + $0x43] sm:$0xff]
    %v3261 = vld [vmem:[%s1668 + $0x53] sm:$0xff]
    %v3262 = vld [vmem:[%s1668 + $0x63] sm:$0xff]
    %v3263 = vld [vmem:[%s1668 + $0x73] sm:$0xff]
    %v3264 = vld [vmem:[%s1668 + $0xc3] sm:$0xff]
    %v3265 = vld [vmem:[%s1668 + $0xd3] sm:$0xff]
    %v3266 = vld [vmem:[%s1668 + $0xe3] sm:$0xff]
    %v3267 = vld [vmem:[%s1668 + $0xf3] sm:$0xff]
    %v3268 = vld [vmem:[%s1668 + $0x103] sm:$0xff]
    %v3269 = vld [vmem:[%s1668 + $0x113] sm:$0xff]
    %v3270 = vld [vmem:[%s1668 + $0x123] sm:$0xff]
    %v3271 = vld [vmem:[%s1668 + $0x133] sm:$0xff]
    %3288 = vrot.lane.b32.xlu0 %v3256, 32
    %v3289 = vpop.permute.xlu0 %3288
    %3290 = vrot.lane.b32.xlu0 %v3257, 32
    %v3291 = vpop.permute.xlu0 %3290
    %3292 = vrot.lane.b32.xlu0 %v3258, 32
    %v3293 = vpop.permute.xlu0 %3292
    %3294 = vrot.lane.b32.xlu0 %v3259, 32
    %v3295 = vpop.permute.xlu0 %3294
    %3296 = vrot.lane.b32.xlu0 %v3260, 32
    %v3297 = vpop.permute.xlu0 %3296
    %3298 = vrot.lane.b32.xlu0 %v3261, 32
    %v3299 = vpop.permute.xlu0 %3298
    %3300 = vrot.lane.b32.xlu0 %v3262, 32
    %v3301 = vpop.permute.xlu0 %3300
    %3302 = vrot.lane.b32.xlu0 %v3263, 32
    %v3303 = vpop.permute.xlu0 %3302
    %3304 = vrot.lane.b32.xlu0 %v3264, 32
    %v3305 = vpop.permute.xlu0 %3304
    %3306 = vrot.lane.b32.xlu0 %v3265, 32
    %v3307 = vpop.permute.xlu0 %3306
    %3308 = vrot.lane.b32.xlu0 %v3266, 32
    %v3309 = vpop.permute.xlu0 %3308
    %3310 = vrot.lane.b32.xlu0 %v3267, 32
    %v3311 = vpop.permute.xlu0 %3310
    %3312 = vrot.lane.b32.xlu0 %v3268, 32
    %v3313 = vpop.permute.xlu0 %3312
    %3314 = vrot.lane.b32.xlu0 %v3269, 32
    %v3315 = vpop.permute.xlu0 %3314
    %3316 = vrot.lane.b32.xlu0 %v3270, 32
    %v3317 = vpop.permute.xlu0 %3316
    %3318 = vrot.lane.b32.xlu0 %v3271, 32
    %v3319 = vpop.permute.xlu0 %3318
    %3336 = vst.msk [vmem:[#allocation3 + $0x10] sm:$0xff] %vm1922, %v3289
    %3337 = vst.msk [vmem:[#allocation3 + $0x30] sm:$0xff] %vm1922, %v3291
    %3338 = vst.msk [vmem:[#allocation3 + $0x50] sm:$0xff] %vm1922, %v3293
    %3339 = vst.msk [vmem:[#allocation3 + $0x70] sm:$0xff] %vm1922, %v3295
    %3340 = vst.msk [vmem:[#allocation3 + $0x90] sm:$0xff] %vm1922, %v3297
    %3341 = vst.msk [vmem:[#allocation3 + $0xb0] sm:$0xff] %vm1922, %v3299
    %3342 = vst.msk [vmem:[#allocation3 + $0xd0] sm:$0xff] %vm1922, %v3301
    %3343 = vst.msk [vmem:[#allocation3 + $0xf0] sm:$0xff] %vm1922, %v3303
    %3344 = vst.msk [vmem:[#allocation3 + $0x110] sm:$0xff] %vm1922, %v3305
    %3345 = vst.msk [vmem:[#allocation3 + $0x130] sm:$0xff] %vm1922, %v3307
    %3346 = vst.msk [vmem:[#allocation3 + $0x150] sm:$0xff] %vm1922, %v3309
    %3347 = vst.msk [vmem:[#allocation3 + $0x170] sm:$0xff] %vm1922, %v3311
    %3348 = vst.msk [vmem:[#allocation3 + $0x190] sm:$0xff] %vm1922, %v3313
    %3349 = vst.msk [vmem:[#allocation3 + $0x1b0] sm:$0xff] %vm1922, %v3315
    %3350 = vst.msk [vmem:[#allocation3 + $0x1d0] sm:$0xff] %vm1922, %v3317
    %3351 = vst.msk [vmem:[#allocation3 + $0x1f0] sm:$0xff] %vm1922, %v3319
    %v3352 = vld [vmem:[%s1668 + $0x4] sm:$0xff]
    %v3353 = vld [vmem:[%s1668 + $0x14] sm:$0xff]
    %v3354 = vld [vmem:[%s1668 + $0x24] sm:$0xff]
    %v3355 = vld [vmem:[%s1668 + $0x34] sm:$0xff]
    %v3356 = vld [vmem:[%s1668 + $0x44] sm:$0xff]
    %v3357 = vld [vmem:[%s1668 + $0x54] sm:$0xff]
    %v3358 = vld [vmem:[%s1668 + $0x64] sm:$0xff]
    %v3359 = vld [vmem:[%s1668 + $0x74] sm:$0xff]
    %v3360 = vld [vmem:[%s1668 + $0xc4] sm:$0xff]
    %v3361 = vld [vmem:[%s1668 + $0xd4] sm:$0xff]
    %v3362 = vld [vmem:[%s1668 + $0xe4] sm:$0xff]
    %v3363 = vld [vmem:[%s1668 + $0xf4] sm:$0xff]
    %v3364 = vld [vmem:[%s1668 + $0x104] sm:$0xff]
    %v3365 = vld [vmem:[%s1668 + $0x114] sm:$0xff]
    %v3366 = vld [vmem:[%s1668 + $0x124] sm:$0xff]
    %v3367 = vld [vmem:[%s1668 + $0x134] sm:$0xff]
    %3384 = vrot.lane.b32.xlu0 %v3352, 48
    %v3385 = vpop.permute.xlu0 %3384
    %3386 = vrot.lane.b32.xlu0 %v3353, 48
    %v3387 = vpop.permute.xlu0 %3386
    %3388 = vrot.lane.b32.xlu0 %v3354, 48
    %v3389 = vpop.permute.xlu0 %3388
    %3390 = vrot.lane.b32.xlu0 %v3355, 48
    %v3391 = vpop.permute.xlu0 %3390
    %3392 = vrot.lane.b32.xlu0 %v3356, 48
    %v3393 = vpop.permute.xlu0 %3392
    %3394 = vrot.lane.b32.xlu0 %v3357, 48
    %v3395 = vpop.permute.xlu0 %3394
    %3396 = vrot.lane.b32.xlu0 %v3358, 48
    %v3397 = vpop.permute.xlu0 %3396
    %3398 = vrot.lane.b32.xlu0 %v3359, 48
    %v3399 = vpop.permute.xlu0 %3398
    %3400 = vrot.lane.b32.xlu0 %v3360, 48
    %v3401 = vpop.permute.xlu0 %3400
    %3402 = vrot.lane.b32.xlu0 %v3361, 48
    %v3403 = vpop.permute.xlu0 %3402
    %3404 = vrot.lane.b32.xlu0 %v3362, 48
    %v3405 = vpop.permute.xlu0 %3404
    %3406 = vrot.lane.b32.xlu0 %v3363, 48
    %v3407 = vpop.permute.xlu0 %3406
    %3408 = vrot.lane.b32.xlu0 %v3364, 48
    %v3409 = vpop.permute.xlu0 %3408
    %3410 = vrot.lane.b32.xlu0 %v3365, 48
    %v3411 = vpop.permute.xlu0 %3410
    %3412 = vrot.lane.b32.xlu0 %v3366, 48
    %v3413 = vpop.permute.xlu0 %3412
    %3414 = vrot.lane.b32.xlu0 %v3367, 48
    %v3415 = vpop.permute.xlu0 %3414
    %3432 = vst.msk [vmem:[#allocation3 + $0x10] sm:$0xff] %vm2019, %v3385
    %3433 = vst.msk [vmem:[#allocation3 + $0x30] sm:$0xff] %vm2019, %v3387
    %3434 = vst.msk [vmem:[#allocation3 + $0x50] sm:$0xff] %vm2019, %v3389
    %3435 = vst.msk [vmem:[#allocation3 + $0x70] sm:$0xff] %vm2019, %v3391
    %3436 = vst.msk [vmem:[#allocation3 + $0x90] sm:$0xff] %vm2019, %v3393
    %3437 = vst.msk [vmem:[#allocation3 + $0xb0] sm:$0xff] %vm2019, %v3395
    %3438 = vst.msk [vmem:[#allocation3 + $0xd0] sm:$0xff] %vm2019, %v3397
    %3439 = vst.msk [vmem:[#allocation3 + $0xf0] sm:$0xff] %vm2019, %v3399
    %3440 = vst.msk [vmem:[#allocation3 + $0x110] sm:$0xff] %vm2019, %v3401
    %3441 = vst.msk [vmem:[#allocation3 + $0x130] sm:$0xff] %vm2019, %v3403
    %3442 = vst.msk [vmem:[#allocation3 + $0x150] sm:$0xff] %vm2019, %v3405
    %3443 = vst.msk [vmem:[#allocation3 + $0x170] sm:$0xff] %vm2019, %v3407
    %3444 = vst.msk [vmem:[#allocation3 + $0x190] sm:$0xff] %vm2019, %v3409
    %3445 = vst.msk [vmem:[#allocation3 + $0x1b0] sm:$0xff] %vm2019, %v3411
    %3446 = vst.msk [vmem:[#allocation3 + $0x1d0] sm:$0xff] %vm2019, %v3413
    %3447 = vst.msk [vmem:[#allocation3 + $0x1f0] sm:$0xff] %vm2019, %v3415
    %v3448 = vld [vmem:[%s1673] sm:$0xff]
    %v3449 = vld [vmem:[%s1673 + $0x10] sm:$0xff]
    %v3450 = vld [vmem:[%s1673 + $0x20] sm:$0xff]
    %v3451 = vld [vmem:[%s1673 + $0x30] sm:$0xff]
    %v3452 = vld [vmem:[%s1673 + $0x40] sm:$0xff]
    %v3453 = vld [vmem:[%s1673 + $0x50] sm:$0xff]
    %v3454 = vld [vmem:[%s1673 + $0x60] sm:$0xff]
    %v3455 = vld [vmem:[%s1673 + $0x70] sm:$0xff]
    %v3456 = vld [vmem:[%s1673 + $0xc0] sm:$0xff]
    %v3457 = vld [vmem:[%s1673 + $0xd0] sm:$0xff]
    %v3458 = vld [vmem:[%s1673 + $0xe0] sm:$0xff]
    %v3459 = vld [vmem:[%s1673 + $0xf0] sm:$0xff]
    %v3460 = vld [vmem:[%s1673 + $0x100] sm:$0xff]
    %v3461 = vld [vmem:[%s1673 + $0x110] sm:$0xff]
    %v3462 = vld [vmem:[%s1673 + $0x120] sm:$0xff]
    %v3463 = vld [vmem:[%s1673 + $0x130] sm:$0xff]
    %3480 = vrot.lane.b32.xlu0 %v3448, 64
    %v3481 = vpop.permute.xlu0 %3480
    %3482 = vrot.lane.b32.xlu0 %v3449, 64
    %v3483 = vpop.permute.xlu0 %3482
    %3484 = vrot.lane.b32.xlu0 %v3450, 64
    %v3485 = vpop.permute.xlu0 %3484
    %3486 = vrot.lane.b32.xlu0 %v3451, 64
    %v3487 = vpop.permute.xlu0 %3486
    %3488 = vrot.lane.b32.xlu0 %v3452, 64
    %v3489 = vpop.permute.xlu0 %3488
    %3490 = vrot.lane.b32.xlu0 %v3453, 64
    %v3491 = vpop.permute.xlu0 %3490
    %3492 = vrot.lane.b32.xlu0 %v3454, 64
    %v3493 = vpop.permute.xlu0 %3492
    %3494 = vrot.lane.b32.xlu0 %v3455, 64
    %v3495 = vpop.permute.xlu0 %3494
    %3496 = vrot.lane.b32.xlu0 %v3456, 64
    %v3497 = vpop.permute.xlu0 %3496
    %3498 = vrot.lane.b32.xlu0 %v3457, 64
    %v3499 = vpop.permute.xlu0 %3498
    %3500 = vrot.lane.b32.xlu0 %v3458, 64
    %v3501 = vpop.permute.xlu0 %3500
    %3502 = vrot.lane.b32.xlu0 %v3459, 64
    %v3503 = vpop.permute.xlu0 %3502
    %3504 = vrot.lane.b32.xlu0 %v3460, 64
    %v3505 = vpop.permute.xlu0 %3504
    %3506 = vrot.lane.b32.xlu0 %v3461, 64
    %v3507 = vpop.permute.xlu0 %3506
    %3508 = vrot.lane.b32.xlu0 %v3462, 64
    %v3509 = vpop.permute.xlu0 %3508
    %3510 = vrot.lane.b32.xlu0 %v3463, 64
    %v3511 = vpop.permute.xlu0 %3510
    %3528 = vst.msk [vmem:[#allocation3 + $0x10] sm:$0xff] %vm2116, %v3481
    %3529 = vst.msk [vmem:[#allocation3 + $0x30] sm:$0xff] %vm2116, %v3483
    %3530 = vst.msk [vmem:[#allocation3 + $0x50] sm:$0xff] %vm2116, %v3485
    %3531 = vst.msk [vmem:[#allocation3 + $0x70] sm:$0xff] %vm2116, %v3487
    %3532 = vst.msk [vmem:[#allocation3 + $0x90] sm:$0xff] %vm2116, %v3489
    %3533 = vst.msk [vmem:[#allocation3 + $0xb0] sm:$0xff] %vm2116, %v3491
    %3534 = vst.msk [vmem:[#allocation3 + $0xd0] sm:$0xff] %vm2116, %v3493
    %3535 = vst.msk [vmem:[#allocation3 + $0xf0] sm:$0xff] %vm2116, %v3495
    %3536 = vst.msk [vmem:[#allocation3 + $0x110] sm:$0xff] %vm2116, %v3497
    %3537 = vst.msk [vmem:[#allocation3 + $0x130] sm:$0xff] %vm2116, %v3499
    %3538 = vst.msk [vmem:[#allocation3 + $0x150] sm:$0xff] %vm2116, %v3501
    %3539 = vst.msk [vmem:[#allocation3 + $0x170] sm:$0xff] %vm2116, %v3503
    %3540 = vst.msk [vmem:[#allocation3 + $0x190] sm:$0xff] %vm2116, %v3505
    %3541 = vst.msk [vmem:[#allocation3 + $0x1b0] sm:$0xff] %vm2116, %v3507
    %3542 = vst.msk [vmem:[#allocation3 + $0x1d0] sm:$0xff] %vm2116, %v3509
    %3543 = vst.msk [vmem:[#allocation3 + $0x1f0] sm:$0xff] %vm2116, %v3511
    %v3544 = vld [vmem:[%s1673 + $0x1] sm:$0xff]
    %v3545 = vld [vmem:[%s1673 + $0x11] sm:$0xff]
    %v3546 = vld [vmem:[%s1673 + $0x21] sm:$0xff]
    %v3547 = vld [vmem:[%s1673 + $0x31] sm:$0xff]
    %v3548 = vld [vmem:[%s1673 + $0x41] sm:$0xff]
    %v3549 = vld [vmem:[%s1673 + $0x51] sm:$0xff]
    %v3550 = vld [vmem:[%s1673 + $0x61] sm:$0xff]
    %v3551 = vld [vmem:[%s1673 + $0x71] sm:$0xff]
    %v3552 = vld [vmem:[%s1673 + $0xc1] sm:$0xff]
    %v3553 = vld [vmem:[%s1673 + $0xd1] sm:$0xff]
    %v3554 = vld [vmem:[%s1673 + $0xe1] sm:$0xff]
    %v3555 = vld [vmem:[%s1673 + $0xf1] sm:$0xff]
    %v3556 = vld [vmem:[%s1673 + $0x101] sm:$0xff]
    %v3557 = vld [vmem:[%s1673 + $0x111] sm:$0xff]
    %v3558 = vld [vmem:[%s1673 + $0x121] sm:$0xff]
    %v3559 = vld [vmem:[%s1673 + $0x131] sm:$0xff]
    %3576 = vrot.lane.b32.xlu0 %v3544, 80
    %v3577 = vpop.permute.xlu0 %3576
    %3578 = vrot.lane.b32.xlu0 %v3545, 80
    %v3579 = vpop.permute.xlu0 %3578
    %3580 = vrot.lane.b32.xlu0 %v3546, 80
    %v3581 = vpop.permute.xlu0 %3580
    %3582 = vrot.lane.b32.xlu0 %v3547, 80
    %v3583 = vpop.permute.xlu0 %3582
    %3584 = vrot.lane.b32.xlu0 %v3548, 80
    %v3585 = vpop.permute.xlu0 %3584
    %3586 = vrot.lane.b32.xlu0 %v3549, 80
    %v3587 = vpop.permute.xlu0 %3586
    %3588 = vrot.lane.b32.xlu0 %v3550, 80
    %v3589 = vpop.permute.xlu0 %3588
    %3590 = vrot.lane.b32.xlu0 %v3551, 80
    %v3591 = vpop.permute.xlu0 %3590
    %3592 = vrot.lane.b32.xlu0 %v3552, 80
    %v3593 = vpop.permute.xlu0 %3592
    %3594 = vrot.lane.b32.xlu0 %v3553, 80
    %v3595 = vpop.permute.xlu0 %3594
    %3596 = vrot.lane.b32.xlu0 %v3554, 80
    %v3597 = vpop.permute.xlu0 %3596
    %3598 = vrot.lane.b32.xlu0 %v3555, 80
    %v3599 = vpop.permute.xlu0 %3598
    %3600 = vrot.lane.b32.xlu0 %v3556, 80
    %v3601 = vpop.permute.xlu0 %3600
    %3602 = vrot.lane.b32.xlu0 %v3557, 80
    %v3603 = vpop.permute.xlu0 %3602
    %3604 = vrot.lane.b32.xlu0 %v3558, 80
    %v3605 = vpop.permute.xlu0 %3604
    %3606 = vrot.lane.b32.xlu0 %v3559, 80
    %v3607 = vpop.permute.xlu0 %3606
    %3624 = vst.msk [vmem:[#allocation3 + $0x10] sm:$0xff] %vm2213, %v3577
    %3625 = vst.msk [vmem:[#allocation3 + $0x30] sm:$0xff] %vm2213, %v3579
    %3626 = vst.msk [vmem:[#allocation3 + $0x50] sm:$0xff] %vm2213, %v3581
    %3627 = vst.msk [vmem:[#allocation3 + $0x70] sm:$0xff] %vm2213, %v3583
    %3628 = vst.msk [vmem:[#allocation3 + $0x90] sm:$0xff] %vm2213, %v3585
    %3629 = vst.msk [vmem:[#allocation3 + $0xb0] sm:$0xff] %vm2213, %v3587
    %3630 = vst.msk [vmem:[#allocation3 + $0xd0] sm:$0xff] %vm2213, %v3589
    %3631 = vst.msk [vmem:[#allocation3 + $0xf0] sm:$0xff] %vm2213, %v3591
    %3632 = vst.msk [vmem:[#allocation3 + $0x110] sm:$0xff] %vm2213, %v3593
    %3633 = vst.msk [vmem:[#allocation3 + $0x130] sm:$0xff] %vm2213, %v3595
    %3634 = vst.msk [vmem:[#allocation3 + $0x150] sm:$0xff] %vm2213, %v3597
    %3635 = vst.msk [vmem:[#allocation3 + $0x170] sm:$0xff] %vm2213, %v3599
    %3636 = vst.msk [vmem:[#allocation3 + $0x190] sm:$0xff] %vm2213, %v3601
    %3637 = vst.msk [vmem:[#allocation3 + $0x1b0] sm:$0xff] %vm2213, %v3603
    %3638 = vst.msk [vmem:[#allocation3 + $0x1d0] sm:$0xff] %vm2213, %v3605
    %3639 = vst.msk [vmem:[#allocation3 + $0x1f0] sm:$0xff] %vm2213, %v3607
    %v3640 = vld [vmem:[%s1673 + $0x2] sm:$0xff]
    %v3641 = vld [vmem:[%s1673 + $0x12] sm:$0xff]
    %v3642 = vld [vmem:[%s1673 + $0x22] sm:$0xff]
    %v3643 = vld [vmem:[%s1673 + $0x32] sm:$0xff]
    %v3644 = vld [vmem:[%s1673 + $0x42] sm:$0xff]
    %v3645 = vld [vmem:[%s1673 + $0x52] sm:$0xff]
    %v3646 = vld [vmem:[%s1673 + $0x62] sm:$0xff]
    %v3647 = vld [vmem:[%s1673 + $0x72] sm:$0xff]
    %v3648 = vld [vmem:[%s1673 + $0xc2] sm:$0xff]
    %v3649 = vld [vmem:[%s1673 + $0xd2] sm:$0xff]
    %v3650 = vld [vmem:[%s1673 + $0xe2] sm:$0xff]
    %v3651 = vld [vmem:[%s1673 + $0xf2] sm:$0xff]
    %v3652 = vld [vmem:[%s1673 + $0x102] sm:$0xff]
    %v3653 = vld [vmem:[%s1673 + $0x112] sm:$0xff]
    %v3654 = vld [vmem:[%s1673 + $0x122] sm:$0xff]
    %v3655 = vld [vmem:[%s1673 + $0x132] sm:$0xff]
    %3672 = vrot.lane.b32.xlu0 %v3640, 96
    %v3673 = vpop.permute.xlu0 %3672
    %3674 = vrot.lane.b32.xlu0 %v3641, 96
    %v3675 = vpop.permute.xlu0 %3674
    %3676 = vrot.lane.b32.xlu0 %v3642, 96
    %v3677 = vpop.permute.xlu0 %3676
    %3678 = vrot.lane.b32.xlu0 %v3643, 96
    %v3679 = vpop.permute.xlu0 %3678
    %3680 = vrot.lane.b32.xlu0 %v3644, 96
    %v3681 = vpop.permute.xlu0 %3680
    %3682 = vrot.lane.b32.xlu0 %v3645, 96
    %v3683 = vpop.permute.xlu0 %3682
    %3684 = vrot.lane.b32.xlu0 %v3646, 96
    %v3685 = vpop.permute.xlu0 %3684
    %3686 = vrot.lane.b32.xlu0 %v3647, 96
    %v3687 = vpop.permute.xlu0 %3686
    %3688 = vrot.lane.b32.xlu0 %v3648, 96
    %v3689 = vpop.permute.xlu0 %3688
    %3690 = vrot.lane.b32.xlu0 %v3649, 96
    %v3691 = vpop.permute.xlu0 %3690
    %3692 = vrot.lane.b32.xlu0 %v3650, 96
    %v3693 = vpop.permute.xlu0 %3692
    %3694 = vrot.lane.b32.xlu0 %v3651, 96
    %v3695 = vpop.permute.xlu0 %3694
    %3696 = vrot.lane.b32.xlu0 %v3652, 96
    %v3697 = vpop.permute.xlu0 %3696
    %3698 = vrot.lane.b32.xlu0 %v3653, 96
    %v3699 = vpop.permute.xlu0 %3698
    %3700 = vrot.lane.b32.xlu0 %v3654, 96
    %v3701 = vpop.permute.xlu0 %3700
    %3702 = vrot.lane.b32.xlu0 %v3655, 96
    %v3703 = vpop.permute.xlu0 %3702
    %3720 = vst.msk [vmem:[#allocation3 + $0x10] sm:$0xff] %vm2310, %v3673
    %3721 = vst.msk [vmem:[#allocation3 + $0x30] sm:$0xff] %vm2310, %v3675
    %3722 = vst.msk [vmem:[#allocation3 + $0x50] sm:$0xff] %vm2310, %v3677
    %3723 = vst.msk [vmem:[#allocation3 + $0x70] sm:$0xff] %vm2310, %v3679
    %3724 = vst.msk [vmem:[#allocation3 + $0x90] sm:$0xff] %vm2310, %v3681
    %3725 = vst.msk [vmem:[#allocation3 + $0xb0] sm:$0xff] %vm2310, %v3683
    %3726 = vst.msk [vmem:[#allocation3 + $0xd0] sm:$0xff] %vm2310, %v3685
    %3727 = vst.msk [vmem:[#allocation3 + $0xf0] sm:$0xff] %vm2310, %v3687
    %3728 = vst.msk [vmem:[#allocation3 + $0x110] sm:$0xff] %vm2310, %v3689
    %3729 = vst.msk [vmem:[#allocation3 + $0x130] sm:$0xff] %vm2310, %v3691
    %3730 = vst.msk [vmem:[#allocation3 + $0x150] sm:$0xff] %vm2310, %v3693
    %3731 = vst.msk [vmem:[#allocation3 + $0x170] sm:$0xff] %vm2310, %v3695
    %3732 = vst.msk [vmem:[#allocation3 + $0x190] sm:$0xff] %vm2310, %v3697
    %3733 = vst.msk [vmem:[#allocation3 + $0x1b0] sm:$0xff] %vm2310, %v3699
    %3734 = vst.msk [vmem:[#allocation3 + $0x1d0] sm:$0xff] %vm2310, %v3701
    %3735 = vst.msk [vmem:[#allocation3 + $0x1f0] sm:$0xff] %vm2310, %v3703
    %v3736 = vld [vmem:[%s1673 + $0x3] sm:$0xff]
    %v3737 = vld [vmem:[%s1673 + $0x13] sm:$0xff]
    %v3738 = vld [vmem:[%s1673 + $0x23] sm:$0xff]
    %v3739 = vld [vmem:[%s1673 + $0x33] sm:$0xff]
    %v3740 = vld [vmem:[%s1673 + $0x43] sm:$0xff]
    %v3741 = vld [vmem:[%s1673 + $0x53] sm:$0xff]
    %v3742 = vld [vmem:[%s1673 + $0x63] sm:$0xff]
    %v3743 = vld [vmem:[%s1673 + $0x73] sm:$0xff]
    %v3744 = vld [vmem:[%s1673 + $0xc3] sm:$0xff]
    %v3745 = vld [vmem:[%s1673 + $0xd3] sm:$0xff]
    %v3746 = vld [vmem:[%s1673 + $0xe3] sm:$0xff]
    %v3747 = vld [vmem:[%s1673 + $0xf3] sm:$0xff]
    %v3748 = vld [vmem:[%s1673 + $0x103] sm:$0xff]
    %v3749 = vld [vmem:[%s1673 + $0x113] sm:$0xff]
    %v3750 = vld [vmem:[%s1673 + $0x123] sm:$0xff]
    %v3751 = vld [vmem:[%s1673 + $0x133] sm:$0xff]
    %3768 = vrot.lane.b32.xlu0 %v3736, 112
    %v3769 = vpop.permute.xlu0 %3768
    %3770 = vrot.lane.b32.xlu0 %v3737, 112
    %v3771 = vpop.permute.xlu0 %3770
    %3772 = vrot.lane.b32.xlu0 %v3738, 112
    %v3773 = vpop.permute.xlu0 %3772
    %3774 = vrot.lane.b32.xlu0 %v3739, 112
    %v3775 = vpop.permute.xlu0 %3774
    %3776 = vrot.lane.b32.xlu0 %v3740, 112
    %v3777 = vpop.permute.xlu0 %3776
    %3778 = vrot.lane.b32.xlu0 %v3741, 112
    %v3779 = vpop.permute.xlu0 %3778
    %3780 = vrot.lane.b32.xlu0 %v3742, 112
    %v3781 = vpop.permute.xlu0 %3780
    %3782 = vrot.lane.b32.xlu0 %v3743, 112
    %v3783 = vpop.permute.xlu0 %3782
    %3784 = vrot.lane.b32.xlu0 %v3744, 112
    %v3785 = vpop.permute.xlu0 %3784
    %3786 = vrot.lane.b32.xlu0 %v3745, 112
    %v3787 = vpop.permute.xlu0 %3786
    %3788 = vrot.lane.b32.xlu0 %v3746, 112
    %v3789 = vpop.permute.xlu0 %3788
    %3790 = vrot.lane.b32.xlu0 %v3747, 112
    %v3791 = vpop.permute.xlu0 %3790
    %3792 = vrot.lane.b32.xlu0 %v3748, 112
    %v3793 = vpop.permute.xlu0 %3792
    %3794 = vrot.lane.b32.xlu0 %v3749, 112
    %v3795 = vpop.permute.xlu0 %3794
    %3796 = vrot.lane.b32.xlu0 %v3750, 112
    %v3797 = vpop.permute.xlu0 %3796
    %3798 = vrot.lane.b32.xlu0 %v3751, 112
    %v3799 = vpop.permute.xlu0 %3798
    %3816 = vst.msk [vmem:[#allocation3 + $0x10] sm:$0xff] %vm2407, %v3769
    %3817 = vst.msk [vmem:[#allocation3 + $0x30] sm:$0xff] %vm2407, %v3771
    %3818 = vst.msk [vmem:[#allocation3 + $0x50] sm:$0xff] %vm2407, %v3773
    %3819 = vst.msk [vmem:[#allocation3 + $0x70] sm:$0xff] %vm2407, %v3775
    %3820 = vst.msk [vmem:[#allocation3 + $0x90] sm:$0xff] %vm2407, %v3777
    %3821 = vst.msk [vmem:[#allocation3 + $0xb0] sm:$0xff] %vm2407, %v3779
    %3822 = vst.msk [vmem:[#allocation3 + $0xd0] sm:$0xff] %vm2407, %v3781
    %3823 = vst.msk [vmem:[#allocation3 + $0xf0] sm:$0xff] %vm2407, %v3783
    %3824 = vst.msk [vmem:[#allocation3 + $0x110] sm:$0xff] %vm2407, %v3785
    %3825 = vst.msk [vmem:[#allocation3 + $0x130] sm:$0xff] %vm2407, %v3787
    %3826 = vst.msk [vmem:[#allocation3 + $0x150] sm:$0xff] %vm2407, %v3789
    %3827 = vst.msk [vmem:[#allocation3 + $0x170] sm:$0xff] %vm2407, %v3791
    %3828 = vst.msk [vmem:[#allocation3 + $0x190] sm:$0xff] %vm2407, %v3793
    %3829 = vst.msk [vmem:[#allocation3 + $0x1b0] sm:$0xff] %vm2407, %v3795
    %3830 = vst.msk [vmem:[#allocation3 + $0x1d0] sm:$0xff] %vm2407, %v3797
    %3831 = vst.msk [vmem:[#allocation3 + $0x1f0] sm:$0xff] %vm2407, %v3799
    %v3832 = vld [vmem:[%s1673 + $0x4] sm:$0xff]
    %v3833 = vld [vmem:[%s1673 + $0x14] sm:$0xff]
    %v3834 = vld [vmem:[%s1673 + $0x24] sm:$0xff]
    %v3835 = vld [vmem:[%s1673 + $0x34] sm:$0xff]
    %v3836 = vld [vmem:[%s1673 + $0x44] sm:$0xff]
    %v3837 = vld [vmem:[%s1673 + $0x54] sm:$0xff]
    %v3838 = vld [vmem:[%s1673 + $0x64] sm:$0xff]
    %v3839 = vld [vmem:[%s1673 + $0x74] sm:$0xff]
    %v3840 = vld [vmem:[%s1673 + $0xc4] sm:$0xff]
    %v3841 = vld [vmem:[%s1673 + $0xd4] sm:$0xff]
    %v3842 = vld [vmem:[%s1673 + $0xe4] sm:$0xff]
    %v3843 = vld [vmem:[%s1673 + $0xf4] sm:$0xff]
    %v3844 = vld [vmem:[%s1673 + $0x104] sm:$0xff]
    %v3845 = vld [vmem:[%s1673 + $0x114] sm:$0xff]
    %v3846 = vld [vmem:[%s1673 + $0x124] sm:$0xff]
    %v3847 = vld [vmem:[%s1673 + $0x134] sm:$0xff]
    %3848 = vst.msk [vmem:[#allocation3 + $0x18] sm:$0xff] %vm1651, %v3832
    %3849 = vst.msk [vmem:[#allocation3 + $0x38] sm:$0xff] %vm1651, %v3833
    %3850 = vst.msk [vmem:[#allocation3 + $0x58] sm:$0xff] %vm1651, %v3834
    %3851 = vst.msk [vmem:[#allocation3 + $0x78] sm:$0xff] %vm1651, %v3835
    %3852 = vst.msk [vmem:[#allocation3 + $0x98] sm:$0xff] %vm1651, %v3836
    %3853 = vst.msk [vmem:[#allocation3 + $0xb8] sm:$0xff] %vm1651, %v3837
    %3854 = vst.msk [vmem:[#allocation3 + $0xd8] sm:$0xff] %vm1651, %v3838
    %3855 = vst.msk [vmem:[#allocation3 + $0xf8] sm:$0xff] %vm1651, %v3839
    %3856 = vst.msk [vmem:[#allocation3 + $0x118] sm:$0xff] %vm1651, %v3840
    %3857 = vst.msk [vmem:[#allocation3 + $0x138] sm:$0xff] %vm1651, %v3841
    %3858 = vst.msk [vmem:[#allocation3 + $0x158] sm:$0xff] %vm1651, %v3842
    %3859 = vst.msk [vmem:[#allocation3 + $0x178] sm:$0xff] %vm1651, %v3843
    %3860 = vst.msk [vmem:[#allocation3 + $0x198] sm:$0xff] %vm1651, %v3844
    %3861 = vst.msk [vmem:[#allocation3 + $0x1b8] sm:$0xff] %vm1651, %v3845
    %3862 = vst.msk [vmem:[#allocation3 + $0x1d8] sm:$0xff] %vm1651, %v3846
    %3863 = vst.msk [vmem:[#allocation3 + $0x1f8] sm:$0xff] %vm1651, %v3847
    %v3864 = vld [vmem:[#allocation3] sm:$0xff]
    %v3865 = vld [vmem:[#allocation3 + $0x8] sm:$0xff]
    %v3866 = vld [vmem:[#allocation3 + $0x10] sm:$0xff]
    %v3867 = vld [vmem:[#allocation3 + $0x18] sm:$0xff]
    %v3868 = vld [vmem:[#allocation3 + $0x20] sm:$0xff]
    %v3869 = vld [vmem:[#allocation3 + $0x28] sm:$0xff]
    %v3870 = vld [vmem:[#allocation3 + $0x30] sm:$0xff]
    %v3871 = vld [vmem:[#allocation3 + $0x38] sm:$0xff]
    %v3872 = vld [vmem:[#allocation3 + $0x40] sm:$0xff]
    %v3873 = vld [vmem:[#allocation3 + $0x48] sm:$0xff]
    %v3874 = vld [vmem:[#allocation3 + $0x50] sm:$0xff]
    %v3875 = vld [vmem:[#allocation3 + $0x58] sm:$0xff]
    %v3876 = vld [vmem:[#allocation3 + $0x60] sm:$0xff]
    %v3877 = vld [vmem:[#allocation3 + $0x68] sm:$0xff]
    %v3878 = vld [vmem:[#allocation3 + $0x70] sm:$0xff]
    %v3879 = vld [vmem:[#allocation3 + $0x78] sm:$0xff]
    %v3880 = vld [vmem:[#allocation3 + $0x80] sm:$0xff]
    %v3881 = vld [vmem:[#allocation3 + $0x88] sm:$0xff]
    %v3882 = vld [vmem:[#allocation3 + $0x90] sm:$0xff]
    %v3883 = vld [vmem:[#allocation3 + $0x98] sm:$0xff]
    %v3884 = vld [vmem:[#allocation3 + $0xa0] sm:$0xff]
    %v3885 = vld [vmem:[#allocation3 + $0xa8] sm:$0xff]
    %v3886 = vld [vmem:[#allocation3 + $0xb0] sm:$0xff]
    %v3887 = vld [vmem:[#allocation3 + $0xb8] sm:$0xff]
    %v3888 = vld [vmem:[#allocation3 + $0xc0] sm:$0xff]
    %v3889 = vld [vmem:[#allocation3 + $0xc8] sm:$0xff]
    %v3890 = vld [vmem:[#allocation3 + $0xd0] sm:$0xff]
    %v3891 = vld [vmem:[#allocation3 + $0xd8] sm:$0xff]
    %v3892 = vld [vmem:[#allocation3 + $0xe0] sm:$0xff]
    %v3893 = vld [vmem:[#allocation3 + $0xe8] sm:$0xff]
    %v3894 = vld [vmem:[#allocation3 + $0xf0] sm:$0xff]
    %v3895 = vld [vmem:[#allocation3 + $0xf8] sm:$0xff]
    %v3896 = vld [vmem:[#allocation3 + $0x100] sm:$0xff]
    %v3897 = vld [vmem:[#allocation3 + $0x108] sm:$0xff]
    %v3898 = vld [vmem:[#allocation3 + $0x110] sm:$0xff]
    %v3899 = vld [vmem:[#allocation3 + $0x118] sm:$0xff]
    %v3900 = vld [vmem:[#allocation3 + $0x120] sm:$0xff]
    %v3901 = vld [vmem:[#allocation3 + $0x128] sm:$0xff]
    %v3902 = vld [vmem:[#allocation3 + $0x130] sm:$0xff]
    %v3903 = vld [vmem:[#allocation3 + $0x138] sm:$0xff]
    %v3904 = vld [vmem:[#allocation3 + $0x140] sm:$0xff]
    %v3905 = vld [vmem:[#allocation3 + $0x148] sm:$0xff]
    %v3906 = vld [vmem:[#allocation3 + $0x150] sm:$0xff]
    %v3907 = vld [vmem:[#allocation3 + $0x158] sm:$0xff]
    %v3908 = vld [vmem:[#allocation3 + $0x160] sm:$0xff]
    %v3909 = vld [vmem:[#allocation3 + $0x168] sm:$0xff]
    %v3910 = vld [vmem:[#allocation3 + $0x170] sm:$0xff]
    %v3911 = vld [vmem:[#allocation3 + $0x178] sm:$0xff]
    %v3912 = vld [vmem:[#allocation3 + $0x180] sm:$0xff]
    %v3913 = vld [vmem:[#allocation3 + $0x188] sm:$0xff]
    %v3914 = vld [vmem:[#allocation3 + $0x190] sm:$0xff]
    %v3915 = vld [vmem:[#allocation3 + $0x198] sm:$0xff]
    %v3916 = vld [vmem:[#allocation3 + $0x1a0] sm:$0xff]
    %v3917 = vld [vmem:[#allocation3 + $0x1a8] sm:$0xff]
    %v3918 = vld [vmem:[#allocation3 + $0x1b0] sm:$0xff]
    %v3919 = vld [vmem:[#allocation3 + $0x1b8] sm:$0xff]
    %v3920 = vld [vmem:[#allocation3 + $0x1c0] sm:$0xff]
    %v3921 = vld [vmem:[#allocation3 + $0x1c8] sm:$0xff]
    %v3922 = vld [vmem:[#allocation3 + $0x1d0] sm:$0xff]
    %v3923 = vld [vmem:[#allocation3 + $0x1d8] sm:$0xff]
    %v3924 = vld [vmem:[#allocation3 + $0x1e0] sm:$0xff]
    %v3925 = vld [vmem:[#allocation3 + $0x1e8] sm:$0xff]
    %v3926 = vld [vmem:[#allocation3 + $0x1f0] sm:$0xff]
    %v3927 = vld [vmem:[#allocation3 + $0x1f8] sm:$0xff]
    %v3928 = vpack.c.bf16 %v3868, %v3864
    %v3929 = vpack.c.bf16 %v3869, %v3865
    %v3930 = vpack.c.bf16 %v3870, %v3866
    %v3931 = vpack.c.bf16 %v3871, %v3867
    %v3932 = vpack.c.bf16 %v3876, %v3872
    %v3933 = vpack.c.bf16 %v3877, %v3873
    %v3934 = vpack.c.bf16 %v3878, %v3874
    %v3935 = vpack.c.bf16 %v3879, %v3875
    %v3936 = vpack.c.bf16 %v3884, %v3880
    %v3937 = vpack.c.bf16 %v3885, %v3881
    %v3938 = vpack.c.bf16 %v3886, %v3882
    %v3939 = vpack.c.bf16 %v3887, %v3883
    %v3940 = vpack.c.bf16 %v3892, %v3888
    %v3941 = vpack.c.bf16 %v3893, %v3889
    %v3942 = vpack.c.bf16 %v3894, %v3890
    %v3943 = vpack.c.bf16 %v3895, %v3891
    %v3944 = vpack.c.bf16 %v3900, %v3896
    %v3945 = vpack.c.bf16 %v3901, %v3897
    %v3946 = vpack.c.bf16 %v3902, %v3898
    %v3947 = vpack.c.bf16 %v3903, %v3899
    %v3948 = vpack.c.bf16 %v3908, %v3904
    %v3949 = vpack.c.bf16 %v3909, %v3905
    %v3950 = vpack.c.bf16 %v3910, %v3906
    %v3951 = vpack.c.bf16 %v3911, %v3907
    %v3952 = vpack.c.bf16 %v3916, %v3912
    %v3953 = vpack.c.bf16 %v3917, %v3913
    %v3954 = vpack.c.bf16 %v3918, %v3914
    %v3955 = vpack.c.bf16 %v3919, %v3915
    %v3956 = vpack.c.bf16 %v3924, %v3920
    %v3957 = vpack.c.bf16 %v3925, %v3921
    %v3958 = vpack.c.bf16 %v3926, %v3922
    %v3959 = vpack.c.bf16 %v3927, %v3923
    %v3960 = vld [vmem:[%s3] sm:$0xf]
    %v3961 = vld [vmem:[%s3 + $0x4] sm:$0xf]
    %v3962 = vld [vmem:[%s3 + $0x8] sm:$0xf]
    %v3963 = vld [vmem:[%s3 + $0xc] sm:$0xf]
    %v3964 = vld [vmem:[%s3 + $0x10] sm:$0xf]
    %v3965 = vld [vmem:[%s3 + $0x14] sm:$0xf]
    %v3966 = vld [vmem:[%s3 + $0x18] sm:$0xf]
    %v3967 = vld [vmem:[%s3 + $0x1c] sm:$0xf]
    %v3968 = vld [vmem:[%s3 + $0x20] sm:$0xf]
    %v3969 = vld [vmem:[%s3 + $0x24] sm:$0xf]
    %v3970 = vld [vmem:[%s3 + $0x28] sm:$0xf]
    %v3971 = vld [vmem:[%s3 + $0x2c] sm:$0xf]
    %v3972 = vld [vmem:[%s3 + $0x30] sm:$0xf]
    %v3973 = vld [vmem:[%s3 + $0x34] sm:$0xf]
    %v3974 = vld [vmem:[%s3 + $0x38] sm:$0xf]
    %v3975 = vld [vmem:[%s3 + $0x3c] sm:$0xf]
    %v3976 = vld [vmem:[%s3 + $0x40] sm:$0xf]
    %v3977 = vld [vmem:[%s3 + $0x44] sm:$0xf]
    %v3978 = vld [vmem:[%s3 + $0x48] sm:$0xf]
    %v3979 = vld [vmem:[%s3 + $0x4c] sm:$0xf]
    %v3980 = vld [vmem:[%s3 + $0x50] sm:$0xf]
    %v3981 = vld [vmem:[%s3 + $0x54] sm:$0xf]
    %v3982 = vld [vmem:[%s3 + $0x58] sm:$0xf]
    %v3983 = vld [vmem:[%s3 + $0x5c] sm:$0xf]
    %v3984 = vld [vmem:[%s3 + $0x60] sm:$0xf]
    %v3985 = vld [vmem:[%s3 + $0x64] sm:$0xf]
    %v3986 = vld [vmem:[%s3 + $0x68] sm:$0xf]
    %v3987 = vld [vmem:[%s3 + $0x6c] sm:$0xf]
    %v3988 = vld [vmem:[%s3 + $0x70] sm:$0xf]
    %v3989 = vld [vmem:[%s3 + $0x74] sm:$0xf]
    %v3990 = vld [vmem:[%s3 + $0x78] sm:$0xf]
    %v3991 = vld [vmem:[%s3 + $0x7c] sm:$0xf]
    %v3992 = vld [vmem:[%s3 + $0x80] sm:$0xf]
    %v3993 = vld [vmem:[%s3 + $0x84] sm:$0xf]
    %v3994 = vld [vmem:[%s3 + $0x88] sm:$0xf]
    %v3995 = vld [vmem:[%s3 + $0x8c] sm:$0xf]
    %v3996 = vld [vmem:[%s3 + $0x90] sm:$0xf]
    %v3997 = vld [vmem:[%s3 + $0x94] sm:$0xf]
    %v3998 = vld [vmem:[%s3 + $0x98] sm:$0xf]
    %v3999 = vld [vmem:[%s3 + $0x9c] sm:$0xf]
    %v4000 = vld [vmem:[%s3 + $0xa0] sm:$0xf]
    %v4001 = vld [vmem:[%s3 + $0xa4] sm:$0xf]
    %v4002 = vld [vmem:[%s3 + $0xa8] sm:$0xf]
    %v4003 = vld [vmem:[%s3 + $0xac] sm:$0xf]
    %v4004 = vld [vmem:[%s3 + $0xb0] sm:$0xf]
    %v4005 = vld [vmem:[%s3 + $0xb4] sm:$0xf]
    %v4006 = vld [vmem:[%s3 + $0xb8] sm:$0xf]
    %v4007 = vld [vmem:[%s3 + $0xbc] sm:$0xf]
    %v4008 = vld [vmem:[%s3 + $0xc0] sm:$0xf]
    %v4009 = vld [vmem:[%s3 + $0xc4] sm:$0xf]
    %v4010 = vld [vmem:[%s4] sm:$0x1]
    %v4012 = vlaneseq
    %v4013 = vshrl.u32 %v4012, 7
    %v4014 = vsub.s32 0, %v4013
    %v4015 = vrot.slane %v4010, %v4014
    %v4067 = vunpack.c.l.b16 %v3960
    %v4068 = vunpack.c.l.b16 %v3961
    %v4069 = vunpack.c.l.b16 %v3962
    %v4070 = vunpack.c.l.b16 %v3963
    %v4071 = vunpack.c.l.b16 %v3964
    %v4072 = vunpack.c.l.b16 %v3965
    %v4073 = vunpack.c.l.b16 %v3966
    %v4074 = vunpack.c.l.b16 %v3967
    %v4075 = vunpack.c.l.b16 %v3968
    %v4076 = vunpack.c.l.b16 %v3969
    %v4077 = vunpack.c.l.b16 %v3970
    %v4078 = vunpack.c.l.b16 %v3971
    %v4079 = vunpack.c.l.b16 %v3972
    %v4080 = vunpack.c.l.b16 %v3973
    %v4081 = vunpack.c.l.b16 %v3974
    %v4082 = vunpack.c.l.b16 %v3975
    %v4083 = vunpack.c.l.b16 %v3976
    %v4084 = vunpack.c.l.b16 %v3977
    %v4085 = vunpack.c.l.b16 %v3978
    %v4086 = vunpack.c.l.b16 %v3979
    %v4087 = vunpack.c.l.b16 %v3980
    %v4088 = vunpack.c.l.b16 %v3981
    %v4089 = vunpack.c.l.b16 %v3982
    %v4090 = vunpack.c.l.b16 %v3983
    %v4091 = vunpack.c.l.b16 %v3984
    %v4092 = vunpack.c.l.b16 %v3985
    %v4093 = vunpack.c.l.b16 %v3986
    %v4094 = vunpack.c.l.b16 %v3987
    %v4095 = vunpack.c.l.b16 %v3988
    %v4096 = vunpack.c.l.b16 %v3989
    %v4097 = vunpack.c.l.b16 %v3990
    %v4098 = vunpack.c.l.b16 %v3991
    %v4099 = vunpack.c.l.b16 %v3992
    %v4100 = vunpack.c.l.b16 %v3993
    %v4101 = vunpack.c.l.b16 %v3994
    %v4102 = vunpack.c.l.b16 %v3995
    %v4103 = vunpack.c.l.b16 %v3996
    %v4104 = vunpack.c.l.b16 %v3997
    %v4105 = vunpack.c.l.b16 %v3998
    %v4106 = vunpack.c.l.b16 %v3999
    %v4107 = vunpack.c.l.b16 %v4000
    %v4108 = vunpack.c.l.b16 %v4001
    %v4109 = vunpack.c.l.b16 %v4002
    %v4110 = vunpack.c.l.b16 %v4003
    %v4111 = vunpack.c.l.b16 %v4004
    %v4112 = vunpack.c.l.b16 %v4005
    %v4113 = vunpack.c.l.b16 %v4006
    %v4114 = vunpack.c.l.b16 %v4007
    %v4115 = vunpack.c.l.b16 %v4008
    %v4116 = vunpack.c.l.b16 %v4009
    %v4117 = vpack.c.b16 %v4068, %v4067
    %v4118 = vpack.c.b16 %v4070, %v4069
    %v4119 = vpack.c.b16 %v4072, %v4071
    %v4120 = vpack.c.b16 %v4074, %v4073
    %v4121 = vpack.c.b16 %v4076, %v4075
    %v4122 = vpack.c.b16 %v4078, %v4077
    %v4123 = vpack.c.b16 %v4080, %v4079
    %v4124 = vpack.c.b16 %v4082, %v4081
    %v4125 = vpack.c.b16 %v4084, %v4083
    %v4126 = vpack.c.b16 %v4086, %v4085
    %v4127 = vpack.c.b16 %v4088, %v4087
    %v4128 = vpack.c.b16 %v4090, %v4089
    %v4129 = vpack.c.b16 %v4092, %v4091
    %v4130 = vpack.c.b16 %v4094, %v4093
    %v4131 = vpack.c.b16 %v4096, %v4095
    %v4132 = vpack.c.b16 %v4098, %v4097
    %v4133 = vpack.c.b16 %v4100, %v4099
    %v4134 = vpack.c.b16 %v4102, %v4101
    %v4135 = vpack.c.b16 %v4104, %v4103
    %v4136 = vpack.c.b16 %v4106, %v4105
    %v4137 = vpack.c.b16 %v4108, %v4107
    %v4138 = vpack.c.b16 %v4110, %v4109
    %v4139 = vpack.c.b16 %v4112, %v4111
    %v4140 = vpack.c.b16 %v4114, %v4113
    %v4141 = vpack.c.b16 %v4116, %v4115
    %v4168 = vsel %vm1651, %v3931, 0
    %v4171 = vsel %vm1651, %v3935, 0
    %v4174 = vsel %vm1651, %v3939, 0
    %v4177 = vsel %vm1651, %v3943, 0
    %v4180 = vsel %vm1651, %v3947, 0
    %v4183 = vsel %vm1651, %v3951, 0
    %v4186 = vsel %vm1651, %v3955, 0
    %v4189 = vsel %vm1651, %v3959, 0
    %4191 = vmatprep.subr.bf16.mxu0 0
    %4192 = vmatpush1.bf16.msra.mxu0 %v4124
    %4193 = vmatprep.subr.bf16.mxu0 0
    %4194 = vmatpush1.bf16.msra.mxu0 %v4123
    %4195 = vmatprep.subr.bf16.mxu0 0
    %4196 = vmatpush1.bf16.msra.mxu0 %v4122
    %4197 = vmatprep.subr.bf16.mxu0 0
    %4198 = vmatpush1.bf16.msra.mxu0 %v4121
    %4199 = vmatprep.subr.bf16.mxu0 0
    %4200 = vmatpush1.bf16.msra.mxu0 %v4120
    %4201 = vmatprep.subr.bf16.mxu0 0
    %4202 = vmatpush1.bf16.msra.mxu0 %v4119
    %4203 = vmatprep.subr.bf16.mxu0 0
    %4204 = vmatpush1.bf16.msra.mxu0 %v4118
    %4205 = vmatprep.subr.bf16.mxu0 0
    %4206 = vmatpush1.bf16.msra.mxu0 %v4117
    %4207 = vmatprep.subr.bf16.mxu0 0
    %4208 = vmatpush2.bf16.msra.mxu0 %v4132
    %4209 = vmatprep.subr.bf16.mxu0 0
    %4210 = vmatpush2.bf16.msra.mxu0 %v4131
    %4211 = vmatprep.subr.bf16.mxu0 0
    %4212 = vmatpush2.bf16.msra.mxu0 %v4130
    %4213 = vmatprep.subr.bf16.mxu0 0
    %4214 = vmatpush2.bf16.msra.mxu0 %v4129
    %4215 = vmatprep.subr.bf16.mxu0 0
    %4216 = vmatpush2.bf16.msra.mxu0 %v4128
    %4217 = vmatprep.subr.bf16.mxu0 0
    %4218 = vmatpush2.bf16.msra.mxu0 %v4127
    %4219 = vmatprep.subr.bf16.mxu0 0
    %4220 = vmatpush2.bf16.msra.mxu0 %v4126
    %4221 = vmatprep.subr.bf16.mxu0 0
    %4222 = vmatpush2.bf16.msra.mxu0 %v4125
    %4223 = vmatprep.mubr.bf16.mxu0 %v3929
    %4224 = vmatmul.mubr.bf16.gmra.mxu0 %v3928
    %v4225 = vpop.f32.mrf.mxu0
    %v4226 = vadd.f32 %v4015, %v4225
    %v4227 = vpop.f32.mrf.mxu0
    %v4228 = vpop.f32.mrf.mxu0
    %v4229 = vadd.f32 %v4015, %v4228
    %v4230 = vpop.f32.mrf.mxu0
    %4231 = vmatprep.mubr.bf16.mxu0 %v3933
    %4232 = vmatmul.mubr.bf16.gmra.mxu0 %v3932
    %v4233 = vpop.f32.mrf.mxu0
    %v4234 = vadd.f32 %v4015, %v4233
    %v4235 = vpop.f32.mrf.mxu0
    %v4236 = vpop.f32.mrf.mxu0
    %v4237 = vadd.f32 %v4015, %v4236
    %v4238 = vpop.f32.mrf.mxu0
    %4239 = vmatprep.mubr.bf16.mxu0 %v3937
    %4240 = vmatmul.mubr.bf16.gmra.mxu0 %v3936
    %v4241 = vpop.f32.mrf.mxu0
    %v4242 = vadd.f32 %v4015, %v4241
    %v4243 = vpop.f32.mrf.mxu0
    %v4244 = vpop.f32.mrf.mxu0
    %v4245 = vadd.f32 %v4015, %v4244
    %v4246 = vpop.f32.mrf.mxu0
    %4247 = vmatprep.mubr.bf16.mxu0 %v3941
    %4248 = vmatmul.mubr.bf16.gmra.mxu0 %v3940
    %v4249 = vpop.f32.mrf.mxu0
    %v4250 = vadd.f32 %v4015, %v4249
    %v4251 = vpop.f32.mrf.mxu0
    %v4252 = vpop.f32.mrf.mxu0
    %v4253 = vadd.f32 %v4015, %v4252
    %v4254 = vpop.f32.mrf.mxu0
    %4255 = vmatprep.mubr.bf16.mxu0 %v3945
    %4256 = vmatmul.mubr.bf16.gmra.mxu0 %v3944
    %v4257 = vpop.f32.mrf.mxu0
    %v4258 = vadd.f32 %v4015, %v4257
    %v4259 = vpop.f32.mrf.mxu0
    %v4260 = vpop.f32.mrf.mxu0
    %v4261 = vadd.f32 %v4015, %v4260
    %v4262 = vpop.f32.mrf.mxu0
    %4263 = vmatprep.mubr.bf16.mxu0 %v3949
    %4264 = vmatmul.mubr.bf16.gmra.mxu0 %v3948
    %v4265 = vpop.f32.mrf.mxu0
    %v4266 = vadd.f32 %v4015, %v4265
    %v4267 = vpop.f32.mrf.mxu0
    %v4268 = vpop.f32.mrf.mxu0
    %v4269 = vadd.f32 %v4015, %v4268
    %v4270 = vpop.f32.mrf.mxu0
    %4271 = vmatprep.mubr.bf16.mxu0 %v3953
    %4272 = vmatmul.mubr.bf16.gmra.mxu0 %v3952
    %v4273 = vpop.f32.mrf.mxu0
    %v4274 = vadd.f32 %v4015, %v4273
    %v4275 = vpop.f32.mrf.mxu0
    %v4276 = vpop.f32.mrf.mxu0
    %v4277 = vadd.f32 %v4015, %v4276
    %v4278 = vpop.f32.mrf.mxu0
    %4279 = vmatprep.mubr.bf16.mxu0 %v3957
    %4280 = vmatmul.mubr.bf16.gmra.mxu0 %v3956
    %v4281 = vpop.f32.mrf.mxu0
    %v4282 = vadd.f32 %v4015, %v4281
    %v4283 = vpop.f32.mrf.mxu0
    %v4284 = vpop.f32.mrf.mxu0
    %v4285 = vadd.f32 %v4015, %v4284
    %v4286 = vpop.f32.mrf.mxu0
    %4287 = vdwg.mxu0
    %4288 = vmatprep.subr.bf16.mxu0 0
    %4289 = vmatpush1.bf16.msra.mxu0 %v4140
    %4290 = vmatprep.subr.bf16.mxu0 0
    %4291 = vmatpush1.bf16.msra.mxu0 %v4139
    %4292 = vmatprep.subr.bf16.mxu0 0
    %4293 = vmatpush1.bf16.msra.mxu0 %v4138
    %4294 = vmatprep.subr.bf16.mxu0 0
    %4295 = vmatpush1.bf16.msra.mxu0 %v4137
    %4296 = vmatprep.subr.bf16.mxu0 0
    %4297 = vmatpush1.bf16.msra.mxu0 %v4136
    %4298 = vmatprep.subr.bf16.mxu0 0
    %4299 = vmatpush1.bf16.msra.mxu0 %v4135
    %4300 = vmatprep.subr.bf16.mxu0 0
    %4301 = vmatpush1.bf16.msra.mxu0 %v4134
    %4302 = vmatprep.subr.bf16.mxu0 0
    %4303 = vmatpush1.bf16.msra.mxu0 %v4133
    %4304 = vmatprep.subr.bf16.mxu0 0
    %4305 = vmatpush2.bf16.msra.mxu0 0
    %4306 = vmatprep.subr.bf16.mxu0 0
    %4307 = vmatpush2.bf16.msra.mxu0 0
    %4308 = vmatprep.subr.bf16.mxu0 0
    %4309 = vmatpush2.bf16.msra.mxu0 0
    %4310 = vmatprep.subr.bf16.mxu0 0
    %4311 = vmatpush2.bf16.msra.mxu0 0
    %4312 = vmatprep.subr.bf16.mxu0 0
    %4313 = vmatpush2.bf16.msra.mxu0 0
    %4314 = vmatprep.subr.bf16.mxu0 0
    %4315 = vmatpush2.bf16.msra.mxu0 0
    %4316 = vmatprep.subr.bf16.mxu0 0
    %4317 = vmatpush2.bf16.msra.mxu0 0
    %4318 = vmatprep.subr.bf16.mxu0 0
    %4319 = vmatpush2.bf16.msra.mxu0 %v4141
    %4320 = vmatprep.mubr.bf16.mxu0 %v4168
    %4321 = vmatmul.mubr.bf16.gmra.mxu0 %v3930
    %v4322 = vpop.f32.mrf.mxu0
    %v4323 = vadd.f32 %v4226, %v4322
    %v4324 = vpop.f32.mrf.mxu0
    %v4325 = vpop.f32.mrf.mxu0
    %v4326 = vadd.f32 %v4229, %v4325
    %v4327 = vpop.f32.mrf.mxu0
    %4328 = vmatprep.mubr.bf16.mxu0 %v4171
    %4329 = vmatmul.mubr.bf16.gmra.mxu0 %v3934
    %v4330 = vpop.f32.mrf.mxu0
    %v4331 = vadd.f32 %v4234, %v4330
    %v4332 = vpop.f32.mrf.mxu0
    %v4333 = vpop.f32.mrf.mxu0
    %v4334 = vadd.f32 %v4237, %v4333
    %v4335 = vpop.f32.mrf.mxu0
    %4336 = vmatprep.mubr.bf16.mxu0 %v4174
    %4337 = vmatmul.mubr.bf16.gmra.mxu0 %v3938
    %v4338 = vpop.f32.mrf.mxu0
    %v4339 = vadd.f32 %v4242, %v4338
    %v4340 = vpop.f32.mrf.mxu0
    %v4341 = vpop.f32.mrf.mxu0
    %v4342 = vadd.f32 %v4245, %v4341
    %v4343 = vpop.f32.mrf.mxu0
    %4344 = vmatprep.mubr.bf16.mxu0 %v4177
    %4345 = vmatmul.mubr.bf16.gmra.mxu0 %v3942
    %v4346 = vpop.f32.mrf.mxu0
    %v4347 = vadd.f32 %v4250, %v4346
    %v4348 = vpop.f32.mrf.mxu0
    %v4349 = vpop.f32.mrf.mxu0
    %v4350 = vadd.f32 %v4253, %v4349
    %v4351 = vpop.f32.mrf.mxu0
    %4352 = vmatprep.mubr.bf16.mxu0 %v4180
    %4353 = vmatmul.mubr.bf16.gmra.mxu0 %v3946
    %v4354 = vpop.f32.mrf.mxu0
    %v4355 = vadd.f32 %v4258, %v4354
    %v4356 = vpop.f32.mrf.mxu0
    %v4357 = vpop.f32.mrf.mxu0
    %v4358 = vadd.f32 %v4261, %v4357
    %v4359 = vpop.f32.mrf.mxu0
    %4360 = vmatprep.mubr.bf16.mxu0 %v4183
    %4361 = vmatmul.mubr.bf16.gmra.mxu0 %v3950
    %v4362 = vpop.f32.mrf.mxu0
    %v4363 = vadd.f32 %v4266, %v4362
    %v4364 = vpop.f32.mrf.mxu0
    %v4365 = vpop.f32.mrf.mxu0
    %v4366 = vadd.f32 %v4269, %v4365
    %v4367 = vpop.f32.mrf.mxu0
    %4368 = vmatprep.mubr.bf16.mxu0 %v4186
    %4369 = vmatmul.mubr.bf16.gmra.mxu0 %v3954
    %v4370 = vpop.f32.mrf.mxu0
    %v4371 = vadd.f32 %v4274, %v4370
    %v4372 = vpop.f32.mrf.mxu0
    %v4373 = vpop.f32.mrf.mxu0
    %v4374 = vadd.f32 %v4277, %v4373
    %v4375 = vpop.f32.mrf.mxu0
    %4376 = vmatprep.mubr.bf16.mxu0 %v4189
    %4377 = vmatmul.mubr.bf16.gmra.mxu0 %v3958
    %v4378 = vpop.f32.mrf.mxu0
    %v4379 = vadd.f32 %v4282, %v4378
    %v4380 = vpop.f32.mrf.mxu0
    %v4381 = vpop.f32.mrf.mxu0
    %v4382 = vadd.f32 %v4285, %v4381
    %v4383 = vpop.f32.mrf.mxu0
    %4384 = vdwg.mxu0
    %v4385 = vmax.f32 %v4323, 0.0
    %v4386 = vmax.f32 %v4326, 0.0
    %v4387 = vmax.f32 %v4331, 0.0
    %v4388 = vmax.f32 %v4334, 0.0
    %v4389 = vmax.f32 %v4339, 0.0
    %v4390 = vmax.f32 %v4342, 0.0
    %v4391 = vmax.f32 %v4347, 0.0
    %v4392 = vmax.f32 %v4350, 0.0
    %v4393 = vmax.f32 %v4355, 0.0
    %v4394 = vmax.f32 %v4358, 0.0
    %v4395 = vmax.f32 %v4363, 0.0
    %v4396 = vmax.f32 %v4366, 0.0
    %v4397 = vmax.f32 %v4371, 0.0
    %v4398 = vmax.f32 %v4374, 0.0
    %v4399 = vmax.f32 %v4379, 0.0
    %v4400 = vmax.f32 %v4382, 0.0
    %v4401 = vmax.f32 %v4385, %v4386
    %v4402 = vmax.f32 %v4387, %v4388
    %v4403 = vmax.f32 %v4389, %v4390
    %v4404 = vmax.f32 %v4391, %v4392
    %v4405 = vmax.f32 %v4393, %v4394
    %v4406 = vmax.f32 %v4395, %v4396
    %v4407 = vmax.f32 %v4397, %v4398
    %v4408 = vmax.f32 %v4399, %v4400
    %v4411 = vrot.slane %v4401, 1
    %v4412 = vrot.slane %v4405, 1
    %v4415 = vmax.f32 %v4401, %v4411
    %v4416 = vmax.f32 %v4405, %v4412
    %v4420 = vunpack.c.l.s4 1983009808
    %v4421 = vunpack.c.0.s8 %v4420
    %v4422 = vlaneseq
    %v4423 = vshrl.u32 %v4422, 7
    %v4424 = vsub.s32 %v4421, %v4423
    %v4425 = vrot.slane %v4415, %v4424
    %v4427 = vunpack.c.l.s4 1983009808
    %v4428 = vunpack.c.0.s8 %v4427
    %v4429 = vlaneseq
    %v4430 = vshrl.u32 %v4429, 7
    %v4431 = vsub.s32 %v4428, %v4430
    %v4432 = vrot.slane %v4416, %v4431
    %vm4433 = vcmask 1044484
    %v4434 = vsel %vm4433, %v4425, %v4425
    %vm4435 = vcmask 1046534
    %v4436 = vsel %vm4435, %v4425, %v4434
    %v4437 = vrot.slane %v4432, 7
    %vm4438 = vcmask 1041409
    %v4439 = vsel %vm4438, %v4437, %v4436
    %vm4440 = vcmask 1043459
    %v4441 = vsel %vm4440, %v4437, %v4439
    %vm4442 = vcmask 1045509
    %v4443 = vsel %vm4442, %v4437, %v4441
    %vm4444 = vcmask 1047559
    %v4445 = vsel %vm4444, %v4437, %v4443
    %vm4447 = vcmask 254976
    %4448 = vst.msk [vmem:[#allocation4] sm:$0x3] %vm4447, %v4445
    %v4449 = vcombine.high %v4425, %v4425
    %v4450 = vcombine.high %v4432, %v4432
    %v4451 = vsel %vm4433, %v4449, %v4449
    %v4452 = vsel %vm4435, %v4449, %v4451
    %v4453 = vrot.slane %v4450, 7
    %v4454 = vsel %vm4438, %v4453, %v4452
    %v4455 = vsel %vm4440, %v4453, %v4454
    %v4456 = vsel %vm4442, %v4453, %v4455
    %v4457 = vsel %vm4444, %v4453, %v4456
    %4458 = vrot.lane.b32.xlu0 %v4457, 32
    %v4459 = vpop.permute.xlu0 %4458
    %vm4461 = vcmask 517376
    %4462 = vst.msk [vmem:[#allocation4] sm:$0x3] %vm4461, %v4459
    %v4463 = vcombine.high %v4415, %v4415
    %v4465 = vunpack.c.l.s4 1983009808
    %v4466 = vunpack.c.0.s8 %v4465
    %v4467 = vlaneseq
    %v4468 = vshrl.u32 %v4467, 7
    %v4469 = vsub.s32 %v4466, %v4468
    %v4470 = vrot.slane %v4463, %v4469
    %v4471 = vcombine.high %v4416, %v4416
    %v4473 = vunpack.c.l.s4 1983009808
    %v4474 = vunpack.c.0.s8 %v4473
    %v4475 = vlaneseq
    %v4476 = vshrl.u32 %v4475, 7
    %v4477 = vsub.s32 %v4474, %v4476
    %v4478 = vrot.slane %v4471, %v4477
    %v4479 = vsel %vm4433, %v4470, %v4470
    %v4480 = vsel %vm4435, %v4470, %v4479
    %v4481 = vrot.slane %v4478, 7
    %v4482 = vsel %vm4438, %v4481, %v4480
    %v4483 = vsel %vm4440, %v4481, %v4482
    %v4484 = vsel %vm4442, %v4481, %v4483
    %v4485 = vsel %vm4444, %v4481, %v4484
    %4486 = vrot.lane.b32.xlu0 %v4485, 64
    %v4487 = vpop.permute.xlu0 %4486
    %vm4489 = vcmask 779776
    %4490 = vst.msk [vmem:[#allocation4] sm:$0x3] %vm4489, %v4487
    %v4491 = vcombine.high %v4470, %v4470
    %v4492 = vcombine.high %v4478, %v4478
    %v4493 = vsel %vm4433, %v4491, %v4491
    %v4494 = vsel %vm4435, %v4491, %v4493
    %v4495 = vrot.slane %v4492, 7
    %v4496 = vsel %vm4438, %v4495, %v4494
    %v4497 = vsel %vm4440, %v4495, %v4496
    %v4498 = vsel %vm4442, %v4495, %v4497
    %v4499 = vsel %vm4444, %v4495, %v4498
    %4500 = vrot.lane.b32.xlu0 %v4499, 96
    %v4501 = vpop.permute.xlu0 %4500
    %vm4503 = vcmask 1042176
    %4504 = vst.msk [vmem:[#allocation4] sm:$0x3] %vm4503, %v4501
    %v4507 = vrot.slane %v4402, 1
    %v4508 = vrot.slane %v4406, 1
    %v4511 = vmax.f32 %v4402, %v4507
    %v4512 = vmax.f32 %v4406, %v4508
    %v4516 = vunpack.c.l.s4 1983009808
    %v4517 = vunpack.c.0.s8 %v4516
    %v4518 = vlaneseq
    %v4519 = vshrl.u32 %v4518, 7
    %v4520 = vsub.s32 %v4517, %v4519
    %v4521 = vrot.slane %v4511, %v4520
    %v4523 = vunpack.c.l.s4 1983009808
    %v4524 = vunpack.c.0.s8 %v4523
    %v4525 = vlaneseq
    %v4526 = vshrl.u32 %v4525, 7
    %v4527 = vsub.s32 %v4524, %v4526
    %v4528 = vrot.slane %v4512, %v4527
    %v4529 = vsel %vm4433, %v4521, %v4521
    %v4530 = vsel %vm4435, %v4521, %v4529
    %v4531 = vrot.slane %v4528, 7
    %v4532 = vsel %vm4438, %v4531, %v4530
    %v4533 = vsel %vm4440, %v4531, %v4532
    %v4534 = vsel %vm4442, %v4531, %v4533
    %v4535 = vsel %vm4444, %v4531, %v4534
    %4537 = vst.msk [vmem:[#allocation4 + $0x2] sm:$0x3] %vm4447, %v4535
    %v4538 = vcombine.high %v4521, %v4521
    %v4539 = vcombine.high %v4528, %v4528
    %v4540 = vsel %vm4433, %v4538, %v4538
    %v4541 = vsel %vm4435, %v4538, %v4540
    %v4542 = vrot.slane %v4539, 7
    %v4543 = vsel %vm4438, %v4542, %v4541
    %v4544 = vsel %vm4440, %v4542, %v4543
    %v4545 = vsel %vm4442, %v4542, %v4544
    %v4546 = vsel %vm4444, %v4542, %v4545
    %4547 = vrot.lane.b32.xlu0 %v4546, 32
    %v4548 = vpop.permute.xlu0 %4547
    %4550 = vst.msk [vmem:[#allocation4 + $0x2] sm:$0x3] %vm4461, %v4548
    %v4551 = vcombine.high %v4511, %v4511
    %v4553 = vunpack.c.l.s4 1983009808
    %v4554 = vunpack.c.0.s8 %v4553
    %v4555 = vlaneseq
    %v4556 = vshrl.u32 %v4555, 7
    %v4557 = vsub.s32 %v4554, %v4556
    %v4558 = vrot.slane %v4551, %v4557
    %v4559 = vcombine.high %v4512, %v4512
    %v4561 = vunpack.c.l.s4 1983009808
    %v4562 = vunpack.c.0.s8 %v4561
    %v4563 = vlaneseq
    %v4564 = vshrl.u32 %v4563, 7
    %v4565 = vsub.s32 %v4562, %v4564
    %v4566 = vrot.slane %v4559, %v4565
    %v4567 = vsel %vm4433, %v4558, %v4558
    %v4568 = vsel %vm4435, %v4558, %v4567
    %v4569 = vrot.slane %v4566, 7
    %v4570 = vsel %vm4438, %v4569, %v4568
    %v4571 = vsel %vm4440, %v4569, %v4570
    %v4572 = vsel %vm4442, %v4569, %v4571
    %v4573 = vsel %vm4444, %v4569, %v4572
    %4574 = vrot.lane.b32.xlu0 %v4573, 64
    %v4575 = vpop.permute.xlu0 %4574
    %4577 = vst.msk [vmem:[#allocation4 + $0x2] sm:$0x3] %vm4489, %v4575
    %v4578 = vcombine.high %v4558, %v4558
    %v4579 = vcombine.high %v4566, %v4566
    %v4580 = vsel %vm4433, %v4578, %v4578
    %v4581 = vsel %vm4435, %v4578, %v4580
    %v4582 = vrot.slane %v4579, 7
    %v4583 = vsel %vm4438, %v4582, %v4581
    %v4584 = vsel %vm4440, %v4582, %v4583
    %v4585 = vsel %vm4442, %v4582, %v4584
    %v4586 = vsel %vm4444, %v4582, %v4585
    %4587 = vrot.lane.b32.xlu0 %v4586, 96
    %v4588 = vpop.permute.xlu0 %4587
    %4590 = vst.msk [vmem:[#allocation4 + $0x2] sm:$0x3] %vm4503, %v4588
    %v4593 = vrot.slane %v4403, 1
    %v4594 = vrot.slane %v4407, 1
    %v4597 = vmax.f32 %v4403, %v4593
    %v4598 = vmax.f32 %v4407, %v4594
    %v4602 = vunpack.c.l.s4 1983009808
    %v4603 = vunpack.c.0.s8 %v4602
    %v4604 = vlaneseq
    %v4605 = vshrl.u32 %v4604, 7
    %v4606 = vsub.s32 %v4603, %v4605
    %v4607 = vrot.slane %v4597, %v4606
    %v4609 = vunpack.c.l.s4 1983009808
    %v4610 = vunpack.c.0.s8 %v4609
    %v4611 = vlaneseq
    %v4612 = vshrl.u32 %v4611, 7
    %v4613 = vsub.s32 %v4610, %v4612
    %v4614 = vrot.slane %v4598, %v4613
    %v4615 = vsel %vm4433, %v4607, %v4607
    %v4616 = vsel %vm4435, %v4607, %v4615
    %v4617 = vrot.slane %v4614, 7
    %v4618 = vsel %vm4438, %v4617, %v4616
    %v4619 = vsel %vm4440, %v4617, %v4618
    %v4620 = vsel %vm4442, %v4617, %v4619
    %v4621 = vsel %vm4444, %v4617, %v4620
    %4623 = vst.msk [vmem:[#allocation4 + $0x4] sm:$0x3] %vm4447, %v4621
    %v4624 = vcombine.high %v4607, %v4607
    %v4625 = vcombine.high %v4614, %v4614
    %v4626 = vsel %vm4433, %v4624, %v4624
    %v4627 = vsel %vm4435, %v4624, %v4626
    %v4628 = vrot.slane %v4625, 7
    %v4629 = vsel %vm4438, %v4628, %v4627
    %v4630 = vsel %vm4440, %v4628, %v4629
    %v4631 = vsel %vm4442, %v4628, %v4630
    %v4632 = vsel %vm4444, %v4628, %v4631
    %4633 = vrot.lane.b32.xlu0 %v4632, 32
    %v4634 = vpop.permute.xlu0 %4633
    %4636 = vst.msk [vmem:[#allocation4 + $0x4] sm:$0x3] %vm4461, %v4634
    %v4637 = vcombine.high %v4597, %v4597
    %v4639 = vunpack.c.l.s4 1983009808
    %v4640 = vunpack.c.0.s8 %v4639
    %v4641 = vlaneseq
    %v4642 = vshrl.u32 %v4641, 7
    %v4643 = vsub.s32 %v4640, %v4642
    %v4644 = vrot.slane %v4637, %v4643
    %v4645 = vcombine.high %v4598, %v4598
    %v4647 = vunpack.c.l.s4 1983009808
    %v4648 = vunpack.c.0.s8 %v4647
    %v4649 = vlaneseq
    %v4650 = vshrl.u32 %v4649, 7
    %v4651 = vsub.s32 %v4648, %v4650
    %v4652 = vrot.slane %v4645, %v4651
    %v4653 = vsel %vm4433, %v4644, %v4644
    %v4654 = vsel %vm4435, %v4644, %v4653
    %v4655 = vrot.slane %v4652, 7
    %v4656 = vsel %vm4438, %v4655, %v4654
    %v4657 = vsel %vm4440, %v4655, %v4656
    %v4658 = vsel %vm4442, %v4655, %v4657
    %v4659 = vsel %vm4444, %v4655, %v4658
    %4660 = vrot.lane.b32.xlu0 %v4659, 64
    %v4661 = vpop.permute.xlu0 %4660
    %4663 = vst.msk [vmem:[#allocation4 + $0x4] sm:$0x3] %vm4489, %v4661
    %v4664 = vcombine.high %v4644, %v4644
    %v4665 = vcombine.high %v4652, %v4652
    %v4666 = vsel %vm4433, %v4664, %v4664
    %v4667 = vsel %vm4435, %v4664, %v4666
    %v4668 = vrot.slane %v4665, 7
    %v4669 = vsel %vm4438, %v4668, %v4667
    %v4670 = vsel %vm4440, %v4668, %v4669
    %v4671 = vsel %vm4442, %v4668, %v4670
    %v4672 = vsel %vm4444, %v4668, %v4671
    %4673 = vrot.lane.b32.xlu0 %v4672, 96
    %v4674 = vpop.permute.xlu0 %4673
    %4676 = vst.msk [vmem:[#allocation4 + $0x4] sm:$0x3] %vm4503, %v4674
    %v4679 = vrot.slane %v4404, 1
    %v4680 = vrot.slane %v4408, 1
    %v4683 = vmax.f32 %v4404, %v4679
    %v4684 = vmax.f32 %v4408, %v4680
    %v4688 = vunpack.c.l.s4 1983009808
    %v4689 = vunpack.c.0.s8 %v4688
    %v4690 = vlaneseq
    %v4691 = vshrl.u32 %v4690, 7
    %v4692 = vsub.s32 %v4689, %v4691
    %v4693 = vrot.slane %v4683, %v4692
    %v4695 = vunpack.c.l.s4 1983009808
    %v4696 = vunpack.c.0.s8 %v4695
    %v4697 = vlaneseq
    %v4698 = vshrl.u32 %v4697, 7
    %v4699 = vsub.s32 %v4696, %v4698
    %v4700 = vrot.slane %v4684, %v4699
    %v4701 = vsel %vm4433, %v4693, %v4693
    %v4702 = vsel %vm4435, %v4693, %v4701
    %v4703 = vrot.slane %v4700, 7
    %v4704 = vsel %vm4438, %v4703, %v4702
    %v4705 = vsel %vm4440, %v4703, %v4704
    %v4706 = vsel %vm4442, %v4703, %v4705
    %v4707 = vsel %vm4444, %v4703, %v4706
    %4709 = vst.msk [vmem:[#allocation4 + $0x6] sm:$0x3] %vm4447, %v4707
    %v4710 = vcombine.high %v4693, %v4693
    %v4711 = vcombine.high %v4700, %v4700
    %v4712 = vsel %vm4433, %v4710, %v4710
    %v4713 = vsel %vm4435, %v4710, %v4712
    %v4714 = vrot.slane %v4711, 7
    %v4715 = vsel %vm4438, %v4714, %v4713
    %v4716 = vsel %vm4440, %v4714, %v4715
    %v4717 = vsel %vm4442, %v4714, %v4716
    %v4718 = vsel %vm4444, %v4714, %v4717
    %4719 = vrot.lane.b32.xlu0 %v4718, 32
    %v4720 = vpop.permute.xlu0 %4719
    %4722 = vst.msk [vmem:[#allocation4 + $0x6] sm:$0x3] %vm4461, %v4720
    %v4723 = vcombine.high %v4683, %v4683
    %v4725 = vunpack.c.l.s4 1983009808
    %v4726 = vunpack.c.0.s8 %v4725
    %v4727 = vlaneseq
    %v4728 = vshrl.u32 %v4727, 7
    %v4729 = vsub.s32 %v4726, %v4728
    %v4730 = vrot.slane %v4723, %v4729
    %v4731 = vcombine.high %v4684, %v4684
    %v4733 = vunpack.c.l.s4 1983009808
    %v4734 = vunpack.c.0.s8 %v4733
    %v4735 = vlaneseq
    %v4736 = vshrl.u32 %v4735, 7
    %v4737 = vsub.s32 %v4734, %v4736
    %v4738 = vrot.slane %v4731, %v4737
    %v4739 = vsel %vm4433, %v4730, %v4730
    %v4740 = vsel %vm4435, %v4730, %v4739
    %v4741 = vrot.slane %v4738, 7
    %v4742 = vsel %vm4438, %v4741, %v4740
    %v4743 = vsel %vm4440, %v4741, %v4742
    %v4744 = vsel %vm4442, %v4741, %v4743
    %v4745 = vsel %vm4444, %v4741, %v4744
    %4746 = vrot.lane.b32.xlu0 %v4745, 64
    %v4747 = vpop.permute.xlu0 %4746
    %4749 = vst.msk [vmem:[#allocation4 + $0x6] sm:$0x3] %vm4489, %v4747
    %v4750 = vcombine.high %v4730, %v4730
    %v4751 = vcombine.high %v4738, %v4738
    %v4752 = vsel %vm4433, %v4750, %v4750
    %v4753 = vsel %vm4435, %v4750, %v4752
    %v4754 = vrot.slane %v4751, 7
    %v4755 = vsel %vm4438, %v4754, %v4753
    %v4756 = vsel %vm4440, %v4754, %v4755
    %v4757 = vsel %vm4442, %v4754, %v4756
    %v4758 = vsel %vm4444, %v4754, %v4757
    %4759 = vrot.lane.b32.xlu0 %v4758, 96
    %v4760 = vpop.permute.xlu0 %4759
    %4762 = vst.msk [vmem:[#allocation4 + $0x6] sm:$0x3] %vm4503, %v4760
    %v4763 = vld [vmem:[#allocation4] sm:$0xff]
    %v4765 = vcombine.high %v4763, %v4763
    %v4767 = vunpack.c.l.s4 1983009808
    %v4768 = vunpack.c.0.s8 %v4767
    %v4769 = vlaneseq
    %v4770 = vshrl.u32 %v4769, 7
    %v4771 = vsub.s32 %v4768, %v4770
    %v4772 = vrot.slane %v4763, %v4771
    %v4774 = vunpack.c.l.s4 1983009808
    %v4775 = vunpack.c.0.s8 %v4774
    %v4776 = vlaneseq
    %v4777 = vshrl.u32 %v4776, 7
    %v4778 = vsub.s32 %v4775, %v4777
    %v4779 = vrot.slane %v4765, %v4778
    %v4780 = vcombine.high %v4772, %v4772
    %v4781 = vcombine.high %v4779, %v4779
    %v4786 = vpack.c.bf16 %v4772, %v4772
    %v4787 = vpack.c.bf16 %v4780, %v4780
    %v4788 = vpack.c.bf16 %v4779, %v4779
    %v4789 = vpack.c.bf16 %v4781, %v4781
    %v4790 = vld [vmem:[%s5] sm:$0xff]
    %v4791 = vld [vmem:[%s5 + $0x8] sm:$0xff]
    %v4792 = vld [vmem:[%s5 + $0x10] sm:$0xff]
    %v4793 = vld [vmem:[%s5 + $0x18] sm:$0xff]
    %v4794 = vld [vmem:[%s5 + $0x20] sm:$0xff]
    %v4795 = vld [vmem:[%s5 + $0x28] sm:$0xff]
    %v4796 = vld [vmem:[%s5 + $0x30] sm:$0xff]
    %v4797 = vld [vmem:[%s5 + $0x38] sm:$0xff]
    %v4798 = vld [vmem:[%s5 + $0x40] sm:$0xff]
    %v4799 = vld [vmem:[%s5 + $0x48] sm:$0xff]
    %v4800 = vld [vmem:[%s5 + $0x50] sm:$0xff]
    %v4801 = vld [vmem:[%s5 + $0x58] sm:$0xff]
    %v4802 = vld [vmem:[%s5 + $0x60] sm:$0xff]
    %v4803 = vld [vmem:[%s5 + $0x68] sm:$0xff]
    %v4804 = vld [vmem:[%s5 + $0x70] sm:$0xff]
    %v4805 = vld [vmem:[%s5 + $0x78] sm:$0xff]
    %v4806 = vld [vmem:[%s5 + $0x80] sm:$0xff]
    %v4807 = vld [vmem:[%s5 + $0x88] sm:$0xff]
    %v4808 = vld [vmem:[%s5 + $0x90] sm:$0xff]
    %v4809 = vld [vmem:[%s5 + $0x98] sm:$0xff]
    %v4810 = vld [vmem:[%s5 + $0xa0] sm:$0xff]
    %v4811 = vld [vmem:[%s5 + $0xa8] sm:$0xff]
    %v4812 = vld [vmem:[%s5 + $0xb0] sm:$0xff]
    %v4813 = vld [vmem:[%s5 + $0xb8] sm:$0xff]
    %v4814 = vld [vmem:[%s5 + $0xc0] sm:$0xff]
    %v4815 = vld [vmem:[%s5 + $0xc8] sm:$0xff]
    %v4816 = vld [vmem:[%s5 + $0xd0] sm:$0xff]
    %v4817 = vld [vmem:[%s5 + $0xd8] sm:$0xff]
    %v4818 = vld [vmem:[%s5 + $0xe0] sm:$0xff]
    %v4819 = vld [vmem:[%s5 + $0xe8] sm:$0xff]
    %v4820 = vld [vmem:[%s5 + $0xf0] sm:$0xff]
    %v4821 = vld [vmem:[%s5 + $0xf8] sm:$0xff]
    %v4822 = vld [vmem:[%s5 + $0x100] sm:$0xff]
    %v4823 = vld [vmem:[%s5 + $0x108] sm:$0xff]
    %v4824 = vld [vmem:[%s5 + $0x110] sm:$0xff]
    %v4825 = vld [vmem:[%s5 + $0x118] sm:$0xff]
    %v4826 = vld [vmem:[%s5 + $0x120] sm:$0xff]
    %v4827 = vld [vmem:[%s5 + $0x128] sm:$0xff]
    %v4828 = vld [vmem:[%s5 + $0x130] sm:$0xff]
    %v4829 = vld [vmem:[%s5 + $0x138] sm:$0xff]
    %v4830 = vld [vmem:[%s5 + $0x140] sm:$0xff]
    %v4831 = vld [vmem:[%s5 + $0x148] sm:$0xff]
    %v4832 = vld [vmem:[%s5 + $0x150] sm:$0xff]
    %v4833 = vld [vmem:[%s5 + $0x158] sm:$0xff]
    %v4834 = vld [vmem:[%s5 + $0x160] sm:$0xff]
    %v4835 = vld [vmem:[%s5 + $0x168] sm:$0xff]
    %v4836 = vld [vmem:[%s5 + $0x170] sm:$0xff]
    %v4837 = vld [vmem:[%s5 + $0x178] sm:$0xff]
    %v4838 = vld [vmem:[%s5 + $0x180] sm:$0xff]
    %v4839 = vld [vmem:[%s5 + $0x188] sm:$0xff]
    %v4840 = vld [vmem:[%s5 + $0x190] sm:$0xff]
    %v4841 = vld [vmem:[%s5 + $0x198] sm:$0xff]
    %v4842 = vld [vmem:[%s5 + $0x1a0] sm:$0xff]
    %v4843 = vld [vmem:[%s5 + $0x1a8] sm:$0xff]
    %v4844 = vld [vmem:[%s5 + $0x1b0] sm:$0xff]
    %v4845 = vld [vmem:[%s5 + $0x1b8] sm:$0xff]
    %v4846 = vld [vmem:[%s5 + $0x1c0] sm:$0xff]
    %v4847 = vld [vmem:[%s5 + $0x1c8] sm:$0xff]
    %v4848 = vld [vmem:[%s5 + $0x1d0] sm:$0xff]
    %v4849 = vld [vmem:[%s5 + $0x1d8] sm:$0xff]
    %v4850 = vld [vmem:[%s5 + $0x1e0] sm:$0xff]
    %v4851 = vld [vmem:[%s5 + $0x1e8] sm:$0xff]
    %v4852 = vld [vmem:[%s5 + $0x1f0] sm:$0xff]
    %v4853 = vld [vmem:[%s5 + $0x1f8] sm:$0xff]
    %v4854 = vld [vmem:[%s6] sm:$0x3]
    %v4856 = vlaneseq
    %v4857 = vshrl.u32 %v4856, 7
    %v4858 = vsub.s32 0, %v4857
    %v4859 = vrot.slane %v4854, %v4858
    %v4860 = vlaneseq
    %v4861 = vshrl.u32 %v4860, 7
    %v4862 = vsub.s32 1, %v4861
    %v4863 = vrot.slane %v4854, %v4862
    %v4930 = vunpack.c.l.b16 %v4790
    %v4931 = vunpack.c.h.b16 %v4790
    %v4932 = vunpack.c.l.b16 %v4791
    %v4933 = vunpack.c.h.b16 %v4791
    %v4934 = vunpack.c.l.b16 %v4792
    %v4935 = vunpack.c.h.b16 %v4792
    %v4936 = vunpack.c.l.b16 %v4793
    %v4937 = vunpack.c.h.b16 %v4793
    %v4938 = vunpack.c.l.b16 %v4794
    %v4939 = vunpack.c.h.b16 %v4794
    %v4940 = vunpack.c.l.b16 %v4795
    %v4941 = vunpack.c.h.b16 %v4795
    %v4942 = vunpack.c.l.b16 %v4796
    %v4943 = vunpack.c.h.b16 %v4796
    %v4944 = vunpack.c.l.b16 %v4797
    %v4945 = vunpack.c.h.b16 %v4797
    %v4946 = vunpack.c.l.b16 %v4798
    %v4947 = vunpack.c.h.b16 %v4798
    %v4948 = vunpack.c.l.b16 %v4799
    %v4949 = vunpack.c.h.b16 %v4799
    %v4950 = vunpack.c.l.b16 %v4800
    %v4951 = vunpack.c.h.b16 %v4800
    %v4952 = vunpack.c.l.b16 %v4801
    %v4953 = vunpack.c.h.b16 %v4801
    %v4954 = vunpack.c.l.b16 %v4802
    %v4955 = vunpack.c.h.b16 %v4802
    %v4956 = vunpack.c.l.b16 %v4803
    %v4957 = vunpack.c.h.b16 %v4803
    %v4958 = vunpack.c.l.b16 %v4804
    %v4959 = vunpack.c.h.b16 %v4804
    %v4960 = vunpack.c.l.b16 %v4805
    %v4961 = vunpack.c.h.b16 %v4805
    %v4962 = vunpack.c.l.b16 %v4806
    %v4963 = vunpack.c.h.b16 %v4806
    %v4964 = vunpack.c.l.b16 %v4807
    %v4965 = vunpack.c.h.b16 %v4807
    %v4966 = vunpack.c.l.b16 %v4808
    %v4967 = vunpack.c.h.b16 %v4808
    %v4968 = vunpack.c.l.b16 %v4809
    %v4969 = vunpack.c.h.b16 %v4809
    %v4970 = vunpack.c.l.b16 %v4810
    %v4971 = vunpack.c.h.b16 %v4810
    %v4972 = vunpack.c.l.b16 %v4811
    %v4973 = vunpack.c.h.b16 %v4811
    %v4974 = vunpack.c.l.b16 %v4812
    %v4975 = vunpack.c.h.b16 %v4812
    %v4976 = vunpack.c.l.b16 %v4813
    %v4977 = vunpack.c.h.b16 %v4813
    %v4978 = vunpack.c.l.b16 %v4814
    %v4979 = vunpack.c.h.b16 %v4814
    %v4980 = vunpack.c.l.b16 %v4815
    %v4981 = vunpack.c.h.b16 %v4815
    %v4982 = vunpack.c.l.b16 %v4816
    %v4983 = vunpack.c.h.b16 %v4816
    %v4984 = vunpack.c.l.b16 %v4817
    %v4985 = vunpack.c.h.b16 %v4817
    %v4986 = vunpack.c.l.b16 %v4818
    %v4987 = vunpack.c.h.b16 %v4818
    %v4988 = vunpack.c.l.b16 %v4819
    %v4989 = vunpack.c.h.b16 %v4819
    %v4990 = vunpack.c.l.b16 %v4820
    %v4991 = vunpack.c.h.b16 %v4820
    %v4992 = vunpack.c.l.b16 %v4821
    %v4993 = vunpack.c.h.b16 %v4821
    %v4994 = vunpack.c.l.b16 %v4822
    %v4995 = vunpack.c.h.b16 %v4822
    %v4996 = vunpack.c.l.b16 %v4823
    %v4997 = vunpack.c.h.b16 %v4823
    %v4998 = vunpack.c.l.b16 %v4824
    %v4999 = vunpack.c.h.b16 %v4824
    %v5000 = vunpack.c.l.b16 %v4825
    %v5001 = vunpack.c.h.b16 %v4825
    %v5002 = vunpack.c.l.b16 %v4826
    %v5003 = vunpack.c.h.b16 %v4826
    %v5004 = vunpack.c.l.b16 %v4827
    %v5005 = vunpack.c.h.b16 %v4827
    %v5006 = vunpack.c.l.b16 %v4828
    %v5007 = vunpack.c.h.b16 %v4828
    %v5008 = vunpack.c.l.b16 %v4829
    %v5009 = vunpack.c.h.b16 %v4829
    %v5010 = vunpack.c.l.b16 %v4830
    %v5011 = vunpack.c.h.b16 %v4830
    %v5012 = vunpack.c.l.b16 %v4831
    %v5013 = vunpack.c.h.b16 %v4831
    %v5014 = vunpack.c.l.b16 %v4832
    %v5015 = vunpack.c.h.b16 %v4832
    %v5016 = vunpack.c.l.b16 %v4833
    %v5017 = vunpack.c.h.b16 %v4833
    %v5018 = vunpack.c.l.b16 %v4834
    %v5019 = vunpack.c.h.b16 %v4834
    %v5020 = vunpack.c.l.b16 %v4835
    %v5021 = vunpack.c.h.b16 %v4835
    %v5022 = vunpack.c.l.b16 %v4836
    %v5023 = vunpack.c.h.b16 %v4836
    %v5024 = vunpack.c.l.b16 %v4837
    %v5025 = vunpack.c.h.b16 %v4837
    %v5026 = vunpack.c.l.b16 %v4838
    %v5027 = vunpack.c.h.b16 %v4838
    %v5028 = vunpack.c.l.b16 %v4839
    %v5029 = vunpack.c.h.b16 %v4839
    %v5030 = vunpack.c.l.b16 %v4840
    %v5031 = vunpack.c.h.b16 %v4840
    %v5032 = vunpack.c.l.b16 %v4841
    %v5033 = vunpack.c.h.b16 %v4841
    %v5034 = vunpack.c.l.b16 %v4842
    %v5035 = vunpack.c.h.b16 %v4842
    %v5036 = vunpack.c.l.b16 %v4843
    %v5037 = vunpack.c.h.b16 %v4843
    %v5038 = vunpack.c.l.b16 %v4844
    %v5039 = vunpack.c.h.b16 %v4844
    %v5040 = vunpack.c.l.b16 %v4845
    %v5041 = vunpack.c.h.b16 %v4845
    %v5042 = vunpack.c.l.b16 %v4846
    %v5043 = vunpack.c.h.b16 %v4846
    %v5044 = vunpack.c.l.b16 %v4847
    %v5045 = vunpack.c.h.b16 %v4847
    %v5046 = vunpack.c.l.b16 %v4848
    %v5047 = vunpack.c.h.b16 %v4848
    %v5048 = vunpack.c.l.b16 %v4849
    %v5049 = vunpack.c.h.b16 %v4849
    %v5050 = vunpack.c.l.b16 %v4850
    %v5051 = vunpack.c.h.b16 %v4850
    %v5052 = vunpack.c.l.b16 %v4851
    %v5053 = vunpack.c.h.b16 %v4851
    %v5054 = vunpack.c.l.b16 %v4852
    %v5055 = vunpack.c.h.b16 %v4852
    %v5056 = vunpack.c.l.b16 %v4853
    %v5057 = vunpack.c.h.b16 %v4853
    %v5058 = vpack.c.b16 %v4932, %v4930
    %v5059 = vpack.c.b16 %v4933, %v4931
    %v5060 = vpack.c.b16 %v4936, %v4934
    %v5061 = vpack.c.b16 %v4937, %v4935
    %v5062 = vpack.c.b16 %v4940, %v4938
    %v5063 = vpack.c.b16 %v4941, %v4939
    %v5064 = vpack.c.b16 %v4944, %v4942
    %v5065 = vpack.c.b16 %v4945, %v4943
    %v5066 = vpack.c.b16 %v4948, %v4946
    %v5067 = vpack.c.b16 %v4949, %v4947
    %v5068 = vpack.c.b16 %v4952, %v4950
    %v5069 = vpack.c.b16 %v4953, %v4951
    %v5070 = vpack.c.b16 %v4956, %v4954
    %v5071 = vpack.c.b16 %v4957, %v4955
    %v5072 = vpack.c.b16 %v4960, %v4958
    %v5073 = vpack.c.b16 %v4961, %v4959
    %v5074 = vpack.c.b16 %v4964, %v4962
    %v5075 = vpack.c.b16 %v4965, %v4963
    %v5076 = vpack.c.b16 %v4968, %v4966
    %v5077 = vpack.c.b16 %v4969, %v4967
    %v5078 = vpack.c.b16 %v4972, %v4970
    %v5079 = vpack.c.b16 %v4973, %v4971
    %v5080 = vpack.c.b16 %v4976, %v4974
    %v5081 = vpack.c.b16 %v4977, %v4975
    %v5082 = vpack.c.b16 %v4980, %v4978
    %v5083 = vpack.c.b16 %v4981, %v4979
    %v5084 = vpack.c.b16 %v4984, %v4982
    %v5085 = vpack.c.b16 %v4985, %v4983
    %v5086 = vpack.c.b16 %v4988, %v4986
    %v5087 = vpack.c.b16 %v4989, %v4987
    %v5088 = vpack.c.b16 %v4992, %v4990
    %v5089 = vpack.c.b16 %v4993, %v4991
    %v5090 = vpack.c.b16 %v4996, %v4994
    %v5091 = vpack.c.b16 %v4997, %v4995
    %v5092 = vpack.c.b16 %v5000, %v4998
    %v5093 = vpack.c.b16 %v5001, %v4999
    %v5094 = vpack.c.b16 %v5004, %v5002
    %v5095 = vpack.c.b16 %v5005, %v5003
    %v5096 = vpack.c.b16 %v5008, %v5006
    %v5097 = vpack.c.b16 %v5009, %v5007
    %v5098 = vpack.c.b16 %v5012, %v5010
    %v5099 = vpack.c.b16 %v5013, %v5011
    %v5100 = vpack.c.b16 %v5016, %v5014
    %v5101 = vpack.c.b16 %v5017, %v5015
    %v5102 = vpack.c.b16 %v5020, %v5018
    %v5103 = vpack.c.b16 %v5021, %v5019
    %v5104 = vpack.c.b16 %v5024, %v5022
    %v5105 = vpack.c.b16 %v5025, %v5023
    %v5106 = vpack.c.b16 %v5028, %v5026
    %v5107 = vpack.c.b16 %v5029, %v5027
    %v5108 = vpack.c.b16 %v5032, %v5030
    %v5109 = vpack.c.b16 %v5033, %v5031
    %v5110 = vpack.c.b16 %v5036, %v5034
    %v5111 = vpack.c.b16 %v5037, %v5035
    %v5112 = vpack.c.b16 %v5040, %v5038
    %v5113 = vpack.c.b16 %v5041, %v5039
    %v5114 = vpack.c.b16 %v5044, %v5042
    %v5115 = vpack.c.b16 %v5045, %v5043
    %v5116 = vpack.c.b16 %v5048, %v5046
    %v5117 = vpack.c.b16 %v5049, %v5047
    %v5118 = vpack.c.b16 %v5052, %v5050
    %v5119 = vpack.c.b16 %v5053, %v5051
    %v5120 = vpack.c.b16 %v5056, %v5054
    %v5121 = vpack.c.b16 %v5057, %v5055
    %5186 = vmatprep.subr.bf16.mxu0 %v5073
    %5187 = vmatpush1.bf16.msra.mxu0 %v5072
    %5188 = vmatprep.subr.bf16.mxu0 %v5071
    %5189 = vmatpush1.bf16.msra.mxu0 %v5070
    %5190 = vmatprep.subr.bf16.mxu0 %v5069
    %5191 = vmatpush1.bf16.msra.mxu0 %v5068
    %5192 = vmatprep.subr.bf16.mxu0 %v5067
    %5193 = vmatpush1.bf16.msra.mxu0 %v5066
    %5194 = vmatprep.subr.bf16.mxu0 %v5065
    %5195 = vmatpush1.bf16.msra.mxu0 %v5064
    %5196 = vmatprep.subr.bf16.mxu0 %v5063
    %5197 = vmatpush1.bf16.msra.mxu0 %v5062
    %5198 = vmatprep.subr.bf16.mxu0 %v5061
    %5199 = vmatpush1.bf16.msra.mxu0 %v5060
    %5200 = vmatprep.subr.bf16.mxu0 %v5059
    %5201 = vmatpush1.bf16.msra.mxu0 %v5058
    %5202 = vmatprep.subr.bf16.mxu0 %v5089
    %5203 = vmatpush2.bf16.msra.mxu0 %v5088
    %5204 = vmatprep.subr.bf16.mxu0 %v5087
    %5205 = vmatpush2.bf16.msra.mxu0 %v5086
    %5206 = vmatprep.subr.bf16.mxu0 %v5085
    %5207 = vmatpush2.bf16.msra.mxu0 %v5084
    %5208 = vmatprep.subr.bf16.mxu0 %v5083
    %5209 = vmatpush2.bf16.msra.mxu0 %v5082
    %5210 = vmatprep.subr.bf16.mxu0 %v5081
    %5211 = vmatpush2.bf16.msra.mxu0 %v5080
    %5212 = vmatprep.subr.bf16.mxu0 %v5079
    %5213 = vmatpush2.bf16.msra.mxu0 %v5078
    %5214 = vmatprep.subr.bf16.mxu0 %v5077
    %5215 = vmatpush2.bf16.msra.mxu0 %v5076
    %5216 = vmatprep.subr.bf16.mxu0 %v5075
    %5217 = vmatpush2.bf16.msra.mxu0 %v5074
    %5218 = vmatprep.mubr.bf16.mxu0 %v4787
    %5219 = vmatmul.mubr.bf16.gmra.mxu0 %v4786
    %v5220 = vpop.f32.mrf.mxu0
    %v5221 = vadd.f32 %v4859, %v5220
    %v5222 = vpop.f32.mrf.mxu0
    %v5223 = vadd.f32 %v4863, %v5222
    %v5224 = vpop.f32.mrf.mxu0
    %v5225 = vpop.f32.mrf.mxu0
    %5226 = vdwg.mxu0
    %5227 = vmatprep.subr.bf16.mxu0 %v5105
    %5228 = vmatpush1.bf16.msra.mxu0 %v5104
    %5229 = vmatprep.subr.bf16.mxu0 %v5103
    %5230 = vmatpush1.bf16.msra.mxu0 %v5102
    %5231 = vmatprep.subr.bf16.mxu0 %v5101
    %5232 = vmatpush1.bf16.msra.mxu0 %v5100
    %5233 = vmatprep.subr.bf16.mxu0 %v5099
    %5234 = vmatpush1.bf16.msra.mxu0 %v5098
    %5235 = vmatprep.subr.bf16.mxu0 %v5097
    %5236 = vmatpush1.bf16.msra.mxu0 %v5096
    %5237 = vmatprep.subr.bf16.mxu0 %v5095
    %5238 = vmatpush1.bf16.msra.mxu0 %v5094
    %5239 = vmatprep.subr.bf16.mxu0 %v5093
    %5240 = vmatpush1.bf16.msra.mxu0 %v5092
    %5241 = vmatprep.subr.bf16.mxu0 %v5091
    %5242 = vmatpush1.bf16.msra.mxu0 %v5090
    %5243 = vmatprep.subr.bf16.mxu0 %v5121
    %5244 = vmatpush2.bf16.msra.mxu0 %v5120
    %5245 = vmatprep.subr.bf16.mxu0 %v5119
    %5246 = vmatpush2.bf16.msra.mxu0 %v5118
    %5247 = vmatprep.subr.bf16.mxu0 %v5117
    %5248 = vmatpush2.bf16.msra.mxu0 %v5116
    %5249 = vmatprep.subr.bf16.mxu0 %v5115
    %5250 = vmatpush2.bf16.msra.mxu0 %v5114
    %5251 = vmatprep.subr.bf16.mxu0 %v5113
    %5252 = vmatpush2.bf16.msra.mxu0 %v5112
    %5253 = vmatprep.subr.bf16.mxu0 %v5111
    %5254 = vmatpush2.bf16.msra.mxu0 %v5110
    %5255 = vmatprep.subr.bf16.mxu0 %v5109
    %5256 = vmatpush2.bf16.msra.mxu0 %v5108
    %5257 = vmatprep.subr.bf16.mxu0 %v5107
    %5258 = vmatpush2.bf16.msra.mxu0 %v5106
    %5259 = vmatprep.mubr.bf16.mxu0 %v4789
    %5260 = vmatmul.mubr.bf16.gmra.mxu0 %v4788
    %v5261 = vpop.f32.mrf.mxu0
    %v5262 = vadd.f32 %v5221, %v5261
    %v5263 = vpop.f32.mrf.mxu0
    %v5264 = vadd.f32 %v5223, %v5263
    %v5265 = vpop.f32.mrf.mxu0
    %v5266 = vpop.f32.mrf.mxu0
    %5267 = vdwg.mxu0
    %v5268 = vmax.f32 %v5262, 0.0
    %v5269 = vmax.f32 %v5264, 0.0
    %v5270 = vpack.c.bf16 %v5268, %v5268
    %v5271 = vpack.c.bf16 %v5269, %v5269
    %v5272 = vld [vmem:[%s7] sm:$0xf]
    %v5273 = vld [vmem:[%s7 + $0x4] sm:$0xf]
    %v5274 = vld [vmem:[%s7 + $0x8] sm:$0xf]
    %v5275 = vld [vmem:[%s7 + $0xc] sm:$0xf]
    %v5276 = vld [vmem:[%s7 + $0x10] sm:$0xf]
    %v5277 = vld [vmem:[%s7 + $0x14] sm:$0xf]
    %v5278 = vld [vmem:[%s7 + $0x18] sm:$0xf]
    %v5279 = vld [vmem:[%s7 + $0x1c] sm:$0xf]
    %v5280 = vld [vmem:[%s7 + $0x20] sm:$0xf]
    %v5281 = vld [vmem:[%s7 + $0x24] sm:$0xf]
    %v5282 = vld [vmem:[%s7 + $0x28] sm:$0xf]
    %v5283 = vld [vmem:[%s7 + $0x2c] sm:$0xf]
    %v5284 = vld [vmem:[%s7 + $0x30] sm:$0xf]
    %v5285 = vld [vmem:[%s7 + $0x34] sm:$0xf]
    %v5286 = vld [vmem:[%s7 + $0x38] sm:$0xf]
    %v5287 = vld [vmem:[%s7 + $0x3c] sm:$0xf]
    %v5288 = vld [vmem:[%s7 + $0x40] sm:$0xf]
    %v5289 = vld [vmem:[%s7 + $0x44] sm:$0xf]
    %v5290 = vld [vmem:[%s7 + $0x48] sm:$0xf]
    %v5291 = vld [vmem:[%s7 + $0x4c] sm:$0xf]
    %v5292 = vld [vmem:[%s7 + $0x50] sm:$0xf]
    %v5293 = vld [vmem:[%s7 + $0x54] sm:$0xf]
    %v5294 = vld [vmem:[%s7 + $0x58] sm:$0xf]
    %v5295 = vld [vmem:[%s7 + $0x5c] sm:$0xf]
    %v5296 = vld [vmem:[%s7 + $0x60] sm:$0xf]
    %v5297 = vld [vmem:[%s7 + $0x64] sm:$0xf]
    %v5298 = vld [vmem:[%s7 + $0x68] sm:$0xf]
    %v5299 = vld [vmem:[%s7 + $0x6c] sm:$0xf]
    %v5300 = vld [vmem:[%s7 + $0x70] sm:$0xf]
    %v5301 = vld [vmem:[%s7 + $0x74] sm:$0xf]
    %v5302 = vld [vmem:[%s7 + $0x78] sm:$0xf]
    %v5303 = vld [vmem:[%s7 + $0x7c] sm:$0xf]
    %v5304 = vld [vmem:[%s8] sm:$0x1]
    %v5306 = vlaneseq
    %v5307 = vshrl.u32 %v5306, 7
    %v5308 = vsub.s32 0, %v5307
    %v5309 = vrot.slane %v5304, %v5308
    %v5343 = vunpack.c.l.b16 %v5272
    %v5344 = vunpack.c.l.b16 %v5273
    %v5345 = vunpack.c.l.b16 %v5274
    %v5346 = vunpack.c.l.b16 %v5275
    %v5347 = vunpack.c.l.b16 %v5276
    %v5348 = vunpack.c.l.b16 %v5277
    %v5349 = vunpack.c.l.b16 %v5278
    %v5350 = vunpack.c.l.b16 %v5279
    %v5351 = vunpack.c.l.b16 %v5280
    %v5352 = vunpack.c.l.b16 %v5281
    %v5353 = vunpack.c.l.b16 %v5282
    %v5354 = vunpack.c.l.b16 %v5283
    %v5355 = vunpack.c.l.b16 %v5284
    %v5356 = vunpack.c.l.b16 %v5285
    %v5357 = vunpack.c.l.b16 %v5286
    %v5358 = vunpack.c.l.b16 %v5287
    %v5359 = vunpack.c.l.b16 %v5288
    %v5360 = vunpack.c.l.b16 %v5289
    %v5361 = vunpack.c.l.b16 %v5290
    %v5362 = vunpack.c.l.b16 %v5291
    %v5363 = vunpack.c.l.b16 %v5292
    %v5364 = vunpack.c.l.b16 %v5293
    %v5365 = vunpack.c.l.b16 %v5294
    %v5366 = vunpack.c.l.b16 %v5295
    %v5367 = vunpack.c.l.b16 %v5296
    %v5368 = vunpack.c.l.b16 %v5297
    %v5369 = vunpack.c.l.b16 %v5298
    %v5370 = vunpack.c.l.b16 %v5299
    %v5371 = vunpack.c.l.b16 %v5300
    %v5372 = vunpack.c.l.b16 %v5301
    %v5373 = vunpack.c.l.b16 %v5302
    %v5374 = vunpack.c.l.b16 %v5303
    %v5375 = vpack.c.b16 %v5344, %v5343
    %v5376 = vpack.c.b16 %v5346, %v5345
    %v5377 = vpack.c.b16 %v5348, %v5347
    %v5378 = vpack.c.b16 %v5350, %v5349
    %v5379 = vpack.c.b16 %v5352, %v5351
    %v5380 = vpack.c.b16 %v5354, %v5353
    %v5381 = vpack.c.b16 %v5356, %v5355
    %v5382 = vpack.c.b16 %v5358, %v5357
    %v5383 = vpack.c.b16 %v5360, %v5359
    %v5384 = vpack.c.b16 %v5362, %v5361
    %v5385 = vpack.c.b16 %v5364, %v5363
    %v5386 = vpack.c.b16 %v5366, %v5365
    %v5387 = vpack.c.b16 %v5368, %v5367
    %v5388 = vpack.c.b16 %v5370, %v5369
    %v5389 = vpack.c.b16 %v5372, %v5371
    %v5390 = vpack.c.b16 %v5374, %v5373
    %5407 = vmatprep.subr.bf16.mxu0 0
    %5408 = vmatpush1.bf16.msra.mxu0 %v5382
    %5409 = vmatprep.subr.bf16.mxu0 0
    %5410 = vmatpush1.bf16.msra.mxu0 %v5381
    %5411 = vmatprep.subr.bf16.mxu0 0
    %5412 = vmatpush1.bf16.msra.mxu0 %v5380
    %5413 = vmatprep.subr.bf16.mxu0 0
    %5414 = vmatpush1.bf16.msra.mxu0 %v5379
    %5415 = vmatprep.subr.bf16.mxu0 0
    %5416 = vmatpush1.bf16.msra.mxu0 %v5378
    %5417 = vmatprep.subr.bf16.mxu0 0
    %5418 = vmatpush1.bf16.msra.mxu0 %v5377
    %5419 = vmatprep.subr.bf16.mxu0 0
    %5420 = vmatpush1.bf16.msra.mxu0 %v5376
    %5421 = vmatprep.subr.bf16.mxu0 0
    %5422 = vmatpush1.bf16.msra.mxu0 %v5375
    %5423 = vmatprep.subr.bf16.mxu0 0
    %5424 = vmatpush2.bf16.msra.mxu0 %v5390
    %5425 = vmatprep.subr.bf16.mxu0 0
    %5426 = vmatpush2.bf16.msra.mxu0 %v5389
    %5427 = vmatprep.subr.bf16.mxu0 0
    %5428 = vmatpush2.bf16.msra.mxu0 %v5388
    %5429 = vmatprep.subr.bf16.mxu0 0
    %5430 = vmatpush2.bf16.msra.mxu0 %v5387
    %5431 = vmatprep.subr.bf16.mxu0 0
    %5432 = vmatpush2.bf16.msra.mxu0 %v5386
    %5433 = vmatprep.subr.bf16.mxu0 0
    %5434 = vmatpush2.bf16.msra.mxu0 %v5385
    %5435 = vmatprep.subr.bf16.mxu0 0
    %5436 = vmatpush2.bf16.msra.mxu0 %v5384
    %5437 = vmatprep.subr.bf16.mxu0 0
    %5438 = vmatpush2.bf16.msra.mxu0 %v5383
    %5439 = vmatprep.mubr.bf16.mxu0 %v5271
    %5440 = vmatmul.mubr.bf16.gmra.mxu0 %v5270
    %v5441 = vpop.f32.mrf.mxu0
    %v5442 = vadd.f32 %v5309, %v5441
    %v5443 = vpop.f32.mrf.mxu0
    %v5444 = vpop.f32.mrf.mxu0
    %v5445 = vpop.f32.mrf.mxu0
    %5446 = vdwg.mxu0
    %v5447 = vmax.f32 %v5442, 0.0
    %v5448 = vpack.c.bf16 %v5447, %v5447
    %v5449 = vld [vmem:[%s9] sm:$0xf]
    %v5450 = vld [vmem:[%s9 + $0x4] sm:$0xf]
    %v5451 = vld [vmem:[%s9 + $0x8] sm:$0xf]
    %v5452 = vld [vmem:[%s9 + $0xc] sm:$0xf]
    %v5453 = vld [vmem:[%s9 + $0x10] sm:$0xf]
    %v5454 = vld [vmem:[%s9 + $0x14] sm:$0xf]
    %v5455 = vld [vmem:[%s9 + $0x18] sm:$0xf]
    %v5456 = vld [vmem:[%s9 + $0x1c] sm:$0xf]
    %v5457 = vld [vmem:[%s9 + $0x20] sm:$0xf]
    %v5458 = vld [vmem:[%s9 + $0x24] sm:$0xf]
    %v5459 = vld [vmem:[%s9 + $0x28] sm:$0xf]
    %v5460 = vld [vmem:[%s9 + $0x2c] sm:$0xf]
    %v5461 = vld [vmem:[%s9 + $0x30] sm:$0xf]
    %v5462 = vld [vmem:[%s9 + $0x34] sm:$0xf]
    %v5463 = vld [vmem:[%s9 + $0x38] sm:$0xf]
    %v5464 = vld [vmem:[%s9 + $0x3c] sm:$0xf]
    %v5465 = vld [vmem:[%s10] sm:$0x1]
    %v5467 = vlaneseq
    %v5468 = vshrl.u32 %v5467, 7
    %v5469 = vsub.s32 0, %v5468
    %v5470 = vrot.slane %v5465, %v5469
    %v5488 = vunpack.c.l.b16 %v5449
    %v5489 = vunpack.c.l.b16 %v5450
    %v5490 = vunpack.c.l.b16 %v5451
    %v5491 = vunpack.c.l.b16 %v5452
    %v5492 = vunpack.c.l.b16 %v5453
    %v5493 = vunpack.c.l.b16 %v5454
    %v5494 = vunpack.c.l.b16 %v5455
    %v5495 = vunpack.c.l.b16 %v5456
    %v5496 = vunpack.c.l.b16 %v5457
    %v5497 = vunpack.c.l.b16 %v5458
    %v5498 = vunpack.c.l.b16 %v5459
    %v5499 = vunpack.c.l.b16 %v5460
    %v5500 = vunpack.c.l.b16 %v5461
    %v5501 = vunpack.c.l.b16 %v5462
    %v5502 = vunpack.c.l.b16 %v5463
    %v5503 = vunpack.c.l.b16 %v5464
    %v5504 = vpack.c.b16 %v5489, %v5488
    %v5505 = vpack.c.b16 %v5491, %v5490
    %v5506 = vpack.c.b16 %v5493, %v5492
    %v5507 = vpack.c.b16 %v5495, %v5494
    %v5508 = vpack.c.b16 %v5497, %v5496
    %v5509 = vpack.c.b16 %v5499, %v5498
    %v5510 = vpack.c.b16 %v5501, %v5500
    %v5511 = vpack.c.b16 %v5503, %v5502
    %5520 = vmatprep.subr.bf16.mxu0 0
    %5521 = vmatpush1.bf16.msra.mxu0 %v5511
    %5522 = vmatprep.subr.bf16.mxu0 0
    %5523 = vmatpush1.bf16.msra.mxu0 %v5510
    %5524 = vmatprep.subr.bf16.mxu0 0
    %5525 = vmatpush1.bf16.msra.mxu0 %v5509
    %5526 = vmatprep.subr.bf16.mxu0 0
    %5527 = vmatpush1.bf16.msra.mxu0 %v5508
    %5528 = vmatprep.subr.bf16.mxu0 0
    %5529 = vmatpush1.bf16.msra.mxu0 %v5507
    %5530 = vmatprep.subr.bf16.mxu0 0
    %5531 = vmatpush1.bf16.msra.mxu0 %v5506
    %5532 = vmatprep.subr.bf16.mxu0 0
    %5533 = vmatpush1.bf16.msra.mxu0 %v5505
    %5534 = vmatprep.subr.bf16.mxu0 0
    %5535 = vmatpush1.bf16.msra.mxu0 %v5504
    %5536 = vmatprep.subr.bf16.mxu0 0
    %5537 = vmatpush2.bf16.msra.mxu0 0
    %5538 = vmatprep.subr.bf16.mxu0 0
    %5539 = vmatpush2.bf16.msra.mxu0 0
    %5540 = vmatprep.subr.bf16.mxu0 0
    %5541 = vmatpush2.bf16.msra.mxu0 0
    %5542 = vmatprep.subr.bf16.mxu0 0
    %5543 = vmatpush2.bf16.msra.mxu0 0
    %5544 = vmatprep.subr.bf16.mxu0 0
    %5545 = vmatpush2.bf16.msra.mxu0 0
    %5546 = vmatprep.subr.bf16.mxu0 0
    %5547 = vmatpush2.bf16.msra.mxu0 0
    %5548 = vmatprep.subr.bf16.mxu0 0
    %5549 = vmatpush2.bf16.msra.mxu0 0
    %5550 = vmatprep.subr.bf16.mxu0 0
    %5551 = vmatpush2.bf16.msra.mxu0 0
    %5552 = vmatprep.mubr.bf16.mxu0 0
    %5553 = vmatmul.mubr.bf16.gmra.mxu0 %v5448
    %v5554 = vpop.f32.mrf.mxu0
    %v5555 = vadd.f32 %v5470, %v5554
    %v5556 = vpop.f32.mrf.mxu0
    %v5557 = vpop.f32.mrf.mxu0
    %v5558 = vpop.f32.mrf.mxu0
    %5559 = vdwg.mxu0
    %v5560 = vmax.f32 %v5555, 0.0
    %v5561 = vpack.c.bf16 %v5560, %v5560
    %v5562 = vld [vmem:[%s11] sm:$0xf]
    %v5563 = vld [vmem:[%s11 + $0x4] sm:$0xf]
    %v5564 = vld [vmem:[%s11 + $0x8] sm:$0xf]
    %v5565 = vld [vmem:[%s11 + $0xc] sm:$0xf]
    %v5566 = vld [vmem:[%s11 + $0x10] sm:$0xf]
    %v5567 = vld [vmem:[%s11 + $0x14] sm:$0xf]
    %v5568 = vld [vmem:[%s11 + $0x18] sm:$0xf]
    %v5569 = vld [vmem:[%s11 + $0x1c] sm:$0xf]
    %v5570 = vld [vmem:[%s11 + $0x20] sm:$0xf]
    %v5571 = vld [vmem:[%s11 + $0x24] sm:$0xf]
    %v5572 = vld [vmem:[%s11 + $0x28] sm:$0xf]
    %v5573 = vld [vmem:[%s11 + $0x2c] sm:$0xf]
    %v5574 = vld [vmem:[%s11 + $0x30] sm:$0xf]
    %v5575 = vld [vmem:[%s11 + $0x34] sm:$0xf]
    %v5576 = vld [vmem:[%s11 + $0x38] sm:$0xf]
    %v5577 = vld [vmem:[%s11 + $0x3c] sm:$0xf]
    %v5578 = vld [vmem:[%s12] sm:$0x1]
    %v5580 = vlaneseq
    %v5581 = vshrl.u32 %v5580, 7
    %v5582 = vsub.s32 0, %v5581
    %v5583 = vrot.slane %v5578, %v5582
    %v5601 = vunpack.c.l.b16 %v5562
    %v5602 = vunpack.c.l.b16 %v5563
    %v5603 = vunpack.c.l.b16 %v5564
    %v5604 = vunpack.c.l.b16 %v5565
    %v5605 = vunpack.c.l.b16 %v5566
    %v5606 = vunpack.c.l.b16 %v5567
    %v5607 = vunpack.c.l.b16 %v5568
    %v5608 = vunpack.c.l.b16 %v5569
    %v5609 = vunpack.c.l.b16 %v5570
    %v5610 = vunpack.c.l.b16 %v5571
    %v5611 = vunpack.c.l.b16 %v5572
    %v5612 = vunpack.c.l.b16 %v5573
    %v5613 = vunpack.c.l.b16 %v5574
    %v5614 = vunpack.c.l.b16 %v5575
    %v5615 = vunpack.c.l.b16 %v5576
    %v5616 = vunpack.c.l.b16 %v5577
    %v5617 = vpack.c.b16 %v5602, %v5601
    %v5618 = vpack.c.b16 %v5604, %v5603
    %v5619 = vpack.c.b16 %v5606, %v5605
    %v5620 = vpack.c.b16 %v5608, %v5607
    %v5621 = vpack.c.b16 %v5610, %v5609
    %v5622 = vpack.c.b16 %v5612, %v5611
    %v5623 = vpack.c.b16 %v5614, %v5613
    %v5624 = vpack.c.b16 %v5616, %v5615
    %5633 = vmatprep.subr.bf16.mxu0 0
    %5634 = vmatpush1.bf16.msra.mxu0 %v5624
    %5635 = vmatprep.subr.bf16.mxu0 0
    %5636 = vmatpush1.bf16.msra.mxu0 %v5623
    %5637 = vmatprep.subr.bf16.mxu0 0
    %5638 = vmatpush1.bf16.msra.mxu0 %v5622
    %5639 = vmatprep.subr.bf16.mxu0 0
    %5640 = vmatpush1.bf16.msra.mxu0 %v5621
    %5641 = vmatprep.subr.bf16.mxu0 0
    %5642 = vmatpush1.bf16.msra.mxu0 %v5620
    %5643 = vmatprep.subr.bf16.mxu0 0
    %5644 = vmatpush1.bf16.msra.mxu0 %v5619
    %5645 = vmatprep.subr.bf16.mxu0 0
    %5646 = vmatpush1.bf16.msra.mxu0 %v5618
    %5647 = vmatprep.subr.bf16.mxu0 0
    %5648 = vmatpush1.bf16.msra.mxu0 %v5617
    %5649 = vmatprep.subr.bf16.mxu0 0
    %5650 = vmatpush2.bf16.msra.mxu0 0
    %5651 = vmatprep.subr.bf16.mxu0 0
    %5652 = vmatpush2.bf16.msra.mxu0 0
    %5653 = vmatprep.subr.bf16.mxu0 0
    %5654 = vmatpush2.bf16.msra.mxu0 0
    %5655 = vmatprep.subr.bf16.mxu0 0
    %5656 = vmatpush2.bf16.msra.mxu0 0
    %5657 = vmatprep.subr.bf16.mxu0 0
    %5658 = vmatpush2.bf16.msra.mxu0 0
    %5659 = vmatprep.subr.bf16.mxu0 0
    %5660 = vmatpush2.bf16.msra.mxu0 0
    %5661 = vmatprep.subr.bf16.mxu0 0
    %5662 = vmatpush2.bf16.msra.mxu0 0
    %5663 = vmatprep.subr.bf16.mxu0 0
    %5664 = vmatpush2.bf16.msra.mxu0 0
    %5665 = vmatprep.mubr.bf16.mxu0 0
    %5666 = vmatmul.mubr.bf16.gmra.mxu0 %v5561
    %v5667 = vpop.f32.mrf.mxu0
    %v5668 = vadd.f32 %v5583, %v5667
    %v5669 = vpop.f32.mrf.mxu0
    %v5670 = vpop.f32.mrf.mxu0
    %v5671 = vpop.f32.mrf.mxu0
    %5672 = vdwg.mxu0
    %5673 = vst [vmem:[#allocation5] sm:$0x3] %v5668
    // Predicated region
    $region54: #{lenet_forward.1} parent=1 // pred_check
      _
    $region55: #{lenet_forward.1} parent=1 // pred_check_branch
      %5675 = sbr.rel (0) target = $region57
    $region56: #{lenet_forward.1} parent=1 // pred_region
      %s5677 = ssub.s32 32, 32
      %5678 = vsyncadd [#allocation6], %s5677
      %s5680 = sshll.u32 [#allocation5], 4
      %s5681 = int_to_ptr.vmem [resolvable:$true] %s5680
      %5683 = dma.vmem_to_hbm [thread:$0]  %s5681, 32, %s13, [#allocation6]
    $region57: #{lenet_forward.1} parent=1 // pred_fallthru
      _
    // Predicated region
    $region58: #{lenet_forward.1} parent=1 // pred_check
      _
    $region59: #{lenet_forward.1} parent=1 // pred_check_branch
      %5685 = sbr.rel (0) target = $region61
    $region60: #{lenet_forward.1} parent=1 // pred_region
      %5686 = dma.done [#allocation6], 32
    $region61: #{lenet_forward.1} parent=1 // pred_fallthru
      _
    %5687 = vsyncpa [#allocation6], 1

</llo_original>
